<compile_context>
chip_gen: v7x
topology: tpu7x:2x2x1
jax: 0.10.0
libtpu: 0.0.40
codegen_flags: <defaults>
</compile_context>

<pallas_src>
import numpy as np
import jax
import jax.numpy as jnp
from jax.experimental import pallas as pl
from jax.experimental.pallas import tpu as pltpu

# ----------------------------------------------------------------------------
# small config
# ----------------------------------------------------------------------------
BATCH = 2
NUM_EPOCHS = 3
NUM_CHANNELS = 2
TIME_DIM = 8          # == 8 keeps all in-kernel reshapes tile-aligned
FREQ_DIM = 16
NUM_FILTERS = 8
LSTM_HIDDEN = 16
ATTN_SIZE = 8
DROPOUT_RATE = 0.0    # eval-mode: unused


# ----------------------------------------------------------------------------
# deterministic FilterbankUtilities.linear_tri_filterbank
# returns (frequency_dim, num_filters) so that (..., F) @ fb -> (..., NF)
# ----------------------------------------------------------------------------
def linear_tri_filterbank(num_filters, frequency_dim):
    pts = np.linspace(0.0, frequency_dim - 1.0, num_filters + 2)
    freqs = np.arange(frequency_dim, dtype=np.float32)
    fb = np.zeros((frequency_dim, num_filters), dtype=np.float32)
    for k in range(num_filters):
        l, c, r = pts[k], pts[k + 1], pts[k + 2]
        rise = (freqs - l) / max(c - l, 1e-6)
        fall = (r - freqs) / max(r - c, 1e-6)
        fb[:, k] = np.maximum(0.0, np.minimum(rise, fall))
    return fb


# ----------------------------------------------------------------------------
# fused kernel: filterbank -> BLSTM -> attention, one epoch-block per grid step
#   x_ref:   (BE, C, T, F)
#   tri_ref: (F, NF)              fw_ref: (C, NF)
#   wih_ref: (NF*C, 8H)  whh_ref: (2H, 8H)  b_ref: (1, 8H)   (packed, see below)
#   attw_ref:(2H, A)     attb_ref:(1, A)    attu_ref:(1, A)
#   o_ref:   (BE, 2H)
#   scratch: xw_scr (BE, T, 8H), h_scr (BE, T, 2H)
# packed lane layout (blocks of width H):
#   gates : [i_f i_b f_f f_b g_f g_b o_f o_b]  (8H = 128 lanes for H = 16)
#   h / c : [h_f h_b] / [c_f c_b]              (2H lanes)
# ----------------------------------------------------------------------------
def epoch_encoder_kernel(x_ref, tri_ref, fw_ref, wih_ref, whh_ref, b_ref,
                         attw_ref, attb_ref, attu_ref, o_ref,
                         xw_scr, h_scr):
    BE, C, T, F = x_ref.shape
    NF = tri_ref.shape[1]
    G8 = wih_ref.shape[1]        # 8*H (both directions' gates packed)
    H2 = whh_ref.shape[0]        # 2*H (both directions' hidden packed)
    H = H2 // 2

    # --- stage 1: filterbank + input->gate projection, hoisted out of the
    #     recurrence. By linearity:
    #       concat_c(x_c @ fb_c) @ Wih == sum_c x_c @ (fb_c @ Wih[c*NF:(c+1)*NF])
    #     so the LearnableFilterbank folds into the packed Wih matmul.
    xw = None
    for c in range(C):                                   # static channel loop
        fb_c = jax.nn.sigmoid(fw_ref[c:c + 1, :]) * tri_ref[...]          # (F, NF)
        w_c = jnp.dot(fb_c, wih_ref[c * NF:(c + 1) * NF, :],
                      preferred_element_type=jnp.float32)                 # (F, 8H)
        xc = x_ref[:, c, :, :].reshape(BE * T, F)                         # (BE*T, F)
        part = jnp.dot(xc, w_c, preferred_element_type=jnp.float32)       # (BE*T, 8H)
        xw = part if xw is None else xw + part
    xw = xw + b_ref[...]                                  # bias added once, not per step
    xw_scr[...] = xw.reshape(BE, T, G8)

    # --- stage 2: bidirectional LSTM, both directions per step, fully unrolled
    lane = jax.lax.broadcasted_iota(jnp.int32, (1, G8), 1)
    fwd_mask = (lane % (2 * H)) < H                       # True on forward-direction lanes

    whh = whh_ref[...]                                    # (2H, 8H) loaded once
    h = jnp.zeros((BE, H2), jnp.float32)                  # [h_f | h_b]
    c_st = jnp.zeros((BE, H2), jnp.float32)               # [c_f | c_b]
    for i in range(T):                                    # static, fully unrolled (T == 8)
        t_b = T - 1 - i
        # forward direction consumes time i, backward consumes time T-1-i
        xg = jnp.where(fwd_mask, xw_scr[:, i, :], xw_scr[:, t_b, :])      # (BE, 8H)
        gates = xg + jnp.dot(h, whh, preferred_element_type=jnp.float32)  # (BE, 8H)
        i_g = jax.nn.sigmoid(gates[:, 0 * H2:1 * H2])
        f_g = jax.nn.sigmoid(gates[:, 1 * H2:2 * H2])
        g_g = jnp.tanh(gates[:, 2 * H2:3 * H2])
        o_g = jax.nn.sigmoid(gates[:, 3 * H2:4 * H2])
        c_st = f_g * c_st + i_g * g_g
        h = o_g * jnp.tanh(c_st)
        h_scr[:, i, 0:H] = h[:, 0:H]                      # forward hidden at time i
        h_scr[:, t_b, H:H2] = h[:, H:H2]                  # backward hidden at time T-1-i

    # --- stage 3: attention pooling over time (flattened matmul, stable softmax)
    h_all = h_scr[...]                                                    # (BE, T, 2H)
    v = jnp.tanh(jnp.dot(h_all.reshape(BE * T, H2), attw_ref[...],
                         preferred_element_type=jnp.float32)
                 + attb_ref[...])                                         # (BE*T, A)
    vu = jnp.sum(v * attu_ref[...], axis=-1, keepdims=True)               # (BE*T, 1)
    vu = vu.reshape(BE, T, 1)
    vu = vu - jnp.max(vu, axis=1, keepdims=True)                          # numerical stability
    e = jnp.exp(vu)
    alphas = e * pl.reciprocal(jnp.sum(e, axis=1, keepdims=True), approx=True)
    o_ref[...] = jnp.sum(h_all * alphas, axis=1)                          # (BE, 2H)


# ----------------------------------------------------------------------------
# wrapper
# ----------------------------------------------------------------------------
def epoch_encoder_forward(x, kparams, *, block_e=None):
    """x: (batch, num_epochs, C, T, F) -> (batch, num_epochs, 2*H)."""
    B, NE, C, T, F = x.shape
    tri, fw_t, wih_p, whh_p, b_p, att_w, att_b, att_u = kparams
    E = B * NE
    H2 = whh_p.shape[0]
    G8 = whh_p.shape[1]
    if block_e is None:
        block_e = E                      # tiny E: one block; for large E use a
                                         # multiple-of-8 block to shard on v7x cores
    assert E % block_e == 0
    x2 = x.reshape(E, C, T, F)           # free: merges leading dims only

    out = pl.pallas_call(
        epoch_encoder_kernel,
        grid=(E // block_e,),
        in_specs=[
            pl.BlockSpec((block_e, C, T, F), lambda i: (i, 0, 0, 0)),
            pl.BlockSpec(tri.shape, lambda i: (0, 0)),
            pl.BlockSpec(fw_t.shape, lambda i: (0, 0)),
            pl.BlockSpec(wih_p.shape, lambda i: (0, 0)),
            pl.BlockSpec(whh_p.shape, lambda i: (0, 0)),
            pl.BlockSpec(b_p.shape, lambda i: (0, 0)),
            pl.BlockSpec(att_w.shape, lambda i: (0, 0)),
            pl.BlockSpec(att_b.shape, lambda i: (0, 0)),
            pl.BlockSpec(att_u.shape, lambda i: (0, 0)),
        ],
        out_specs=pl.BlockSpec((block_e, H2), lambda i: (i, 0)),
        out_shape=jax.ShapeDtypeStruct((E, H2), jnp.float32),
        scratch_shapes=[pltpu.VMEM((block_e, T, G8), jnp.float32),
                        pltpu.VMEM((block_e, T, H2), jnp.float32)],
        compiler_params=pltpu.CompilerParams(
            dimension_semantics=("parallel",)),   # epochs are independent
    )(x2, tri, fw_t, wih_p, whh_p, b_p, att_w, att_b, att_u)
    return out.reshape(B, NE, H2)


# ----------------------------------------------------------------------------
# one-time repacking of standard (PyTorch-layout) LSTM params into the kernel
# layout: columns = [i_f i_b f_f f_b g_f g_b o_f o_b] (H each);
# whh rows = [h_f ; h_b] with a block-diagonal direction structure.
# ----------------------------------------------------------------------------
def pack_blstm_params(wih_f, whh_f, b_f, wih_b, whh_b, b_b):
    H = whh_f.shape[0]
    gate = lambda w, k: w[:, k * H:(k + 1) * H]
    zHH = jnp.zeros((H, H), wih_f.dtype)
    wih_cols, whh_cols, b_cols = [], [], []
    for k in range(4):                       # PyTorch gate order: i, f, g, o
        wih_cols += [gate(wih_f, k), gate(wih_b, k)]
        whh_cols += [jnp.concatenate([gate(whh_f, k), zHH], axis=0),
                     jnp.concatenate([zHH, gate(whh_b, k)], axis=0)]
        b_cols += [gate(b_f, k), gate(b_b, k)]
    return (jnp.concatenate(wih_cols, axis=1),    # (D, 8H)
            jnp.concatenate(whh_cols, axis=1),    # (2H, 8H)
            jnp.concatenate(b_cols, axis=1))      # (1, 8H)


# ----------------------------------------------------------------------------
# main
# ----------------------------------------------------------------------------
if __name__ == "__main__":
    key = jax.random.PRNGKey(0)
    keys = jax.random.split(key, 11)

    D = NUM_FILTERS * NUM_CHANNELS
    H = LSTM_HIDDEN

    # parameters in PyTorch-equivalent layout
    tri = jnp.asarray(linear_tri_filterbank(NUM_FILTERS, FREQ_DIM))            # (F, NF)
    fw = jax.random.normal(keys[0], (NUM_FILTERS, NUM_CHANNELS), jnp.float32)  # (NF, C)
    wih_f = 0.1 * jax.random.normal(keys[1], (D, 4 * H), jnp.float32)
    whh_f = 0.1 * jax.random.normal(keys[2], (H, 4 * H), jnp.float32)
    b_f = 0.1 * jax.random.normal(keys[3], (1, 4 * H), jnp.float32)
    wih_b = 0.1 * jax.random.normal(keys[4], (D, 4 * H), jnp.float32)
    whh_b = 0.1 * jax.random.normal(keys[5], (H, 4 * H), jnp.float32)
    b_b = 0.1 * jax.random.normal(keys[6], (1, 4 * H), jnp.float32)
    att_w = jax.random.normal(keys[7], (2 * H, ATTN_SIZE), jnp.float32)
    att_b = jax.random.normal(keys[8], (1, ATTN_SIZE), jnp.float32)
    att_u = jax.random.normal(keys[9], (1, ATTN_SIZE), jnp.float32)

    # one-time repack into kernel operand layout (outside jit: zero per-call cost)
    wih_p, whh_p, b_p = pack_blstm_params(wih_f, whh_f, b_f, wih_b, whh_b, b_b)
    kparams = (tri, jnp.transpose(fw), wih_p, whh_p, b_p, att_w, att_b, att_u)

    x = jax.random.normal(
        keys[10], (BATCH, NUM_EPOCHS, NUM_CHANNELS, TIME_DIM, FREQ_DIM),
        dtype=jnp.float32)

    out = jax.jit(epoch_encoder_forward)(x, kparams)
    out = jax.block_until_ready(out)
    assert out.shape == (BATCH, NUM_EPOCHS, 2 * LSTM_HIDDEN)
    assert bool(jnp.all(jnp.isfinite(out)))
    print("KERNEL_OK")
</pallas_src>

<mosaic_0001>
module attributes {stable_mosaic.version = 11 : i64} {
  func.func @epoch_encoder_kernel(%arg0: i32, %arg1: memref<6x2x8x16xf32, #tpu.memory_space<vmem>>, %arg2: memref<16x8xf32, #tpu.memory_space<vmem>>, %arg3: memref<2x8xf32, #tpu.memory_space<vmem>>, %arg4: memref<16x128xf32, #tpu.memory_space<vmem>>, %arg5: memref<32x128xf32, #tpu.memory_space<vmem>>, %arg6: memref<1x128xf32, #tpu.memory_space<vmem>>, %arg7: memref<32x8xf32, #tpu.memory_space<vmem>>, %arg8: memref<1x8xf32, #tpu.memory_space<vmem>>, %arg9: memref<1x8xf32, #tpu.memory_space<vmem>>, %arg10: memref<6x32xf32, #tpu.memory_space<vmem>>, %arg11: memref<6x8x128xf32, #tpu.memory_space<vmem>>, %arg12: memref<6x8x32xf32, #tpu.memory_space<vmem>>) attributes {dimension_semantics = [#tpu.dimension_semantics<parallel>], iteration_bounds = array<i64: 1>, scalar_prefetch = 0 : i64, scratch_operands = 2 : i64, tpu.core_type = #tpu.core_type<tc>, window_params = [{transform_indices = @transform_0, window_bounds = array<i64: 6, 2, 8, 16>}, {pipeline_mode = #tpu.pipeline_mode<synchronous>, transform_indices = @transform_1, window_bounds = array<i64: 16, 8>}, {pipeline_mode = #tpu.pipeline_mode<synchronous>, transform_indices = @transform_2, window_bounds = array<i64: 2, 8>}, {pipeline_mode = #tpu.pipeline_mode<synchronous>, transform_indices = @transform_3, window_bounds = array<i64: 16, 128>}, {pipeline_mode = #tpu.pipeline_mode<synchronous>, transform_indices = @transform_4, window_bounds = array<i64: 32, 128>}, {pipeline_mode = #tpu.pipeline_mode<synchronous>, transform_indices = @transform_5, window_bounds = array<i64: 1, 128>}, {pipeline_mode = #tpu.pipeline_mode<synchronous>, transform_indices = @transform_6, window_bounds = array<i64: 32, 8>}, {pipeline_mode = #tpu.pipeline_mode<synchronous>, transform_indices = @transform_7, window_bounds = array<i64: 1, 8>}, {pipeline_mode = #tpu.pipeline_mode<synchronous>, transform_indices = @transform_8, window_bounds = array<i64: 1, 8>}, {transform_indices = @transform_9, window_bounds = array<i64: 6, 32>}]} {
    %c0 = arith.constant 0 : index
    %c0_0 = arith.constant 0 : index
    %0 = vector.load %arg3[%c0, %c0_0] : memref<2x8xf32, #tpu.memory_space<vmem>>, vector<1x8xf32>
    %1 = arith.negf %0 : vector<1x8xf32>
    %2 = math.exp %1 : vector<1x8xf32>
    %cst = arith.constant 1.000000e+00 : f32
    %3 = vector.broadcast %cst : f32 to vector<1x8xf32>
    %4 = arith.addf %3, %2 : vector<1x8xf32>
    %5 = arith.divf %3, %4 : vector<1x8xf32>
    %c0_1 = arith.constant 0 : index
    %c0_2 = arith.constant 0 : index
    %6 = vector.load %arg2[%c0_1, %c0_2] : memref<16x8xf32, #tpu.memory_space<vmem>>, vector<16x8xf32>
    %7 = vector.broadcast %5 : vector<1x8xf32> to vector<16x8xf32>
    %8 = arith.mulf %7, %6 : vector<16x8xf32>
    %c0_3 = arith.constant 0 : index
    %c0_4 = arith.constant 0 : index
    %9 = vector.load %arg4[%c0_3, %c0_4] : memref<16x128xf32, #tpu.memory_space<vmem>>, vector<8x128xf32>
    %cst_5 = arith.constant dense<0.000000e+00> : vector<16x128xf32>
    %10 = tpu.matmul %8, %9, %cst_5 {dimension_numbers = #tpu.dot_dimension_numbers<[1], [0], [0], [1], [0, 0, 1, 1], [], []>} : vector<16x8xf32>, vector<8x128xf32>, vector<16x128xf32> -> vector<16x128xf32>
    %c0_6 = arith.constant 0 : index
    %c0_7 = arith.constant 0 : index
    %c0_8 = arith.constant 0 : index
    %c0_9 = arith.constant 0 : index
    %11 = vector.load %arg1[%c0_6, %c0_7, %c0_8, %c0_9] : memref<6x2x8x16xf32, #tpu.memory_space<vmem>>, vector<6x1x8x16xf32>
    %12 = vector.shape_cast %11 : vector<6x1x8x16xf32> to vector<6x8x16xf32>
    %13 = vector.shape_cast %12 : vector<6x8x16xf32> to vector<48x16xf32>
    %cst_10 = arith.constant dense<0.000000e+00> : vector<48x128xf32>
    %14 = tpu.matmul %13, %10, %cst_10 {dimension_numbers = #tpu.dot_dimension_numbers<[1], [0], [0], [1], [0, 0, 1, 1], [], []>} : vector<48x16xf32>, vector<16x128xf32>, vector<48x128xf32> -> vector<48x128xf32>
    %c1 = arith.constant 1 : index
    %c0_11 = arith.constant 0 : index
    %15 = vector.load %arg3[%c1, %c0_11] : memref<2x8xf32, #tpu.memory_space<vmem>>, vector<1x8xf32>
    %16 = arith.negf %15 : vector<1x8xf32>
    %17 = math.exp %16 : vector<1x8xf32>
    %cst_12 = arith.constant 1.000000e+00 : f32
    %18 = vector.broadcast %cst_12 : f32 to vector<1x8xf32>
    %19 = arith.addf %18, %17 : vector<1x8xf32>
    %20 = arith.divf %18, %19 : vector<1x8xf32>
    %c0_13 = arith.constant 0 : index
    %c0_14 = arith.constant 0 : index
    %21 = vector.load %arg2[%c0_13, %c0_14] : memref<16x8xf32, #tpu.memory_space<vmem>>, vector<16x8xf32>
    %22 = vector.broadcast %20 : vector<1x8xf32> to vector<16x8xf32>
    %23 = arith.mulf %22, %21 : vector<16x8xf32>
    %c8 = arith.constant 8 : index
    %c0_15 = arith.constant 0 : index
    %24 = vector.load %arg4[%c8, %c0_15] : memref<16x128xf32, #tpu.memory_space<vmem>>, vector<8x128xf32>
    %cst_16 = arith.constant dense<0.000000e+00> : vector<16x128xf32>
    %25 = tpu.matmul %23, %24, %cst_16 {dimension_numbers = #tpu.dot_dimension_numbers<[1], [0], [0], [1], [0, 0, 1, 1], [], []>} : vector<16x8xf32>, vector<8x128xf32>, vector<16x128xf32> -> vector<16x128xf32>
    %c0_17 = arith.constant 0 : index
    %c1_18 = arith.constant 1 : index
    %c0_19 = arith.constant 0 : index
    %c0_20 = arith.constant 0 : index
    %26 = vector.load %arg1[%c0_17, %c1_18, %c0_19, %c0_20] : memref<6x2x8x16xf32, #tpu.memory_space<vmem>>, vector<6x1x8x16xf32>
    %27 = vector.shape_cast %26 : vector<6x1x8x16xf32> to vector<6x8x16xf32>
    %28 = vector.shape_cast %27 : vector<6x8x16xf32> to vector<48x16xf32>
    %cst_21 = arith.constant dense<0.000000e+00> : vector<48x128xf32>
    %29 = tpu.matmul %28, %25, %cst_21 {dimension_numbers = #tpu.dot_dimension_numbers<[1], [0], [0], [1], [0, 0, 1, 1], [], []>} : vector<48x16xf32>, vector<16x128xf32>, vector<48x128xf32> -> vector<48x128xf32>
    %30 = arith.addf %14, %29 : vector<48x128xf32>
    %c0_22 = arith.constant 0 : index
    %c0_23 = arith.constant 0 : index
    %31 = vector.load %arg6[%c0_22, %c0_23] : memref<1x128xf32, #tpu.memory_space<vmem>>, vector<1x128xf32>
    %32 = vector.broadcast %31 : vector<1x128xf32> to vector<48x128xf32>
    %33 = arith.addf %30, %32 : vector<48x128xf32>
    %34 = vector.shape_cast %33 : vector<48x128xf32> to vector<6x8x128xf32>
    %c0_24 = arith.constant 0 : index
    %c0_25 = arith.constant 0 : index
    %c0_26 = arith.constant 0 : index
    %35 = vector.load %arg11[%c0_24, %c0_25, %c0_26] : memref<6x8x128xf32, #tpu.memory_space<vmem>>, vector<6x8x128xf32>
    tpu.vector_store %arg11[%c0_24, %c0_25, %c0_26], %34 {strides = array<i32>} : memref<6x8x128xf32, #tpu.memory_space<vmem>>, vector<6x8x128xf32>,
    %36 = tpu.iota {dimensions = array<i32: 1>} : vector<1x128xi32>
    %c32_i32 = arith.constant 32 : i32
    %c0_i32 = arith.constant 0 : i32
    %37 = arith.cmpi eq, %c32_i32, %c0_i32 : i32
    %c1_i32 = arith.constant 1 : i32
    %38 = arith.select %37, %c1_i32, %c32_i32 : i32
    %39 = vector.broadcast %38 : i32 to vector<1x128xi32>
    %40 = arith.remsi %36, %39 : vector<1x128xi32>
    %c0_i32_27 = arith.constant 0 : i32
    %41 = vector.broadcast %c0_i32_27 : i32 to vector<1x128xi32>
    %42 = arith.cmpi ne, %40, %41 : vector<1x128xi32>
    %c0_i32_28 = arith.constant 0 : i32
    %43 = vector.broadcast %c0_i32_28 : i32 to vector<1x128xi32>
    %44 = arith.cmpi slt, %40, %43 : vector<1x128xi32>
    %c0_i32_29 = arith.constant 0 : i32
    %45 = arith.cmpi slt, %38, %c0_i32_29 : i32
    %46 = vector.broadcast %45 : i1 to vector<1x128xi1>
    %47 = vector.broadcast %46 : vector<1x128xi1> to vector<1x128xi1>
    %48 = arith.xori %44, %47 : vector<1x128xi1>
    %49 = arith.andi %48, %42 : vector<1x128xi1>
    %50 = vector.broadcast %38 : i32 to vector<1x128xi32>
    %51 = arith.addi %40, %50 : vector<1x128xi32>
    %52 = arith.select %49, %51, %40 : vector<1x128xi1>, vector<1x128xi32>
    %c16_i32 = arith.constant 16 : i32
    %53 = vector.broadcast %c16_i32 : i32 to vector<1x128xi32>
    %54 = arith.cmpi slt, %52, %53 : vector<1x128xi32>
    %c0_30 = arith.constant 0 : index
    %c0_31 = arith.constant 0 : index
    %55 = vector.load %arg5[%c0_30, %c0_31] : memref<32x128xf32, #tpu.memory_space<vmem>>, vector<32x128xf32>
    %cst_32 = arith.constant 0.000000e+00 : f32
    %56 = vector.broadcast %cst_32 : f32 to vector<6x32xf32>
    %cst_33 = arith.constant 0.000000e+00 : f32
    %57 = vector.broadcast %cst_33 : f32 to vector<6x32xf32>
    %c0_34 = arith.constant 0 : index
    %c0_35 = arith.constant 0 : index
    %c0_36 = arith.constant 0 : index
    %58 = vector.load %arg11[%c0_34, %c0_35, %c0_36] : memref<6x8x128xf32, #tpu.memory_space<vmem>>, vector<6x1x128xf32>
    %59 = vector.shape_cast %58 : vector<6x1x128xf32> to vector<6x128xf32>
    %c0_37 = arith.constant 0 : index
    %c7 = arith.constant 7 : index
    %c0_38 = arith.constant 0 : index
    %60 = vector.load %arg11[%c0_37, %c7, %c0_38] : memref<6x8x128xf32, #tpu.memory_space<vmem>>, vector<6x1x128xf32>
    %61 = vector.shape_cast %60 : vector<6x1x128xf32> to vector<6x128xf32>
    %62 = vector.shape_cast %54 : vector<1x128xi1> to vector<1x128xi1>
    %63 = vector.broadcast %62 : vector<1x128xi1> to vector<6x128xi1>
    %64 = arith.select %63, %59, %61 : vector<6x128xi1>, vector<6x128xf32>
    %cst_39 = arith.constant dense<0.000000e+00> : vector<6x128xf32>
    %65 = tpu.matmul %56, %55, %cst_39 {dimension_numbers = #tpu.dot_dimension_numbers<[1], [0], [0], [1], [0, 0, 1, 1], [], []>} : vector<6x32xf32>, vector<32x128xf32>, vector<6x128xf32> -> vector<6x128xf32>
    %66 = arith.addf %64, %65 : vector<6x128xf32>
    %67 = vector.extract_strided_slice %66 {offsets = [0, 0], sizes = [6, 32], strides = [1, 1]} : vector<6x128xf32> to vector<6x32xf32>
    %68 = arith.negf %67 : vector<6x32xf32>
    %69 = math.exp %68 : vector<6x32xf32>
    %cst_40 = arith.constant 1.000000e+00 : f32
    %70 = vector.broadcast %cst_40 : f32 to vector<6x32xf32>
    %71 = arith.addf %70, %69 : vector<6x32xf32>
    %72 = arith.divf %70, %71 : vector<6x32xf32>
    %73 = vector.extract_strided_slice %66 {offsets = [0, 32], sizes = [6, 32], strides = [1, 1]} : vector<6x128xf32> to vector<6x32xf32>
    %74 = arith.negf %73 : vector<6x32xf32>
    %75 = math.exp %74 : vector<6x32xf32>
    %cst_41 = arith.constant 1.000000e+00 : f32
    %76 = vector.broadcast %cst_41 : f32 to vector<6x32xf32>
    %77 = arith.addf %76, %75 : vector<6x32xf32>
    %78 = arith.divf %76, %77 : vector<6x32xf32>
    %79 = vector.extract_strided_slice %66 {offsets = [0, 64], sizes = [6, 32], strides = [1, 1]} : vector<6x128xf32> to vector<6x32xf32>
    %80 = math.tanh %79 : vector<6x32xf32>
    %81 = vector.extract_strided_slice %66 {offsets = [0, 96], sizes = [6, 32], strides = [1, 1]} : vector<6x128xf32> to vector<6x32xf32>
    %82 = arith.negf %81 : vector<6x32xf32>
    %83 = math.exp %82 : vector<6x32xf32>
    %cst_42 = arith.constant 1.000000e+00 : f32
    %84 = vector.broadcast %cst_42 : f32 to vector<6x32xf32>
    %85 = arith.addf %84, %83 : vector<6x32xf32>
    %86 = arith.divf %84, %85 : vector<6x32xf32>
    %87 = arith.mulf %78, %57 : vector<6x32xf32>
    %88 = arith.mulf %72, %80 : vector<6x32xf32>
    %89 = arith.addf %87, %88 : vector<6x32xf32>
    %90 = math.tanh %89 : vector<6x32xf32>
    %91 = arith.mulf %86, %90 : vector<6x32xf32>
    %92 = vector.extract_strided_slice %91 {offsets = [0, 0], sizes = [6, 16], strides = [1, 1]} : vector<6x32xf32> to vector<6x16xf32>
    %c0_43 = arith.constant 0 : index
    %c0_44 = arith.constant 0 : index
    %c0_45 = arith.constant 0 : index
    %93 = vector.load %arg12[%c0_43, %c0_44, %c0_45] : memref<6x8x32xf32, #tpu.memory_space<vmem>>, vector<6x1x16xf32>
    %94 = vector.shape_cast %93 : vector<6x1x16xf32> to vector<6x16xf32>
    %95 = vector.shape_cast %92 : vector<6x16xf32> to vector<6x1x16xf32>
    tpu.vector_store %arg12[%c0_43, %c0_44, %c0_45], %95 {strides = array<i32>} : memref<6x8x32xf32, #tpu.memory_space<vmem>>, vector<6x1x16xf32>,
    %96 = vector.extract_strided_slice %91 {offsets = [0, 16], sizes = [6, 16], strides = [1, 1]} : vector<6x32xf32> to vector<6x16xf32>
    %c0_46 = arith.constant 0 : index
    %c7_47 = arith.constant 7 : index
    %c16 = arith.constant 16 : index
    %97 = vector.load %arg12[%c0_46, %c7_47, %c16] : memref<6x8x32xf32, #tpu.memory_space<vmem>>, vector<6x1x16xf32>
    %98 = vector.shape_cast %97 : vector<6x1x16xf32> to vector<6x16xf32>
    %99 = vector.shape_cast %96 : vector<6x16xf32> to vector<6x1x16xf32>
    tpu.vector_store %arg12[%c0_46, %c7_47, %c16], %99 {strides = array<i32>} : memref<6x8x32xf32, #tpu.memory_space<vmem>>, vector<6x1x16xf32>,
    %c0_48 = arith.constant 0 : index
    %c1_49 = arith.constant 1 : index
    %c0_50 = arith.constant 0 : index
    %100 = vector.load %arg11[%c0_48, %c1_49, %c0_50] : memref<6x8x128xf32, #tpu.memory_space<vmem>>, vector<6x1x128xf32>
    %101 = vector.shape_cast %100 : vector<6x1x128xf32> to vector<6x128xf32>
    %c0_51 = arith.constant 0 : index
    %c6 = arith.constant 6 : index
    %c0_52 = arith.constant 0 : index
    %102 = vector.load %arg11[%c0_51, %c6, %c0_52] : memref<6x8x128xf32, #tpu.memory_space<vmem>>, vector<6x1x128xf32>
    %103 = vector.shape_cast %102 : vector<6x1x128xf32> to vector<6x128xf32>
    %104 = vector.shape_cast %54 : vector<1x128xi1> to vector<1x128xi1>
    %105 = vector.broadcast %104 : vector<1x128xi1> to vector<6x128xi1>
    %106 = arith.select %105, %101, %103 : vector<6x128xi1>, vector<6x128xf32>
    %cst_53 = arith.constant dense<0.000000e+00> : vector<6x128xf32>
    %107 = tpu.matmul %91, %55, %cst_53 {dimension_numbers = #tpu.dot_dimension_numbers<[1], [0], [0], [1], [0, 0, 1, 1], [], []>} : vector<6x32xf32>, vector<32x128xf32>, vector<6x128xf32> -> vector<6x128xf32>
    %108 = arith.addf %106, %107 : vector<6x128xf32>
    %109 = vector.extract_strided_slice %108 {offsets = [0, 0], sizes = [6, 32], strides = [1, 1]} : vector<6x128xf32> to vector<6x32xf32>
    %110 = arith.negf %109 : vector<6x32xf32>
    %111 = math.exp %110 : vector<6x32xf32>
    %cst_54 = arith.constant 1.000000e+00 : f32
    %112 = vector.broadcast %cst_54 : f32 to vector<6x32xf32>
    %113 = arith.addf %112, %111 : vector<6x32xf32>
    %114 = arith.divf %112, %113 : vector<6x32xf32>
    %115 = vector.extract_strided_slice %108 {offsets = [0, 32], sizes = [6, 32], strides = [1, 1]} : vector<6x128xf32> to vector<6x32xf32>
    %116 = arith.negf %115 : vector<6x32xf32>
    %117 = math.exp %116 : vector<6x32xf32>
    %cst_55 = arith.constant 1.000000e+00 : f32
    %118 = vector.broadcast %cst_55 : f32 to vector<6x32xf32>
    %119 = arith.addf %118, %117 : vector<6x32xf32>
    %120 = arith.divf %118, %119 : vector<6x32xf32>
    %121 = vector.extract_strided_slice %108 {offsets = [0, 64], sizes = [6, 32], strides = [1, 1]} : vector<6x128xf32> to vector<6x32xf32>
    %122 = math.tanh %121 : vector<6x32xf32>
    %123 = vector.extract_strided_slice %108 {offsets = [0, 96], sizes = [6, 32], strides = [1, 1]} : vector<6x128xf32> to vector<6x32xf32>
    %124 = arith.negf %123 : vector<6x32xf32>
    %125 = math.exp %124 : vector<6x32xf32>
    %cst_56 = arith.constant 1.000000e+00 : f32
    %126 = vector.broadcast %cst_56 : f32 to vector<6x32xf32>
    %127 = arith.addf %126, %125 : vector<6x32xf32>
    %128 = arith.divf %126, %127 : vector<6x32xf32>
    %129 = arith.mulf %120, %89 : vector<6x32xf32>
    %130 = arith.mulf %114, %122 : vector<6x32xf32>
    %131 = arith.addf %129, %130 : vector<6x32xf32>
    %132 = math.tanh %131 : vector<6x32xf32>
    %133 = arith.mulf %128, %132 : vector<6x32xf32>
    %134 = vector.extract_strided_slice %133 {offsets = [0, 0], sizes = [6, 16], strides = [1, 1]} : vector<6x32xf32> to vector<6x16xf32>
    %c0_57 = arith.constant 0 : index
    %c1_58 = arith.constant 1 : index
    %c0_59 = arith.constant 0 : index
    %135 = vector.load %arg12[%c0_57, %c1_58, %c0_59] : memref<6x8x32xf32, #tpu.memory_space<vmem>>, vector<6x1x16xf32>
    %136 = vector.shape_cast %135 : vector<6x1x16xf32> to vector<6x16xf32>
    %137 = vector.shape_cast %134 : vector<6x16xf32> to vector<6x1x16xf32>
    tpu.vector_store %arg12[%c0_57, %c1_58, %c0_59], %137 {strides = array<i32>} : memref<6x8x32xf32, #tpu.memory_space<vmem>>, vector<6x1x16xf32>,
    %138 = vector.extract_strided_slice %133 {offsets = [0, 16], sizes = [6, 16], strides = [1, 1]} : vector<6x32xf32> to vector<6x16xf32>
    %c0_60 = arith.constant 0 : index
    %c6_61 = arith.constant 6 : index
    %c16_62 = arith.constant 16 : index
    %139 = vector.load %arg12[%c0_60, %c6_61, %c16_62] : memref<6x8x32xf32, #tpu.memory_space<vmem>>, vector<6x1x16xf32>
    %140 = vector.shape_cast %139 : vector<6x1x16xf32> to vector<6x16xf32>
    %141 = vector.shape_cast %138 : vector<6x16xf32> to vector<6x1x16xf32>
    tpu.vector_store %arg12[%c0_60, %c6_61, %c16_62], %141 {strides = array<i32>} : memref<6x8x32xf32, #tpu.memory_space<vmem>>, vector<6x1x16xf32>,
    %c0_63 = arith.constant 0 : index
    %c2 = arith.constant 2 : index
    %c0_64 = arith.constant 0 : index
    %142 = vector.load %arg11[%c0_63, %c2, %c0_64] : memref<6x8x128xf32, #tpu.memory_space<vmem>>, vector<6x1x128xf32>
    %143 = vector.shape_cast %142 : vector<6x1x128xf32> to vector<6x128xf32>
    %c0_65 = arith.constant 0 : index
    %c5 = arith.constant 5 : index
    %c0_66 = arith.constant 0 : index
    %144 = vector.load %arg11[%c0_65, %c5, %c0_66] : memref<6x8x128xf32, #tpu.memory_space<vmem>>, vector<6x1x128xf32>
    %145 = vector.shape_cast %144 : vector<6x1x128xf32> to vector<6x128xf32>
    %146 = vector.shape_cast %54 : vector<1x128xi1> to vector<1x128xi1>
    %147 = vector.broadcast %146 : vector<1x128xi1> to vector<6x128xi1>
    %148 = arith.select %147, %143, %145 : vector<6x128xi1>, vector<6x128xf32>
    %cst_67 = arith.constant dense<0.000000e+00> : vector<6x128xf32>
    %149 = tpu.matmul %133, %55, %cst_67 {dimension_numbers = #tpu.dot_dimension_numbers<[1], [0], [0], [1], [0, 0, 1, 1], [], []>} : vector<6x32xf32>, vector<32x128xf32>, vector<6x128xf32> -> vector<6x128xf32>
    %150 = arith.addf %148, %149 : vector<6x128xf32>
    %151 = vector.extract_strided_slice %150 {offsets = [0, 0], sizes = [6, 32], strides = [1, 1]} : vector<6x128xf32> to vector<6x32xf32>
    %152 = arith.negf %151 : vector<6x32xf32>
    %153 = math.exp %152 : vector<6x32xf32>
    %cst_68 = arith.constant 1.000000e+00 : f32
    %154 = vector.broadcast %cst_68 : f32 to vector<6x32xf32>
    %155 = arith.addf %154, %153 : vector<6x32xf32>
    %156 = arith.divf %154, %155 : vector<6x32xf32>
    %157 = vector.extract_strided_slice %150 {offsets = [0, 32], sizes = [6, 32], strides = [1, 1]} : vector<6x128xf32> to vector<6x32xf32>
    %158 = arith.negf %157 : vector<6x32xf32>
    %159 = math.exp %158 : vector<6x32xf32>
    %cst_69 = arith.constant 1.000000e+00 : f32
    %160 = vector.broadcast %cst_69 : f32 to vector<6x32xf32>
    %161 = arith.addf %160, %159 : vector<6x32xf32>
    %162 = arith.divf %160, %161 : vector<6x32xf32>
    %163 = vector.extract_strided_slice %150 {offsets = [0, 64], sizes = [6, 32], strides = [1, 1]} : vector<6x128xf32> to vector<6x32xf32>
    %164 = math.tanh %163 : vector<6x32xf32>
    %165 = vector.extract_strided_slice %150 {offsets = [0, 96], sizes = [6, 32], strides = [1, 1]} : vector<6x128xf32> to vector<6x32xf32>
    %166 = arith.negf %165 : vector<6x32xf32>
    %167 = math.exp %166 : vector<6x32xf32>
    %cst_70 = arith.constant 1.000000e+00 : f32
    %168 = vector.broadcast %cst_70 : f32 to vector<6x32xf32>
    %169 = arith.addf %168, %167 : vector<6x32xf32>
    %170 = arith.divf %168, %169 : vector<6x32xf32>
    %171 = arith.mulf %162, %131 : vector<6x32xf32>
    %172 = arith.mulf %156, %164 : vector<6x32xf32>
    %173 = arith.addf %171, %172 : vector<6x32xf32>
    %174 = math.tanh %173 : vector<6x32xf32>
    %175 = arith.mulf %170, %174 : vector<6x32xf32>
    %176 = vector.extract_strided_slice %175 {offsets = [0, 0], sizes = [6, 16], strides = [1, 1]} : vector<6x32xf32> to vector<6x16xf32>
    %c0_71 = arith.constant 0 : index
    %c2_72 = arith.constant 2 : index
    %c0_73 = arith.constant 0 : index
    %177 = vector.load %arg12[%c0_71, %c2_72, %c0_73] : memref<6x8x32xf32, #tpu.memory_space<vmem>>, vector<6x1x16xf32>
    %178 = vector.shape_cast %177 : vector<6x1x16xf32> to vector<6x16xf32>
    %179 = vector.shape_cast %176 : vector<6x16xf32> to vector<6x1x16xf32>
    tpu.vector_store %arg12[%c0_71, %c2_72, %c0_73], %179 {strides = array<i32>} : memref<6x8x32xf32, #tpu.memory_space<vmem>>, vector<6x1x16xf32>,
    %180 = vector.extract_strided_slice %175 {offsets = [0, 16], sizes = [6, 16], strides = [1, 1]} : vector<6x32xf32> to vector<6x16xf32>
    %c0_74 = arith.constant 0 : index
    %c5_75 = arith.constant 5 : index
    %c16_76 = arith.constant 16 : index
    %181 = vector.load %arg12[%c0_74, %c5_75, %c16_76] : memref<6x8x32xf32, #tpu.memory_space<vmem>>, vector<6x1x16xf32>
    %182 = vector.shape_cast %181 : vector<6x1x16xf32> to vector<6x16xf32>
    %183 = vector.shape_cast %180 : vector<6x16xf32> to vector<6x1x16xf32>
    tpu.vector_store %arg12[%c0_74, %c5_75, %c16_76], %183 {strides = array<i32>} : memref<6x8x32xf32, #tpu.memory_space<vmem>>, vector<6x1x16xf32>,
    %c0_77 = arith.constant 0 : index
    %c3 = arith.constant 3 : index
    %c0_78 = arith.constant 0 : index
    %184 = vector.load %arg11[%c0_77, %c3, %c0_78] : memref<6x8x128xf32, #tpu.memory_space<vmem>>, vector<6x1x128xf32>
    %185 = vector.shape_cast %184 : vector<6x1x128xf32> to vector<6x128xf32>
    %c0_79 = arith.constant 0 : index
    %c4 = arith.constant 4 : index
    %c0_80 = arith.constant 0 : index
    %186 = vector.load %arg11[%c0_79, %c4, %c0_80] : memref<6x8x128xf32, #tpu.memory_space<vmem>>, vector<6x1x128xf32>
    %187 = vector.shape_cast %186 : vector<6x1x128xf32> to vector<6x128xf32>
    %188 = vector.shape_cast %54 : vector<1x128xi1> to vector<1x128xi1>
    %189 = vector.broadcast %188 : vector<1x128xi1> to vector<6x128xi1>
    %190 = arith.select %189, %185, %187 : vector<6x128xi1>, vector<6x128xf32>
    %cst_81 = arith.constant dense<0.000000e+00> : vector<6x128xf32>
    %191 = tpu.matmul %175, %55, %cst_81 {dimension_numbers = #tpu.dot_dimension_numbers<[1], [0], [0], [1], [0, 0, 1, 1], [], []>} : vector<6x32xf32>, vector<32x128xf32>, vector<6x128xf32> -> vector<6x128xf32>
    %192 = arith.addf %190, %191 : vector<6x128xf32>
    %193 = vector.extract_strided_slice %192 {offsets = [0, 0], sizes = [6, 32], strides = [1, 1]} : vector<6x128xf32> to vector<6x32xf32>
    %194 = arith.negf %193 : vector<6x32xf32>
    %195 = math.exp %194 : vector<6x32xf32>
    %cst_82 = arith.constant 1.000000e+00 : f32
    %196 = vector.broadcast %cst_82 : f32 to vector<6x32xf32>
    %197 = arith.addf %196, %195 : vector<6x32xf32>
    %198 = arith.divf %196, %197 : vector<6x32xf32>
    %199 = vector.extract_strided_slice %192 {offsets = [0, 32], sizes = [6, 32], strides = [1, 1]} : vector<6x128xf32> to vector<6x32xf32>
    %200 = arith.negf %199 : vector<6x32xf32>
    %201 = math.exp %200 : vector<6x32xf32>
    %cst_83 = arith.constant 1.000000e+00 : f32
    %202 = vector.broadcast %cst_83 : f32 to vector<6x32xf32>
    %203 = arith.addf %202, %201 : vector<6x32xf32>
    %204 = arith.divf %202, %203 : vector<6x32xf32>
    %205 = vector.extract_strided_slice %192 {offsets = [0, 64], sizes = [6, 32], strides = [1, 1]} : vector<6x128xf32> to vector<6x32xf32>
    %206 = math.tanh %205 : vector<6x32xf32>
    %207 = vector.extract_strided_slice %192 {offsets = [0, 96], sizes = [6, 32], strides = [1, 1]} : vector<6x128xf32> to vector<6x32xf32>
    %208 = arith.negf %207 : vector<6x32xf32>
    %209 = math.exp %208 : vector<6x32xf32>
    %cst_84 = arith.constant 1.000000e+00 : f32
    %210 = vector.broadcast %cst_84 : f32 to vector<6x32xf32>
    %211 = arith.addf %210, %209 : vector<6x32xf32>
    %212 = arith.divf %210, %211 : vector<6x32xf32>
    %213 = arith.mulf %204, %173 : vector<6x32xf32>
    %214 = arith.mulf %198, %206 : vector<6x32xf32>
    %215 = arith.addf %213, %214 : vector<6x32xf32>
    %216 = math.tanh %215 : vector<6x32xf32>
    %217 = arith.mulf %212, %216 : vector<6x32xf32>
    %218 = vector.extract_strided_slice %217 {offsets = [0, 0], sizes = [6, 16], strides = [1, 1]} : vector<6x32xf32> to vector<6x16xf32>
    %c0_85 = arith.constant 0 : index
    %c3_86 = arith.constant 3 : index
    %c0_87 = arith.constant 0 : index
    %219 = vector.load %arg12[%c0_85, %c3_86, %c0_87] : memref<6x8x32xf32, #tpu.memory_space<vmem>>, vector<6x1x16xf32>
    %220 = vector.shape_cast %219 : vector<6x1x16xf32> to vector<6x16xf32>
    %221 = vector.shape_cast %218 : vector<6x16xf32> to vector<6x1x16xf32>
    tpu.vector_store %arg12[%c0_85, %c3_86, %c0_87], %221 {strides = array<i32>} : memref<6x8x32xf32, #tpu.memory_space<vmem>>, vector<6x1x16xf32>,
    %222 = vector.extract_strided_slice %217 {offsets = [0, 16], sizes = [6, 16], strides = [1, 1]} : vector<6x32xf32> to vector<6x16xf32>
    %c0_88 = arith.constant 0 : index
    %c4_89 = arith.constant 4 : index
    %c16_90 = arith.constant 16 : index
    %223 = vector.load %arg12[%c0_88, %c4_89, %c16_90] : memref<6x8x32xf32, #tpu.memory_space<vmem>>, vector<6x1x16xf32>
    %224 = vector.shape_cast %223 : vector<6x1x16xf32> to vector<6x16xf32>
    %225 = vector.shape_cast %222 : vector<6x16xf32> to vector<6x1x16xf32>
    tpu.vector_store %arg12[%c0_88, %c4_89, %c16_90], %225 {strides = array<i32>} : memref<6x8x32xf32, #tpu.memory_space<vmem>>, vector<6x1x16xf32>,
    %c0_91 = arith.constant 0 : index
    %c4_92 = arith.constant 4 : index
    %c0_93 = arith.constant 0 : index
    %226 = vector.load %arg11[%c0_91, %c4_92, %c0_93] : memref<6x8x128xf32, #tpu.memory_space<vmem>>, vector<6x1x128xf32>
    %227 = vector.shape_cast %226 : vector<6x1x128xf32> to vector<6x128xf32>
    %c0_94 = arith.constant 0 : index
    %c3_95 = arith.constant 3 : index
    %c0_96 = arith.constant 0 : index
    %228 = vector.load %arg11[%c0_94, %c3_95, %c0_96] : memref<6x8x128xf32, #tpu.memory_space<vmem>>, vector<6x1x128xf32>
    %229 = vector.shape_cast %228 : vector<6x1x128xf32> to vector<6x128xf32>
    %230 = vector.shape_cast %54 : vector<1x128xi1> to vector<1x128xi1>
    %231 = vector.broadcast %230 : vector<1x128xi1> to vector<6x128xi1>
    %232 = arith.select %231, %227, %229 : vector<6x128xi1>, vector<6x128xf32>
    %cst_97 = arith.constant dense<0.000000e+00> : vector<6x128xf32>
    %233 = tpu.matmul %217, %55, %cst_97 {dimension_numbers = #tpu.dot_dimension_numbers<[1], [0], [0], [1], [0, 0, 1, 1], [], []>} : vector<6x32xf32>, vector<32x128xf32>, vector<6x128xf32> -> vector<6x128xf32>
    %234 = arith.addf %232, %233 : vector<6x128xf32>
    %235 = vector.extract_strided_slice %234 {offsets = [0, 0], sizes = [6, 32], strides = [1, 1]} : vector<6x128xf32> to vector<6x32xf32>
    %236 = arith.negf %235 : vector<6x32xf32>
    %237 = math.exp %236 : vector<6x32xf32>
    %cst_98 = arith.constant 1.000000e+00 : f32
    %238 = vector.broadcast %cst_98 : f32 to vector<6x32xf32>
    %239 = arith.addf %238, %237 : vector<6x32xf32>
    %240 = arith.divf %238, %239 : vector<6x32xf32>
    %241 = vector.extract_strided_slice %234 {offsets = [0, 32], sizes = [6, 32], strides = [1, 1]} : vector<6x128xf32> to vector<6x32xf32>
    %242 = arith.negf %241 : vector<6x32xf32>
    %243 = math.exp %242 : vector<6x32xf32>
    %cst_99 = arith.constant 1.000000e+00 : f32
    %244 = vector.broadcast %cst_99 : f32 to vector<6x32xf32>
    %245 = arith.addf %244, %243 : vector<6x32xf32>
    %246 = arith.divf %244, %245 : vector<6x32xf32>
    %247 = vector.extract_strided_slice %234 {offsets = [0, 64], sizes = [6, 32], strides = [1, 1]} : vector<6x128xf32> to vector<6x32xf32>
    %248 = math.tanh %247 : vector<6x32xf32>
    %249 = vector.extract_strided_slice %234 {offsets = [0, 96], sizes = [6, 32], strides = [1, 1]} : vector<6x128xf32> to vector<6x32xf32>
    %250 = arith.negf %249 : vector<6x32xf32>
    %251 = math.exp %250 : vector<6x32xf32>
    %cst_100 = arith.constant 1.000000e+00 : f32
    %252 = vector.broadcast %cst_100 : f32 to vector<6x32xf32>
    %253 = arith.addf %252, %251 : vector<6x32xf32>
    %254 = arith.divf %252, %253 : vector<6x32xf32>
    %255 = arith.mulf %246, %215 : vector<6x32xf32>
    %256 = arith.mulf %240, %248 : vector<6x32xf32>
    %257 = arith.addf %255, %256 : vector<6x32xf32>
    %258 = math.tanh %257 : vector<6x32xf32>
    %259 = arith.mulf %254, %258 : vector<6x32xf32>
    %260 = vector.extract_strided_slice %259 {offsets = [0, 0], sizes = [6, 16], strides = [1, 1]} : vector<6x32xf32> to vector<6x16xf32>
    %c0_101 = arith.constant 0 : index
    %c4_102 = arith.constant 4 : index
    %c0_103 = arith.constant 0 : index
    %261 = vector.load %arg12[%c0_101, %c4_102, %c0_103] : memref<6x8x32xf32, #tpu.memory_space<vmem>>, vector<6x1x16xf32>
    %262 = vector.shape_cast %261 : vector<6x1x16xf32> to vector<6x16xf32>
    %263 = vector.shape_cast %260 : vector<6x16xf32> to vector<6x1x16xf32>
    tpu.vector_store %arg12[%c0_101, %c4_102, %c0_103], %263 {strides = array<i32>} : memref<6x8x32xf32, #tpu.memory_space<vmem>>, vector<6x1x16xf32>,
    %264 = vector.extract_strided_slice %259 {offsets = [0, 16], sizes = [6, 16], strides = [1, 1]} : vector<6x32xf32> to vector<6x16xf32>
    %c0_104 = arith.constant 0 : index
    %c3_105 = arith.constant 3 : index
    %c16_106 = arith.constant 16 : index
    %265 = vector.load %arg12[%c0_104, %c3_105, %c16_106] : memref<6x8x32xf32, #tpu.memory_space<vmem>>, vector<6x1x16xf32>
    %266 = vector.shape_cast %265 : vector<6x1x16xf32> to vector<6x16xf32>
    %267 = vector.shape_cast %264 : vector<6x16xf32> to vector<6x1x16xf32>
    tpu.vector_store %arg12[%c0_104, %c3_105, %c16_106], %267 {strides = array<i32>} : memref<6x8x32xf32, #tpu.memory_space<vmem>>, vector<6x1x16xf32>,
    %c0_107 = arith.constant 0 : index
    %c5_108 = arith.constant 5 : index
    %c0_109 = arith.constant 0 : index
    %268 = vector.load %arg11[%c0_107, %c5_108, %c0_109] : memref<6x8x128xf32, #tpu.memory_space<vmem>>, vector<6x1x128xf32>
    %269 = vector.shape_cast %268 : vector<6x1x128xf32> to vector<6x128xf32>
    %c0_110 = arith.constant 0 : index
    %c2_111 = arith.constant 2 : index
    %c0_112 = arith.constant 0 : index
    %270 = vector.load %arg11[%c0_110, %c2_111, %c0_112] : memref<6x8x128xf32, #tpu.memory_space<vmem>>, vector<6x1x128xf32>
    %271 = vector.shape_cast %270 : vector<6x1x128xf32> to vector<6x128xf32>
    %272 = vector.shape_cast %54 : vector<1x128xi1> to vector<1x128xi1>
    %273 = vector.broadcast %272 : vector<1x128xi1> to vector<6x128xi1>
    %274 = arith.select %273, %269, %271 : vector<6x128xi1>, vector<6x128xf32>
    %cst_113 = arith.constant dense<0.000000e+00> : vector<6x128xf32>
    %275 = tpu.matmul %259, %55, %cst_113 {dimension_numbers = #tpu.dot_dimension_numbers<[1], [0], [0], [1], [0, 0, 1, 1], [], []>} : vector<6x32xf32>, vector<32x128xf32>, vector<6x128xf32> -> vector<6x128xf32>
    %276 = arith.addf %274, %275 : vector<6x128xf32>
    %277 = vector.extract_strided_slice %276 {offsets = [0, 0], sizes = [6, 32], strides = [1, 1]} : vector<6x128xf32> to vector<6x32xf32>
    %278 = arith.negf %277 : vector<6x32xf32>
    %279 = math.exp %278 : vector<6x32xf32>
    %cst_114 = arith.constant 1.000000e+00 : f32
    %280 = vector.broadcast %cst_114 : f32 to vector<6x32xf32>
    %281 = arith.addf %280, %279 : vector<6x32xf32>
    %282 = arith.divf %280, %281 : vector<6x32xf32>
    %283 = vector.extract_strided_slice %276 {offsets = [0, 32], sizes = [6, 32], strides = [1, 1]} : vector<6x128xf32> to vector<6x32xf32>
    %284 = arith.negf %283 : vector<6x32xf32>
    %285 = math.exp %284 : vector<6x32xf32>
    %cst_115 = arith.constant 1.000000e+00 : f32
    %286 = vector.broadcast %cst_115 : f32 to vector<6x32xf32>
    %287 = arith.addf %286, %285 : vector<6x32xf32>
    %288 = arith.divf %286, %287 : vector<6x32xf32>
    %289 = vector.extract_strided_slice %276 {offsets = [0, 64], sizes = [6, 32], strides = [1, 1]} : vector<6x128xf32> to vector<6x32xf32>
    %290 = math.tanh %289 : vector<6x32xf32>
    %291 = vector.extract_strided_slice %276 {offsets = [0, 96], sizes = [6, 32], strides = [1, 1]} : vector<6x128xf32> to vector<6x32xf32>
    %292 = arith.negf %291 : vector<6x32xf32>
    %293 = math.exp %292 : vector<6x32xf32>
    %cst_116 = arith.constant 1.000000e+00 : f32
    %294 = vector.broadcast %cst_116 : f32 to vector<6x32xf32>
    %295 = arith.addf %294, %293 : vector<6x32xf32>
    %296 = arith.divf %294, %295 : vector<6x32xf32>
    %297 = arith.mulf %288, %257 : vector<6x32xf32>
    %298 = arith.mulf %282, %290 : vector<6x32xf32>
    %299 = arith.addf %297, %298 : vector<6x32xf32>
    %300 = math.tanh %299 : vector<6x32xf32>
    %301 = arith.mulf %296, %300 : vector<6x32xf32>
    %302 = vector.extract_strided_slice %301 {offsets = [0, 0], sizes = [6, 16], strides = [1, 1]} : vector<6x32xf32> to vector<6x16xf32>
    %c0_117 = arith.constant 0 : index
    %c5_118 = arith.constant 5 : index
    %c0_119 = arith.constant 0 : index
    %303 = vector.load %arg12[%c0_117, %c5_118, %c0_119] : memref<6x8x32xf32, #tpu.memory_space<vmem>>, vector<6x1x16xf32>
    %304 = vector.shape_cast %303 : vector<6x1x16xf32> to vector<6x16xf32>
    %305 = vector.shape_cast %302 : vector<6x16xf32> to vector<6x1x16xf32>
    tpu.vector_store %arg12[%c0_117, %c5_118, %c0_119], %305 {strides = array<i32>} : memref<6x8x32xf32, #tpu.memory_space<vmem>>, vector<6x1x16xf32>,
    %306 = vector.extract_strided_slice %301 {offsets = [0, 16], sizes = [6, 16], strides = [1, 1]} : vector<6x32xf32> to vector<6x16xf32>
    %c0_120 = arith.constant 0 : index
    %c2_121 = arith.constant 2 : index
    %c16_122 = arith.constant 16 : index
    %307 = vector.load %arg12[%c0_120, %c2_121, %c16_122] : memref<6x8x32xf32, #tpu.memory_space<vmem>>, vector<6x1x16xf32>
    %308 = vector.shape_cast %307 : vector<6x1x16xf32> to vector<6x16xf32>
    %309 = vector.shape_cast %306 : vector<6x16xf32> to vector<6x1x16xf32>
    tpu.vector_store %arg12[%c0_120, %c2_121, %c16_122], %309 {strides = array<i32>} : memref<6x8x32xf32, #tpu.memory_space<vmem>>, vector<6x1x16xf32>,
    %c0_123 = arith.constant 0 : index
    %c6_124 = arith.constant 6 : index
    %c0_125 = arith.constant 0 : index
    %310 = vector.load %arg11[%c0_123, %c6_124, %c0_125] : memref<6x8x128xf32, #tpu.memory_space<vmem>>, vector<6x1x128xf32>
    %311 = vector.shape_cast %310 : vector<6x1x128xf32> to vector<6x128xf32>
    %c0_126 = arith.constant 0 : index
    %c1_127 = arith.constant 1 : index
    %c0_128 = arith.constant 0 : index
    %312 = vector.load %arg11[%c0_126, %c1_127, %c0_128] : memref<6x8x128xf32, #tpu.memory_space<vmem>>, vector<6x1x128xf32>
    %313 = vector.shape_cast %312 : vector<6x1x128xf32> to vector<6x128xf32>
    %314 = vector.shape_cast %54 : vector<1x128xi1> to vector<1x128xi1>
    %315 = vector.broadcast %314 : vector<1x128xi1> to vector<6x128xi1>
    %316 = arith.select %315, %311, %313 : vector<6x128xi1>, vector<6x128xf32>
    %cst_129 = arith.constant dense<0.000000e+00> : vector<6x128xf32>
    %317 = tpu.matmul %301, %55, %cst_129 {dimension_numbers = #tpu.dot_dimension_numbers<[1], [0], [0], [1], [0, 0, 1, 1], [], []>} : vector<6x32xf32>, vector<32x128xf32>, vector<6x128xf32> -> vector<6x128xf32>
    %318 = arith.addf %316, %317 : vector<6x128xf32>
    %319 = vector.extract_strided_slice %318 {offsets = [0, 0], sizes = [6, 32], strides = [1, 1]} : vector<6x128xf32> to vector<6x32xf32>
    %320 = arith.negf %319 : vector<6x32xf32>
    %321 = math.exp %320 : vector<6x32xf32>
    %cst_130 = arith.constant 1.000000e+00 : f32
    %322 = vector.broadcast %cst_130 : f32 to vector<6x32xf32>
    %323 = arith.addf %322, %321 : vector<6x32xf32>
    %324 = arith.divf %322, %323 : vector<6x32xf32>
    %325 = vector.extract_strided_slice %318 {offsets = [0, 32], sizes = [6, 32], strides = [1, 1]} : vector<6x128xf32> to vector<6x32xf32>
    %326 = arith.negf %325 : vector<6x32xf32>
    %327 = math.exp %326 : vector<6x32xf32>
    %cst_131 = arith.constant 1.000000e+00 : f32
    %328 = vector.broadcast %cst_131 : f32 to vector<6x32xf32>
    %329 = arith.addf %328, %327 : vector<6x32xf32>
    %330 = arith.divf %328, %329 : vector<6x32xf32>
    %331 = vector.extract_strided_slice %318 {offsets = [0, 64], sizes = [6, 32], strides = [1, 1]} : vector<6x128xf32> to vector<6x32xf32>
    %332 = math.tanh %331 : vector<6x32xf32>
    %333 = vector.extract_strided_slice %318 {offsets = [0, 96], sizes = [6, 32], strides = [1, 1]} : vector<6x128xf32> to vector<6x32xf32>
    %334 = arith.negf %333 : vector<6x32xf32>
    %335 = math.exp %334 : vector<6x32xf32>
    %cst_132 = arith.constant 1.000000e+00 : f32
    %336 = vector.broadcast %cst_132 : f32 to vector<6x32xf32>
    %337 = arith.addf %336, %335 : vector<6x32xf32>
    %338 = arith.divf %336, %337 : vector<6x32xf32>
    %339 = arith.mulf %330, %299 : vector<6x32xf32>
    %340 = arith.mulf %324, %332 : vector<6x32xf32>
    %341 = arith.addf %339, %340 : vector<6x32xf32>
    %342 = math.tanh %341 : vector<6x32xf32>
    %343 = arith.mulf %338, %342 : vector<6x32xf32>
    %344 = vector.extract_strided_slice %343 {offsets = [0, 0], sizes = [6, 16], strides = [1, 1]} : vector<6x32xf32> to vector<6x16xf32>
    %c0_133 = arith.constant 0 : index
    %c6_134 = arith.constant 6 : index
    %c0_135 = arith.constant 0 : index
    %345 = vector.load %arg12[%c0_133, %c6_134, %c0_135] : memref<6x8x32xf32, #tpu.memory_space<vmem>>, vector<6x1x16xf32>
    %346 = vector.shape_cast %345 : vector<6x1x16xf32> to vector<6x16xf32>
    %347 = vector.shape_cast %344 : vector<6x16xf32> to vector<6x1x16xf32>
    tpu.vector_store %arg12[%c0_133, %c6_134, %c0_135], %347 {strides = array<i32>} : memref<6x8x32xf32, #tpu.memory_space<vmem>>, vector<6x1x16xf32>,
    %348 = vector.extract_strided_slice %343 {offsets = [0, 16], sizes = [6, 16], strides = [1, 1]} : vector<6x32xf32> to vector<6x16xf32>
    %c0_136 = arith.constant 0 : index
    %c1_137 = arith.constant 1 : index
    %c16_138 = arith.constant 16 : index
    %349 = vector.load %arg12[%c0_136, %c1_137, %c16_138] : memref<6x8x32xf32, #tpu.memory_space<vmem>>, vector<6x1x16xf32>
    %350 = vector.shape_cast %349 : vector<6x1x16xf32> to vector<6x16xf32>
    %351 = vector.shape_cast %348 : vector<6x16xf32> to vector<6x1x16xf32>
    tpu.vector_store %arg12[%c0_136, %c1_137, %c16_138], %351 {strides = array<i32>} : memref<6x8x32xf32, #tpu.memory_space<vmem>>, vector<6x1x16xf32>,
    %c0_139 = arith.constant 0 : index
    %c7_140 = arith.constant 7 : index
    %c0_141 = arith.constant 0 : index
    %352 = vector.load %arg11[%c0_139, %c7_140, %c0_141] : memref<6x8x128xf32, #tpu.memory_space<vmem>>, vector<6x1x128xf32>
    %353 = vector.shape_cast %352 : vector<6x1x128xf32> to vector<6x128xf32>
    %c0_142 = arith.constant 0 : index
    %c0_143 = arith.constant 0 : index
    %c0_144 = arith.constant 0 : index
    %354 = vector.load %arg11[%c0_142, %c0_143, %c0_144] : memref<6x8x128xf32, #tpu.memory_space<vmem>>, vector<6x1x128xf32>
    %355 = vector.shape_cast %354 : vector<6x1x128xf32> to vector<6x128xf32>
    %356 = vector.shape_cast %54 : vector<1x128xi1> to vector<1x128xi1>
    %357 = vector.broadcast %356 : vector<1x128xi1> to vector<6x128xi1>
    %358 = arith.select %357, %353, %355 : vector<6x128xi1>, vector<6x128xf32>
    %cst_145 = arith.constant dense<0.000000e+00> : vector<6x128xf32>
    %359 = tpu.matmul %343, %55, %cst_145 {dimension_numbers = #tpu.dot_dimension_numbers<[1], [0], [0], [1], [0, 0, 1, 1], [], []>} : vector<6x32xf32>, vector<32x128xf32>, vector<6x128xf32> -> vector<6x128xf32>
    %360 = arith.addf %358, %359 : vector<6x128xf32>
    %361 = vector.extract_strided_slice %360 {offsets = [0, 0], sizes = [6, 32], strides = [1, 1]} : vector<6x128xf32> to vector<6x32xf32>
    %362 = arith.negf %361 : vector<6x32xf32>
    %363 = math.exp %362 : vector<6x32xf32>
    %cst_146 = arith.constant 1.000000e+00 : f32
    %364 = vector.broadcast %cst_146 : f32 to vector<6x32xf32>
    %365 = arith.addf %364, %363 : vector<6x32xf32>
    %366 = arith.divf %364, %365 : vector<6x32xf32>
    %367 = vector.extract_strided_slice %360 {offsets = [0, 32], sizes = [6, 32], strides = [1, 1]} : vector<6x128xf32> to vector<6x32xf32>
    %368 = arith.negf %367 : vector<6x32xf32>
    %369 = math.exp %368 : vector<6x32xf32>
    %cst_147 = arith.constant 1.000000e+00 : f32
    %370 = vector.broadcast %cst_147 : f32 to vector<6x32xf32>
    %371 = arith.addf %370, %369 : vector<6x32xf32>
    %372 = arith.divf %370, %371 : vector<6x32xf32>
    %373 = vector.extract_strided_slice %360 {offsets = [0, 64], sizes = [6, 32], strides = [1, 1]} : vector<6x128xf32> to vector<6x32xf32>
    %374 = math.tanh %373 : vector<6x32xf32>
    %375 = vector.extract_strided_slice %360 {offsets = [0, 96], sizes = [6, 32], strides = [1, 1]} : vector<6x128xf32> to vector<6x32xf32>
    %376 = arith.negf %375 : vector<6x32xf32>
    %377 = math.exp %376 : vector<6x32xf32>
    %cst_148 = arith.constant 1.000000e+00 : f32
    %378 = vector.broadcast %cst_148 : f32 to vector<6x32xf32>
    %379 = arith.addf %378, %377 : vector<6x32xf32>
    %380 = arith.divf %378, %379 : vector<6x32xf32>
    %381 = arith.mulf %372, %341 : vector<6x32xf32>
    %382 = arith.mulf %366, %374 : vector<6x32xf32>
    %383 = arith.addf %381, %382 : vector<6x32xf32>
    %384 = math.tanh %383 : vector<6x32xf32>
    %385 = arith.mulf %380, %384 : vector<6x32xf32>
    %386 = vector.extract_strided_slice %385 {offsets = [0, 0], sizes = [6, 16], strides = [1, 1]} : vector<6x32xf32> to vector<6x16xf32>
    %c0_149 = arith.constant 0 : index
    %c7_150 = arith.constant 7 : index
    %c0_151 = arith.constant 0 : index
    %387 = vector.load %arg12[%c0_149, %c7_150, %c0_151] : memref<6x8x32xf32, #tpu.memory_space<vmem>>, vector<6x1x16xf32>
    %388 = vector.shape_cast %387 : vector<6x1x16xf32> to vector<6x16xf32>
    %389 = vector.shape_cast %386 : vector<6x16xf32> to vector<6x1x16xf32>
    tpu.vector_store %arg12[%c0_149, %c7_150, %c0_151], %389 {strides = array<i32>} : memref<6x8x32xf32, #tpu.memory_space<vmem>>, vector<6x1x16xf32>,
    %390 = vector.extract_strided_slice %385 {offsets = [0, 16], sizes = [6, 16], strides = [1, 1]} : vector<6x32xf32> to vector<6x16xf32>
    %c0_152 = arith.constant 0 : index
    %c0_153 = arith.constant 0 : index
    %c16_154 = arith.constant 16 : index
    %391 = vector.load %arg12[%c0_152, %c0_153, %c16_154] : memref<6x8x32xf32, #tpu.memory_space<vmem>>, vector<6x1x16xf32>
    %392 = vector.shape_cast %391 : vector<6x1x16xf32> to vector<6x16xf32>
    %393 = vector.shape_cast %390 : vector<6x16xf32> to vector<6x1x16xf32>
    tpu.vector_store %arg12[%c0_152, %c0_153, %c16_154], %393 {strides = array<i32>} : memref<6x8x32xf32, #tpu.memory_space<vmem>>, vector<6x1x16xf32>,
    %c0_155 = arith.constant 0 : index
    %c0_156 = arith.constant 0 : index
    %c0_157 = arith.constant 0 : index
    %394 = vector.load %arg12[%c0_155, %c0_156, %c0_157] : memref<6x8x32xf32, #tpu.memory_space<vmem>>, vector<6x8x32xf32>
    %395 = vector.shape_cast %394 : vector<6x8x32xf32> to vector<48x32xf32>
    %c0_158 = arith.constant 0 : index
    %c0_159 = arith.constant 0 : index
    %396 = vector.load %arg7[%c0_158, %c0_159] : memref<32x8xf32, #tpu.memory_space<vmem>>, vector<32x8xf32>
    %cst_160 = arith.constant dense<0.000000e+00> : vector<48x8xf32>
    %397 = tpu.matmul %395, %396, %cst_160 {dimension_numbers = #tpu.dot_dimension_numbers<[1], [0], [0], [1], [0, 0, 1, 1], [], []>} : vector<48x32xf32>, vector<32x8xf32>, vector<48x8xf32> -> vector<48x8xf32>
    %c0_161 = arith.constant 0 : index
    %c0_162 = arith.constant 0 : index
    %398 = vector.load %arg8[%c0_161, %c0_162] : memref<1x8xf32, #tpu.memory_space<vmem>>, vector<1x8xf32>
    %399 = vector.broadcast %398 : vector<1x8xf32> to vector<48x8xf32>
    %400 = arith.addf %397, %399 : vector<48x8xf32>
    %401 = math.tanh %400 : vector<48x8xf32>
    %c0_163 = arith.constant 0 : index
    %c0_164 = arith.constant 0 : index
    %402 = vector.load %arg9[%c0_163, %c0_164] : memref<1x8xf32, #tpu.memory_space<vmem>>, vector<1x8xf32>
    %403 = vector.broadcast %402 : vector<1x8xf32> to vector<48x8xf32>
    %404 = arith.mulf %401, %403 : vector<48x8xf32>
    %cst_165 = arith.constant dense<0.000000e+00> : vector<48xf32>
    %405 = vector.multi_reduction <add>, %404, %cst_165 [1] : vector<48x8xf32> to vector<48xf32>
    %406 = vector.shape_cast %405 : vector<48xf32> to vector<48x1xf32>
    %407 = vector.shape_cast %406 : vector<48x1xf32> to vector<6x8x1xf32>
    %cst_166 = arith.constant dense<0xFF800000> : vector<6x1xf32>
    %408 = vector.multi_reduction <maximumf>, %407, %cst_166 [1] : vector<6x8x1xf32> to vector<6x1xf32>
    %409 = vector.shape_cast %408 : vector<6x1xf32> to vector<6x1x1xf32>
    %410 = vector.broadcast %409 : vector<6x1x1xf32> to vector<6x8x1xf32>
    %411 = arith.subf %407, %410 : vector<6x8x1xf32>
    %412 = math.exp %411 : vector<6x8x1xf32>
    %cst_167 = arith.constant dense<0.000000e+00> : vector<6x1xf32>
    %413 = vector.multi_reduction <add>, %412, %cst_167 [1] : vector<6x8x1xf32> to vector<6x1xf32>
    %414 = vector.shape_cast %413 : vector<6x1xf32> to vector<6x1x1xf32>
    %415 = tpu.reciprocal %414 {approx = true} : vector<6x1x1xf32> -> vector<6x1x1xf32>
    %416 = vector.broadcast %415 : vector<6x1x1xf32> to vector<6x8x1xf32>
    %417 = arith.mulf %412, %416 : vector<6x8x1xf32>
    %418 = vector.broadcast %417 : vector<6x8x1xf32> to vector<6x8x32xf32>
    %419 = arith.mulf %394, %418 : vector<6x8x32xf32>
    %cst_168 = arith.constant dense<0.000000e+00> : vector<6x32xf32>
    %420 = vector.multi_reduction <add>, %419, %cst_168 [1] : vector<6x8x32xf32> to vector<6x32xf32>
    %c0_169 = arith.constant 0 : index
    %c0_170 = arith.constant 0 : index
    %421 = vector.load %arg10[%c0_169, %c0_170] : memref<6x32xf32, #tpu.memory_space<vmem>>, vector<6x32xf32>
    tpu.vector_store %arg10[%c0_169, %c0_170], %420 {strides = array<i32>} : memref<6x32xf32, #tpu.memory_space<vmem>>, vector<6x32xf32>,
    return
  }
  func.func @transform_0(%arg0: i32) -> (i32, i32, i32, i32) {
    %c0_i32 = arith.constant 0 : i32
    %c0_i32_0 = arith.constant 0 : i32
    %c0_i32_1 = arith.constant 0 : i32
    %c0_i32_2 = arith.constant 0 : i32
    return %arg0, %c0_i32, %c0_i32_0, %c0_i32_1 : i32, i32, i32, i32
  }
  func.func @transform_1(%arg0: i32) -> (i32, i32) {
    %c0_i32 = arith.constant 0 : i32
    %c0_i32_0 = arith.constant 0 : i32
    %c0_i32_1 = arith.constant 0 : i32
    return %c0_i32, %c0_i32_0 : i32, i32
  }
  func.func @transform_2(%arg0: i32) -> (i32, i32) {
    %c0_i32 = arith.constant 0 : i32
    %c0_i32_0 = arith.constant 0 : i32
    %c0_i32_1 = arith.constant 0 : i32
    return %c0_i32, %c0_i32_0 : i32, i32
  }
  func.func @transform_3(%arg0: i32) -> (i32, i32) {
    %c0_i32 = arith.constant 0 : i32
    %c0_i32_0 = arith.constant 0 : i32
    %c0_i32_1 = arith.constant 0 : i32
    return %c0_i32, %c0_i32_0 : i32, i32
  }
  func.func @transform_4(%arg0: i32) -> (i32, i32) {
    %c0_i32 = arith.constant 0 : i32
    %c0_i32_0 = arith.constant 0 : i32
    %c0_i32_1 = arith.constant 0 : i32
    return %c0_i32, %c0_i32_0 : i32, i32
  }
  func.func @transform_5(%arg0: i32) -> (i32, i32) {
    %c0_i32 = arith.constant 0 : i32
    %c0_i32_0 = arith.constant 0 : i32
    %c0_i32_1 = arith.constant 0 : i32
    return %c0_i32, %c0_i32_0 : i32, i32
  }
  func.func @transform_6(%arg0: i32) -> (i32, i32) {
    %c0_i32 = arith.constant 0 : i32
    %c0_i32_0 = arith.constant 0 : i32
    %c0_i32_1 = arith.constant 0 : i32
    return %c0_i32, %c0_i32_0 : i32, i32
  }
  func.func @transform_7(%arg0: i32) -> (i32, i32) {
    %c0_i32 = arith.constant 0 : i32
    %c0_i32_0 = arith.constant 0 : i32
    %c0_i32_1 = arith.constant 0 : i32
    return %c0_i32, %c0_i32_0 : i32, i32
  }
  func.func @transform_8(%arg0: i32) -> (i32, i32) {
    %c0_i32 = arith.constant 0 : i32
    %c0_i32_0 = arith.constant 0 : i32
    %c0_i32_1 = arith.constant 0 : i32
    return %c0_i32, %c0_i32_0 : i32, i32
  }
  func.func @transform_9(%arg0: i32) -> (i32, i32) {
    %c0_i32 = arith.constant 0 : i32
    %c0_i32_0 = arith.constant 0 : i32
    return %arg0, %c0_i32 : i32, i32
  }
}

</mosaic_0001>

<llo_original>
// kernel: epoch_encoder_forward.1
$region0: #{epoch_encoder_forward.1}
  #allocation0 [shape = 'u32[]', space=smem, size = 0x4, offset = 0x4, fixed_abs, tag = 'smem constant byte address 0x4 - core index']
  #allocation1 [shape = 'u32[144,128]{1,0:T(1,128)}', space=vmem, size = 0x12000, scoped, tag = 'internal scratch']
  #allocation2 [shape = 'f32[6,8,128]{2,1,0:T(8,128)}', space=vmem, size = 0x6000, scoped, tag = 'scratch operand']
  #allocation3 [shape = 'f32[6,8,32]{2,1,0:T(8,128)}', space=vmem, size = 0x6000, scoped, tag = 'scratch operand']
  %s0 = inlined_call_operand.hbm [shape: f32[6,2,8,16], index: 0, kind: input, shape index: {}]
  %s1 = inlined_call_operand.vmem [shape: f32[16,8], index: 1, kind: input, shape index: {}]
  %s2 = inlined_call_operand.vmem [shape: f32[2,8], index: 2, kind: input, shape index: {}]
  %s3 = inlined_call_operand.vmem [shape: f32[16,128], index: 3, kind: input, shape index: {}]
  %s4 = inlined_call_operand.vmem [shape: f32[32,128], index: 4, kind: input, shape index: {}]
  %s5 = inlined_call_operand.vmem [shape: f32[1,128], index: 5, kind: input, shape index: {}]
  %s6 = inlined_call_operand.vmem [shape: f32[32,8], index: 6, kind: input, shape index: {}]
  %s7 = inlined_call_operand.vmem [shape: f32[1,8], index: 7, kind: input, shape index: {}]
  %s8 = inlined_call_operand.vmem [shape: f32[1,8], index: 8, kind: input, shape index: {}]
  %s9 = inlined_call_operand.vmem [shape: f32[6,32], index: 9, kind: output, shape index: {}]
  %s10 = sld [smem:[#allocation0]]
  $region50: #{epoch_encoder_forward.1} parent=0
    _
  %s12 = ssub.s32 1, %s10
  %s13 = scalar_select 0, %s12, %s10
  $region1: #{epoch_encoder_forward.1} parent=0
    #allocation4 [shape = 'u8[49152]{0}', space=vmem, size = 0xc000, scoped, tag = 'input window, operand 0, single buffered']
    #allocation5 [shape = 's32[1]{0}', space=sflag, size = 0x4, scoped, tag = 'scoped memory for epoch_encoder_forward.1']
    %14 = vsyncpa [#allocation5], 0
    // Predicated region
    $region2: #{epoch_encoder_forward.1} parent=1 // pred_check
      _
    $region3: #{epoch_encoder_forward.1} parent=1 // pred_check_branch
      %16 = sbr.rel (0) target = $region5
    $region4: #{epoch_encoder_forward.1} parent=1 // pred_region
      %s18 = ssub.s32 1536, 1536
      %19 = vsyncadd [#allocation5], %s18
      %s20 = sshll.u32 [#allocation4], 4
      %s21 = int_to_ptr.vmem [resolvable:$true] %s20
      %26 = dma.hbm_to_vmem [thread:$0]  %s0, 1536, %s21, [#allocation5], 128, 128, 8
    $region5: #{epoch_encoder_forward.1} parent=1 // pred_fallthru
      _
    // Predicated region
    $region6: #{epoch_encoder_forward.1} parent=1 // pred_check
      _
    $region7: #{epoch_encoder_forward.1} parent=1 // pred_check_branch
      %28 = sbr.rel (0) target = $region9
    $region8: #{epoch_encoder_forward.1} parent=1 // pred_region
      _
    $region9: #{epoch_encoder_forward.1} parent=1 // pred_fallthru
      _
    // Predicated region
    $region10: #{epoch_encoder_forward.1} parent=1 // pred_check
      _
    $region11: #{epoch_encoder_forward.1} parent=1 // pred_check_branch
      %30 = sbr.rel (0) target = $region13
    $region12: #{epoch_encoder_forward.1} parent=1 // pred_region
      _
    $region13: #{epoch_encoder_forward.1} parent=1 // pred_fallthru
      _
    // Predicated region
    $region14: #{epoch_encoder_forward.1} parent=1 // pred_check
      _
    $region15: #{epoch_encoder_forward.1} parent=1 // pred_check_branch
      %32 = sbr.rel (0) target = $region17
    $region16: #{epoch_encoder_forward.1} parent=1 // pred_region
      _
    $region17: #{epoch_encoder_forward.1} parent=1 // pred_fallthru
      _
    // Predicated region
    $region18: #{epoch_encoder_forward.1} parent=1 // pred_check
      _
    $region19: #{epoch_encoder_forward.1} parent=1 // pred_check_branch
      %34 = sbr.rel (0) target = $region21
    $region20: #{epoch_encoder_forward.1} parent=1 // pred_region
      _
    $region21: #{epoch_encoder_forward.1} parent=1 // pred_fallthru
      _
    // Predicated region
    $region22: #{epoch_encoder_forward.1} parent=1 // pred_check
      _
    $region23: #{epoch_encoder_forward.1} parent=1 // pred_check_branch
      %36 = sbr.rel (0) target = $region25
    $region24: #{epoch_encoder_forward.1} parent=1 // pred_region
      _
    $region25: #{epoch_encoder_forward.1} parent=1 // pred_fallthru
      _
    // Predicated region
    $region26: #{epoch_encoder_forward.1} parent=1 // pred_check
      _
    $region27: #{epoch_encoder_forward.1} parent=1 // pred_check_branch
      %38 = sbr.rel (0) target = $region29
    $region28: #{epoch_encoder_forward.1} parent=1 // pred_region
      _
    $region29: #{epoch_encoder_forward.1} parent=1 // pred_fallthru
      _
    // Predicated region
    $region30: #{epoch_encoder_forward.1} parent=1 // pred_check
      _
    $region31: #{epoch_encoder_forward.1} parent=1 // pred_check_branch
      %40 = sbr.rel (0) target = $region33
    $region32: #{epoch_encoder_forward.1} parent=1 // pred_region
      _
    $region33: #{epoch_encoder_forward.1} parent=1 // pred_fallthru
      _
    // Predicated region
    $region34: #{epoch_encoder_forward.1} parent=1 // pred_check
      _
    $region35: #{epoch_encoder_forward.1} parent=1 // pred_check_branch
      %42 = sbr.rel (0) target = $region37
    $region36: #{epoch_encoder_forward.1} parent=1 // pred_region
      _
    $region37: #{epoch_encoder_forward.1} parent=1 // pred_fallthru
      _
    // Predicated region
    $region38: #{epoch_encoder_forward.1} parent=1 // pred_check
      _
    $region39: #{epoch_encoder_forward.1} parent=1 // pred_check_branch
      %44 = sbr.rel (0) target = $region41
    $region40: #{epoch_encoder_forward.1} parent=1 // pred_region
      %45 = dma.done [#allocation5], 1536
    $region41: #{epoch_encoder_forward.1} parent=1 // pred_fallthru
      _
    %v46 = vld [vmem:[%s2] sm:$0x1]
    %v47 = vxor.u32 %v46, 2147483648
    %v48 = vmul.f32 %v47, 1.442695
    %v49 = vpow.pop %v48
    %v50 = vadd.f32 %v49, 1.0
    %v51 = vrcp.pop %v50
    %v52 = vmul.f32 1.0, %v51
    %v53 = vld [vmem:[%s1] sm:$0xff]
    %v54 = vld [vmem:[%s1 + $0x8] sm:$0xff]
    %v55 = vlaneseq
    %v56 = vshrl.u32 %v55, 7
    %v57 = vsub.s32 0, %v56
    %v58 = vrot.slane %v52, %v57
    %v59 = vmul.f32 %v58, %v53
    %v60 = vmul.f32 %v58, %v54
    %v61 = vld [vmem:[%s3] sm:$0xff]
    %vm62 = vcmask 64512
    %v64 = vsel %vm62, %v59, 0
    %v67 = vsel %vm62, %v60, 0
    %69 = vmatprep.subr.mxu0 0.0
    %70 = vmatpush1.msra.mxu0 %v61
    %71 = vmatprep.subr.mxu0 0.0
    %72 = vmatpush1.msra.mxu0 0.0
    %73 = vmatprep.subr.mxu0 0.0
    %74 = vmatpush1.msra.mxu0 0.0
    %75 = vmatprep.subr.mxu0 0.0
    %76 = vmatpush1.msra.mxu0 0.0
    %77 = vmatprep.subr.mxu0 0.0
    %78 = vmatpush1.msra.mxu0 0.0
    %79 = vmatprep.subr.mxu0 0.0
    %80 = vmatpush1.msra.mxu0 0.0
    %81 = vmatprep.subr.mxu0 0.0
    %82 = vmatpush1.msra.mxu0 0.0
    %83 = vmatprep.subr.mxu0 0.0
    %84 = vmatpush1.msra.mxu0 0.0
    %85 = vmatprep.subr.mxu0 0.0
    %86 = vmatpush1.msra.mxu0 0.0
    %87 = vmatprep.subr.mxu0 0.0
    %88 = vmatpush1.msra.mxu0 0.0
    %89 = vmatprep.subr.mxu0 0.0
    %90 = vmatpush1.msra.mxu0 0.0
    %91 = vmatprep.subr.mxu0 0.0
    %92 = vmatpush1.msra.mxu0 0.0
    %93 = vmatprep.subr.mxu0 0.0
    %94 = vmatpush1.msra.mxu0 0.0
    %95 = vmatprep.subr.mxu0 0.0
    %96 = vmatpush1.msra.mxu0 0.0
    %97 = vmatprep.subr.mxu0 0.0
    %98 = vmatpush1.msra.mxu0 0.0
    %99 = vmatprep.subr.mxu0 0.0
    %100 = vmatpush1.msra.mxu0 0.0
    %101 = vmatprep.subr.mxu0 0.0
    %102 = vmatpush1.msra.mxu0 0.0
    %103 = vmatprep.subr.mxu0 0.0
    %104 = vmatpush1.msra.mxu0 0.0
    %105 = vmatprep.subr.mxu0 0.0
    %106 = vmatpush1.msra.mxu0 0.0
    %107 = vmatprep.subr.mxu0 0.0
    %108 = vmatpush1.msra.mxu0 0.0
    %109 = vmatprep.subr.mxu0 0.0
    %110 = vmatpush1.msra.mxu0 0.0
    %111 = vmatprep.subr.mxu0 0.0
    %112 = vmatpush1.msra.mxu0 0.0
    %113 = vmatprep.subr.mxu0 0.0
    %114 = vmatpush1.msra.mxu0 0.0
    %115 = vmatprep.subr.mxu0 0.0
    %116 = vmatpush1.msra.mxu0 0.0
    %117 = vmatprep.subr.mxu0 0.0
    %118 = vmatpush1.msra.mxu0 0.0
    %119 = vmatprep.subr.mxu0 0.0
    %120 = vmatpush1.msra.mxu0 0.0
    %121 = vmatprep.subr.mxu0 0.0
    %122 = vmatpush1.msra.mxu0 0.0
    %123 = vmatprep.subr.mxu0 0.0
    %124 = vmatpush1.msra.mxu0 0.0
    %125 = vmatprep.subr.mxu0 0.0
    %126 = vmatpush1.msra.mxu0 0.0
    %127 = vmatprep.subr.mxu0 0.0
    %128 = vmatpush1.msra.mxu0 0.0
    %129 = vmatprep.subr.mxu0 0.0
    %130 = vmatpush1.msra.mxu0 0.0
    %131 = vmatprep.subr.mxu0 0.0
    %132 = vmatpush1.msra.mxu0 0.0
    %133 = vmatprep.mubr.f32.mxu0 0.0
    %134 = vmatmul.mubr.f32.gmra.mrb[0].mxu0 %v64
    %v135 = vpop.f32.mrb[0].mxu0
    %v136 = vadd.f32 0.0, %v135
    %v137 = vpop.f32.mrb[0].mxu0
    %138 = vmatprep.mubr.f32.mxu0 0.0
    %139 = vmatmul.mubr.f32.gmra.mrb[0].mxu0 %v67
    %v140 = vpop.f32.mrb[0].mxu0
    %v141 = vadd.f32 0.0, %v140
    %v142 = vpop.f32.mrb[0].mxu0
    %143 = vdwg.mxu0
    %v144 = vld [vmem:[#allocation4] sm:$0xff]
    %v145 = vld [vmem:[#allocation4 + $0x10] sm:$0xff]
    %v146 = vld [vmem:[#allocation4 + $0x20] sm:$0xff]
    %v147 = vld [vmem:[#allocation4 + $0x30] sm:$0xff]
    %v148 = vld [vmem:[#allocation4 + $0x40] sm:$0xff]
    %v149 = vld [vmem:[#allocation4 + $0x50] sm:$0xff]
    %v150 = vld [vmem:[%s2 + $0x1] sm:$0x1]
    %v151 = vxor.u32 %v150, 2147483648
    %v152 = vmul.f32 %v151, 1.442695
    %v153 = vpow.pop %v152
    %v154 = vadd.f32 %v153, 1.0
    %v155 = vrcp.pop %v154
    %v156 = vmul.f32 1.0, %v155
    %v157 = vlaneseq
    %v158 = vshrl.u32 %v157, 7
    %v159 = vsub.s32 0, %v158
    %v160 = vrot.slane %v156, %v159
    %v161 = vmul.f32 %v160, %v53
    %v162 = vmul.f32 %v160, %v54
    %v163 = vld [vmem:[%s3 + $0x8] sm:$0xff]
    %v165 = vsel %vm62, %v161, 0
    %v168 = vsel %vm62, %v162, 0
    %170 = vmatprep.subr.mxu0 0.0
    %171 = vmatpush1.msra.mxu0 %v163
    %172 = vmatprep.subr.mxu0 0.0
    %173 = vmatpush1.msra.mxu0 0.0
    %174 = vmatprep.subr.mxu0 0.0
    %175 = vmatpush1.msra.mxu0 0.0
    %176 = vmatprep.subr.mxu0 0.0
    %177 = vmatpush1.msra.mxu0 0.0
    %178 = vmatprep.subr.mxu0 0.0
    %179 = vmatpush1.msra.mxu0 0.0
    %180 = vmatprep.subr.mxu0 0.0
    %181 = vmatpush1.msra.mxu0 0.0
    %182 = vmatprep.subr.mxu0 0.0
    %183 = vmatpush1.msra.mxu0 0.0
    %184 = vmatprep.subr.mxu0 0.0
    %185 = vmatpush1.msra.mxu0 0.0
    %186 = vmatprep.subr.mxu0 0.0
    %187 = vmatpush1.msra.mxu0 0.0
    %188 = vmatprep.subr.mxu0 0.0
    %189 = vmatpush1.msra.mxu0 0.0
    %190 = vmatprep.subr.mxu0 0.0
    %191 = vmatpush1.msra.mxu0 0.0
    %192 = vmatprep.subr.mxu0 0.0
    %193 = vmatpush1.msra.mxu0 0.0
    %194 = vmatprep.subr.mxu0 0.0
    %195 = vmatpush1.msra.mxu0 0.0
    %196 = vmatprep.subr.mxu0 0.0
    %197 = vmatpush1.msra.mxu0 0.0
    %198 = vmatprep.subr.mxu0 0.0
    %199 = vmatpush1.msra.mxu0 0.0
    %200 = vmatprep.subr.mxu0 0.0
    %201 = vmatpush1.msra.mxu0 0.0
    %202 = vmatprep.subr.mxu0 0.0
    %203 = vmatpush1.msra.mxu0 0.0
    %204 = vmatprep.subr.mxu0 0.0
    %205 = vmatpush1.msra.mxu0 0.0
    %206 = vmatprep.subr.mxu0 0.0
    %207 = vmatpush1.msra.mxu0 0.0
    %208 = vmatprep.subr.mxu0 0.0
    %209 = vmatpush1.msra.mxu0 0.0
    %210 = vmatprep.subr.mxu0 0.0
    %211 = vmatpush1.msra.mxu0 0.0
    %212 = vmatprep.subr.mxu0 0.0
    %213 = vmatpush1.msra.mxu0 0.0
    %214 = vmatprep.subr.mxu0 0.0
    %215 = vmatpush1.msra.mxu0 0.0
    %216 = vmatprep.subr.mxu0 0.0
    %217 = vmatpush1.msra.mxu0 0.0
    %218 = vmatprep.subr.mxu0 0.0
    %219 = vmatpush1.msra.mxu0 0.0
    %220 = vmatprep.subr.mxu0 0.0
    %221 = vmatpush1.msra.mxu0 0.0
    %222 = vmatprep.subr.mxu0 0.0
    %223 = vmatpush1.msra.mxu0 0.0
    %224 = vmatprep.subr.mxu0 0.0
    %225 = vmatpush1.msra.mxu0 0.0
    %226 = vmatprep.subr.mxu0 0.0
    %227 = vmatpush1.msra.mxu0 0.0
    %228 = vmatprep.subr.mxu0 0.0
    %229 = vmatpush1.msra.mxu0 0.0
    %230 = vmatprep.subr.mxu0 0.0
    %231 = vmatpush1.msra.mxu0 0.0
    %232 = vmatprep.subr.mxu0 0.0
    %233 = vmatpush1.msra.mxu0 0.0
    %234 = vmatprep.mubr.f32.mxu0 0.0
    %235 = vmatmul.mubr.f32.gmra.mrb[0].mxu0 %v165
    %v236 = vpop.f32.mrb[0].mxu0
    %v237 = vadd.f32 0.0, %v236
    %v238 = vpop.f32.mrb[0].mxu0
    %239 = vmatprep.mubr.f32.mxu0 0.0
    %240 = vmatmul.mubr.f32.gmra.mrb[0].mxu0 %v168
    %v241 = vpop.f32.mrb[0].mxu0
    %v242 = vadd.f32 0.0, %v241
    %v243 = vpop.f32.mrb[0].mxu0
    %244 = vdwg.mxu0
    %s245 = scalar_lea.vmem [#allocation4], 8
    %v246 = vld [vmem:[%s245] sm:$0xff]
    %v247 = vld [vmem:[%s245 + $0x10] sm:$0xff]
    %v248 = vld [vmem:[%s245 + $0x20] sm:$0xff]
    %v249 = vld [vmem:[%s245 + $0x30] sm:$0xff]
    %v250 = vld [vmem:[%s245 + $0x40] sm:$0xff]
    %v251 = vld [vmem:[%s245 + $0x50] sm:$0xff]
    %vm252 = vcmask 130048
    %v254 = vsel %vm252, %v246, 0
    %v257 = vsel %vm252, %v247, 0
    %v260 = vsel %vm252, %v248, 0
    %v263 = vsel %vm252, %v249, 0
    %v266 = vsel %vm252, %v250, 0
    %v269 = vsel %vm252, %v251, 0
    %271 = vmatprep.subr.mxu0 0.0
    %272 = vmatpush1.msra.mxu0 %v237
    %273 = vmatprep.subr.mxu0 0.0
    %274 = vmatpush1.msra.mxu0 %v242
    %275 = vmatprep.subr.mxu0 0.0
    %276 = vmatpush1.msra.mxu0 0.0
    %277 = vmatprep.subr.mxu0 0.0
    %278 = vmatpush1.msra.mxu0 0.0
    %279 = vmatprep.subr.mxu0 0.0
    %280 = vmatpush1.msra.mxu0 0.0
    %281 = vmatprep.subr.mxu0 0.0
    %282 = vmatpush1.msra.mxu0 0.0
    %283 = vmatprep.subr.mxu0 0.0
    %284 = vmatpush1.msra.mxu0 0.0
    %285 = vmatprep.subr.mxu0 0.0
    %286 = vmatpush1.msra.mxu0 0.0
    %287 = vmatprep.subr.mxu0 0.0
    %288 = vmatpush1.msra.mxu0 0.0
    %289 = vmatprep.subr.mxu0 0.0
    %290 = vmatpush1.msra.mxu0 0.0
    %291 = vmatprep.subr.mxu0 0.0
    %292 = vmatpush1.msra.mxu0 0.0
    %293 = vmatprep.subr.mxu0 0.0
    %294 = vmatpush1.msra.mxu0 0.0
    %295 = vmatprep.subr.mxu0 0.0
    %296 = vmatpush1.msra.mxu0 0.0
    %297 = vmatprep.subr.mxu0 0.0
    %298 = vmatpush1.msra.mxu0 0.0
    %299 = vmatprep.subr.mxu0 0.0
    %300 = vmatpush1.msra.mxu0 0.0
    %301 = vmatprep.subr.mxu0 0.0
    %302 = vmatpush1.msra.mxu0 0.0
    %303 = vmatprep.subr.mxu0 0.0
    %304 = vmatpush1.msra.mxu0 0.0
    %305 = vmatprep.subr.mxu0 0.0
    %306 = vmatpush1.msra.mxu0 0.0
    %307 = vmatprep.subr.mxu0 0.0
    %308 = vmatpush1.msra.mxu0 0.0
    %309 = vmatprep.subr.mxu0 0.0
    %310 = vmatpush1.msra.mxu0 0.0
    %311 = vmatprep.subr.mxu0 0.0
    %312 = vmatpush1.msra.mxu0 0.0
    %313 = vmatprep.subr.mxu0 0.0
    %314 = vmatpush1.msra.mxu0 0.0
    %315 = vmatprep.subr.mxu0 0.0
    %316 = vmatpush1.msra.mxu0 0.0
    %317 = vmatprep.subr.mxu0 0.0
    %318 = vmatpush1.msra.mxu0 0.0
    %319 = vmatprep.subr.mxu0 0.0
    %320 = vmatpush1.msra.mxu0 0.0
    %321 = vmatprep.subr.mxu0 0.0
    %322 = vmatpush1.msra.mxu0 0.0
    %323 = vmatprep.subr.mxu0 0.0
    %324 = vmatpush1.msra.mxu0 0.0
    %325 = vmatprep.subr.mxu0 0.0
    %326 = vmatpush1.msra.mxu0 0.0
    %327 = vmatprep.subr.mxu0 0.0
    %328 = vmatpush1.msra.mxu0 0.0
    %329 = vmatprep.subr.mxu0 0.0
    %330 = vmatpush1.msra.mxu0 0.0
    %331 = vmatprep.subr.mxu0 0.0
    %332 = vmatpush1.msra.mxu0 0.0
    %333 = vmatprep.subr.mxu0 0.0
    %334 = vmatpush1.msra.mxu0 0.0
    %335 = vmatprep.mubr.f32.mxu0 0.0
    %336 = vmatmul.mubr.f32.gmra.mrb[0].mxu0 %v254
    %v337 = vpop.f32.mrb[0].mxu0
    %v338 = vadd.f32 0.0, %v337
    %v339 = vpop.f32.mrb[0].mxu0
    %340 = vmatprep.mubr.f32.mxu0 0.0
    %341 = vmatmul.mubr.f32.gmra.mrb[0].mxu0 %v257
    %v342 = vpop.f32.mrb[0].mxu0
    %v343 = vadd.f32 0.0, %v342
    %v344 = vpop.f32.mrb[0].mxu0
    %345 = vmatprep.mubr.f32.mxu0 0.0
    %346 = vmatmul.mubr.f32.gmra.mrb[0].mxu0 %v260
    %v347 = vpop.f32.mrb[0].mxu0
    %v348 = vadd.f32 0.0, %v347
    %v349 = vpop.f32.mrb[0].mxu0
    %350 = vmatprep.mubr.f32.mxu0 0.0
    %351 = vmatmul.mubr.f32.gmra.mrb[0].mxu0 %v263
    %v352 = vpop.f32.mrb[0].mxu0
    %v353 = vadd.f32 0.0, %v352
    %v354 = vpop.f32.mrb[0].mxu0
    %355 = vmatprep.mubr.f32.mxu0 0.0
    %356 = vmatmul.mubr.f32.gmra.mrb[0].mxu0 %v266
    %v357 = vpop.f32.mrb[0].mxu0
    %v358 = vadd.f32 0.0, %v357
    %v359 = vpop.f32.mrb[0].mxu0
    %360 = vmatprep.mubr.f32.mxu0 0.0
    %361 = vmatmul.mubr.f32.gmra.mrb[0].mxu0 %v269
    %v362 = vpop.f32.mrb[0].mxu0
    %v363 = vadd.f32 0.0, %v362
    %v364 = vpop.f32.mrb[0].mxu0
    %365 = vdwg.mxu0
    %v367 = vsel %vm252, %v144, 0
    %v370 = vsel %vm252, %v145, 0
    %v373 = vsel %vm252, %v146, 0
    %v376 = vsel %vm252, %v147, 0
    %v379 = vsel %vm252, %v148, 0
    %v382 = vsel %vm252, %v149, 0
    %384 = vmatprep.subr.mxu0 0.0
    %385 = vmatpush1.msra.mxu0 %v136
    %386 = vmatprep.subr.mxu0 0.0
    %387 = vmatpush1.msra.mxu0 %v141
    %388 = vmatprep.subr.mxu0 0.0
    %389 = vmatpush1.msra.mxu0 0.0
    %390 = vmatprep.subr.mxu0 0.0
    %391 = vmatpush1.msra.mxu0 0.0
    %392 = vmatprep.subr.mxu0 0.0
    %393 = vmatpush1.msra.mxu0 0.0
    %394 = vmatprep.subr.mxu0 0.0
    %395 = vmatpush1.msra.mxu0 0.0
    %396 = vmatprep.subr.mxu0 0.0
    %397 = vmatpush1.msra.mxu0 0.0
    %398 = vmatprep.subr.mxu0 0.0
    %399 = vmatpush1.msra.mxu0 0.0
    %400 = vmatprep.subr.mxu0 0.0
    %401 = vmatpush1.msra.mxu0 0.0
    %402 = vmatprep.subr.mxu0 0.0
    %403 = vmatpush1.msra.mxu0 0.0
    %404 = vmatprep.subr.mxu0 0.0
    %405 = vmatpush1.msra.mxu0 0.0
    %406 = vmatprep.subr.mxu0 0.0
    %407 = vmatpush1.msra.mxu0 0.0
    %408 = vmatprep.subr.mxu0 0.0
    %409 = vmatpush1.msra.mxu0 0.0
    %410 = vmatprep.subr.mxu0 0.0
    %411 = vmatpush1.msra.mxu0 0.0
    %412 = vmatprep.subr.mxu0 0.0
    %413 = vmatpush1.msra.mxu0 0.0
    %414 = vmatprep.subr.mxu0 0.0
    %415 = vmatpush1.msra.mxu0 0.0
    %416 = vmatprep.subr.mxu0 0.0
    %417 = vmatpush1.msra.mxu0 0.0
    %418 = vmatprep.subr.mxu0 0.0
    %419 = vmatpush1.msra.mxu0 0.0
    %420 = vmatprep.subr.mxu0 0.0
    %421 = vmatpush1.msra.mxu0 0.0
    %422 = vmatprep.subr.mxu0 0.0
    %423 = vmatpush1.msra.mxu0 0.0
    %424 = vmatprep.subr.mxu0 0.0
    %425 = vmatpush1.msra.mxu0 0.0
    %426 = vmatprep.subr.mxu0 0.0
    %427 = vmatpush1.msra.mxu0 0.0
    %428 = vmatprep.subr.mxu0 0.0
    %429 = vmatpush1.msra.mxu0 0.0
    %430 = vmatprep.subr.mxu0 0.0
    %431 = vmatpush1.msra.mxu0 0.0
    %432 = vmatprep.subr.mxu0 0.0
    %433 = vmatpush1.msra.mxu0 0.0
    %434 = vmatprep.subr.mxu0 0.0
    %435 = vmatpush1.msra.mxu0 0.0
    %436 = vmatprep.subr.mxu0 0.0
    %437 = vmatpush1.msra.mxu0 0.0
    %438 = vmatprep.subr.mxu0 0.0
    %439 = vmatpush1.msra.mxu0 0.0
    %440 = vmatprep.subr.mxu0 0.0
    %441 = vmatpush1.msra.mxu0 0.0
    %442 = vmatprep.subr.mxu0 0.0
    %443 = vmatpush1.msra.mxu0 0.0
    %444 = vmatprep.subr.mxu0 0.0
    %445 = vmatpush1.msra.mxu0 0.0
    %446 = vmatprep.subr.mxu0 0.0
    %447 = vmatpush1.msra.mxu0 0.0
    %448 = vmatprep.mubr.f32.mxu0 0.0
    %449 = vmatmul.mubr.f32.gmra.mrb[0].mxu0 %v367
    %v450 = vpop.f32.mrb[0].mxu0
    %v451 = vadd.f32 %v338, %v450
    %v452 = vpop.f32.mrb[0].mxu0
    %453 = vmatprep.mubr.f32.mxu0 0.0
    %454 = vmatmul.mubr.f32.gmra.mrb[0].mxu0 %v370
    %v455 = vpop.f32.mrb[0].mxu0
    %v456 = vadd.f32 %v343, %v455
    %v457 = vpop.f32.mrb[0].mxu0
    %458 = vmatprep.mubr.f32.mxu0 0.0
    %459 = vmatmul.mubr.f32.gmra.mrb[0].mxu0 %v373
    %v460 = vpop.f32.mrb[0].mxu0
    %v461 = vadd.f32 %v348, %v460
    %v462 = vpop.f32.mrb[0].mxu0
    %463 = vmatprep.mubr.f32.mxu0 0.0
    %464 = vmatmul.mubr.f32.gmra.mrb[0].mxu0 %v376
    %v465 = vpop.f32.mrb[0].mxu0
    %v466 = vadd.f32 %v353, %v465
    %v467 = vpop.f32.mrb[0].mxu0
    %468 = vmatprep.mubr.f32.mxu0 0.0
    %469 = vmatmul.mubr.f32.gmra.mrb[0].mxu0 %v379
    %v470 = vpop.f32.mrb[0].mxu0
    %v471 = vadd.f32 %v358, %v470
    %v472 = vpop.f32.mrb[0].mxu0
    %473 = vmatprep.mubr.f32.mxu0 0.0
    %474 = vmatmul.mubr.f32.gmra.mrb[0].mxu0 %v382
    %v475 = vpop.f32.mrb[0].mxu0
    %v476 = vadd.f32 %v363, %v475
    %v477 = vpop.f32.mrb[0].mxu0
    %478 = vdwg.mxu0
    %v479 = vld [vmem:[%s5] sm:$0x1]
    %v481 = vlaneseq
    %v482 = vshrl.u32 %v481, 7
    %v483 = vsub.s32 0, %v482
    %v484 = vrot.slane %v479, %v483
    %v486 = vadd.f32 %v451, %v484
    %v487 = vadd.f32 %v456, %v484
    %v488 = vadd.f32 %v461, %v484
    %v489 = vadd.f32 %v466, %v484
    %v490 = vadd.f32 %v471, %v484
    %v491 = vadd.f32 %v476, %v484
    %492 = vst [vmem:[#allocation2] sm:$0xff] %v486
    %493 = vst [vmem:[#allocation2 + $0x8] sm:$0xff] %v487
    %494 = vst [vmem:[#allocation2 + $0x10] sm:$0xff] %v488
    %495 = vst [vmem:[#allocation2 + $0x18] sm:$0xff] %v489
    %496 = vst [vmem:[#allocation2 + $0x20] sm:$0xff] %v490
    %497 = vst [vmem:[#allocation2 + $0x28] sm:$0xff] %v491
    %v498 = vlaneseq
    %v499 = vand.u32 %v498, 127
    %vm500 = vcmp.lt.s32.totalorder %v499, 0
    %v501 = vsub.s32 0, %v499
    %v502 = vsel %vm500, %v501, %v499
    %v503 = vshrl.u32 %v502, 5
    %v504 = vand.u32 %v502, 31
    %v505 = vsub.s32 0, %v504
    %v506 = vsel %vm500, %v505, %v504
    %vm507 = vcmp.ne.s32.totalorder %v506, 0
    %vm508 = vcmp.lt.s32.totalorder %v506, 0
    %vm509 = vmand %vm508, %vm507
    %v510 = vadd.s32 %v506, 32
    %v511 = vsel %vm509, %v510, %v506
    %vm512 = vcmp.lt.s32.totalorder %v511, 16
    %v513 = vld [vmem:[%s4] sm:$0xff]
    %v514 = vld [vmem:[%s4 + $0x8] sm:$0xff]
    %v515 = vld [vmem:[%s4 + $0x10] sm:$0xff]
    %v516 = vld [vmem:[%s4 + $0x18] sm:$0xff]
    %v517 = vld [vmem:[#allocation2] sm:$0x1]
    %v518 = vld [vmem:[#allocation2 + $0x8] sm:$0x1]
    %v519 = vld [vmem:[#allocation2 + $0x10] sm:$0x1]
    %v520 = vld [vmem:[#allocation2 + $0x18] sm:$0x1]
    %v521 = vld [vmem:[#allocation2 + $0x20] sm:$0x1]
    %v522 = vld [vmem:[#allocation2 + $0x28] sm:$0x1]
    %v523 = vld [vmem:[#allocation2 + $0x7] sm:$0x1]
    %v524 = vld [vmem:[#allocation2 + $0xf] sm:$0x1]
    %v525 = vld [vmem:[#allocation2 + $0x17] sm:$0x1]
    %v526 = vld [vmem:[#allocation2 + $0x1f] sm:$0x1]
    %v527 = vld [vmem:[#allocation2 + $0x27] sm:$0x1]
    %v528 = vld [vmem:[#allocation2 + $0x2f] sm:$0x1]
    %v529 = vsel %vm512, 1, 0
    %vm530 = vcmp.eq.s32.totalorder %v529, 1
    %v537 = vrot.slane %v518, 7
    %vm538 = vcmask 1041409
    %v539 = vsel %vm538, %v537, %v517
    %v540 = vrot.slane %v519, 6
    %vm541 = vcmask 1042434
    %v542 = vsel %vm541, %v540, %v539
    %v543 = vrot.slane %v520, 5
    %vm544 = vcmask 1043459
    %v545 = vsel %vm544, %v543, %v542
    %v546 = vrot.slane %v521, 4
    %vm547 = vcmask 1044484
    %v548 = vsel %vm547, %v546, %v545
    %v549 = vrot.slane %v522, 3
    %vm550 = vcmask 1045509
    %v551 = vsel %vm550, %v549, %v548
    %v559 = vrot.slane %v524, 7
    %v560 = vsel %vm538, %v559, %v523
    %v561 = vrot.slane %v525, 6
    %v562 = vsel %vm541, %v561, %v560
    %v563 = vrot.slane %v526, 5
    %v564 = vsel %vm544, %v563, %v562
    %v565 = vrot.slane %v527, 4
    %v566 = vsel %vm547, %v565, %v564
    %v567 = vrot.slane %v528, 3
    %v568 = vsel %vm550, %v567, %v566
    %v570 = vsel %vm530, %v551, %v568
    %vm571 = vcmask 261120
    %v573 = vsel %vm571, 0.0, 0
    %575 = vmatprep.subr.mxu0 0.0
    %576 = vmatpush1.msra.mxu0 %v513
    %577 = vmatprep.subr.mxu0 0.0
    %578 = vmatpush1.msra.mxu0 %v514
    %579 = vmatprep.subr.mxu0 0.0
    %580 = vmatpush1.msra.mxu0 %v515
    %581 = vmatprep.subr.mxu0 0.0
    %582 = vmatpush1.msra.mxu0 %v516
    %583 = vmatprep.subr.mxu0 0.0
    %584 = vmatpush1.msra.mxu0 0.0
    %585 = vmatprep.subr.mxu0 0.0
    %586 = vmatpush1.msra.mxu0 0.0
    %587 = vmatprep.subr.mxu0 0.0
    %588 = vmatpush1.msra.mxu0 0.0
    %589 = vmatprep.subr.mxu0 0.0
    %590 = vmatpush1.msra.mxu0 0.0
    %591 = vmatprep.subr.mxu0 0.0
    %592 = vmatpush1.msra.mxu0 0.0
    %593 = vmatprep.subr.mxu0 0.0
    %594 = vmatpush1.msra.mxu0 0.0
    %595 = vmatprep.subr.mxu0 0.0
    %596 = vmatpush1.msra.mxu0 0.0
    %597 = vmatprep.subr.mxu0 0.0
    %598 = vmatpush1.msra.mxu0 0.0
    %599 = vmatprep.subr.mxu0 0.0
    %600 = vmatpush1.msra.mxu0 0.0
    %601 = vmatprep.subr.mxu0 0.0
    %602 = vmatpush1.msra.mxu0 0.0
    %603 = vmatprep.subr.mxu0 0.0
    %604 = vmatpush1.msra.mxu0 0.0
    %605 = vmatprep.subr.mxu0 0.0
    %606 = vmatpush1.msra.mxu0 0.0
    %607 = vmatprep.subr.mxu0 0.0
    %608 = vmatpush1.msra.mxu0 0.0
    %609 = vmatprep.subr.mxu0 0.0
    %610 = vmatpush1.msra.mxu0 0.0
    %611 = vmatprep.subr.mxu0 0.0
    %612 = vmatpush1.msra.mxu0 0.0
    %613 = vmatprep.subr.mxu0 0.0
    %614 = vmatpush1.msra.mxu0 0.0
    %615 = vmatprep.subr.mxu0 0.0
    %616 = vmatpush1.msra.mxu0 0.0
    %617 = vmatprep.subr.mxu0 0.0
    %618 = vmatpush1.msra.mxu0 0.0
    %619 = vmatprep.subr.mxu0 0.0
    %620 = vmatpush1.msra.mxu0 0.0
    %621 = vmatprep.subr.mxu0 0.0
    %622 = vmatpush1.msra.mxu0 0.0
    %623 = vmatprep.subr.mxu0 0.0
    %624 = vmatpush1.msra.mxu0 0.0
    %625 = vmatprep.subr.mxu0 0.0
    %626 = vmatpush1.msra.mxu0 0.0
    %627 = vmatprep.subr.mxu0 0.0
    %628 = vmatpush1.msra.mxu0 0.0
    %629 = vmatprep.subr.mxu0 0.0
    %630 = vmatpush1.msra.mxu0 0.0
    %631 = vmatprep.subr.mxu0 0.0
    %632 = vmatpush1.msra.mxu0 0.0
    %633 = vmatprep.subr.mxu0 0.0
    %634 = vmatpush1.msra.mxu0 0.0
    %635 = vmatprep.subr.mxu0 0.0
    %636 = vmatpush1.msra.mxu0 0.0
    %637 = vmatprep.subr.mxu0 0.0
    %638 = vmatpush1.msra.mxu0 0.0
    %639 = vmatprep.mubr.f32.mxu0 0.0
    %640 = vmatmul.mubr.f32.gmra.mrb[0].mxu0 %v573
    %v641 = vpop.f32.mrb[0].mxu0
    %v642 = vadd.f32 0.0, %v641
    %v643 = vpop.f32.mrb[0].mxu0
    %644 = vdwg.mxu0
    %v645 = vadd.f32 %v570, %v642
    %v646 = vxor.u32 %v645, 2147483648
    %v647 = vmul.f32 %v646, 1.442695
    %v648 = vpow.pop %v647
    %v649 = vadd.f32 %v648, 1.0
    %v650 = vrcp.pop %v649
    %v651 = vmul.f32 1.0, %v650
    %v652 = vtanh.pop %v645
    %v653 = vmul.f32 %v651, 0.0
    %655 = vrot.lane.b32.xlu0 %v652, 64
    %v656 = vpop.permute.xlu0 %655
    %v658 = vmul.f32 %v651, %v656
    %660 = vrot.lane.b32.xlu0 %v658, 32
    %v661 = vpop.permute.xlu0 %660
    %v663 = vadd.f32 %v653, %v661
    %v664 = vtanh.pop %v663
    %666 = vrot.lane.b32.xlu0 %v664, 64
    %v667 = vpop.permute.xlu0 %666
    %v669 = vmul.f32 %v651, %v667
    %v671 = vcombine.high %v669, %v669
    %v673 = vunpack.c.l.s4 1966171168
    %v674 = vunpack.c.0.s8 %v673
    %v675 = vlaneseq
    %v676 = vshrl.u32 %v675, 7
    %v677 = vsub.s32 %v674, %v676
    %v678 = vrot.slane %v669, %v677
    %v680 = vunpack.c.l.s4 1966171168
    %v681 = vunpack.c.0.s8 %v680
    %v682 = vlaneseq
    %v683 = vshrl.u32 %v682, 7
    %v684 = vsub.s32 %v681, %v683
    %v685 = vrot.slane %v671, %v684
    %v686 = vcombine.high %v678, %v678
    %v687 = vcombine.high %v685, %v685
    %v689 = vunpack.c.l.s4 1966171168
    %v690 = vunpack.c.0.s8 %v689
    %v691 = vlaneseq
    %v692 = vshrl.u32 %v691, 7
    %v693 = vsub.s32 %v690, %v692
    %v694 = vrot.slane %v678, %v693
    %v696 = vunpack.c.l.s4 1966171168
    %v697 = vunpack.c.0.s8 %v696
    %v698 = vlaneseq
    %v699 = vshrl.u32 %v698, 7
    %v700 = vsub.s32 %v697, %v699
    %v701 = vrot.slane %v685, %v700
    %v703 = vunpack.c.l.s4 1966171168
    %v704 = vunpack.c.0.s8 %v703
    %v705 = vlaneseq
    %v706 = vshrl.u32 %v705, 7
    %v707 = vsub.s32 %v704, %v706
    %v708 = vrot.slane %v686, %v707
    %v710 = vunpack.c.l.s4 1966171168
    %v711 = vunpack.c.0.s8 %v710
    %v712 = vlaneseq
    %v713 = vshrl.u32 %v712, 7
    %v714 = vsub.s32 %v711, %v713
    %v715 = vrot.slane %v687, %v714
    %v716 = vcombine.high %v694, %v694
    %v717 = vcombine.high %v708, %v708
    %v718 = vlaneseq
    %v719 = vshrl.u32 %v718, 7
    %v720 = vsub.s32 0, %v719
    %v721 = vrot.slane %v694, %v720
    %v722 = vlaneseq
    %v723 = vshrl.u32 %v722, 7
    %v724 = vsub.s32 0, %v723
    %v725 = vrot.slane %v708, %v724
    %v726 = vlaneseq
    %v727 = vshrl.u32 %v726, 7
    %v728 = vsub.s32 0, %v727
    %v729 = vrot.slane %v716, %v728
    %v730 = vlaneseq
    %v731 = vshrl.u32 %v730, 7
    %v732 = vsub.s32 0, %v731
    %v733 = vrot.slane %v717, %v732
    %v734 = vlaneseq
    %v735 = vshrl.u32 %v734, 7
    %v736 = vsub.s32 0, %v735
    %v737 = vrot.slane %v701, %v736
    %v738 = vlaneseq
    %v739 = vshrl.u32 %v738, 7
    %v740 = vsub.s32 0, %v739
    %v741 = vrot.slane %v715, %v740
    %742 = vrot.lane.b32.xlu0 %v721, 32
    %v743 = vpop.permute.xlu0 %742
    %744 = vrot.lane.b32.xlu0 %v725, 32
    %v745 = vpop.permute.xlu0 %744
    %746 = vrot.lane.b32.xlu0 %v729, 32
    %v747 = vpop.permute.xlu0 %746
    %748 = vrot.lane.b32.xlu0 %v733, 32
    %v749 = vpop.permute.xlu0 %748
    %750 = vrot.lane.b32.xlu0 %v737, 32
    %v751 = vpop.permute.xlu0 %750
    %752 = vrot.lane.b32.xlu0 %v741, 32
    %v753 = vpop.permute.xlu0 %752
    %vm760 = vcmask 122880
    %761 = vst.msk [vmem:[#allocation3] sm:$0x1] %vm760, %v743
    %762 = vst.msk [vmem:[#allocation3 + $0x8] sm:$0x1] %vm760, %v745
    %763 = vst.msk [vmem:[#allocation3 + $0x10] sm:$0x1] %vm760, %v747
    %764 = vst.msk [vmem:[#allocation3 + $0x18] sm:$0x1] %vm760, %v749
    %765 = vst.msk [vmem:[#allocation3 + $0x20] sm:$0x1] %vm760, %v751
    %766 = vst.msk [vmem:[#allocation3 + $0x28] sm:$0x1] %vm760, %v753
    %vm767 = vcmask 254080
    %768 = vst.msk [vmem:[#allocation3 + $0x7] sm:$0x1] %vm767, %v743
    %769 = vst.msk [vmem:[#allocation3 + $0xf] sm:$0x1] %vm767, %v745
    %770 = vst.msk [vmem:[#allocation3 + $0x17] sm:$0x1] %vm767, %v747
    %771 = vst.msk [vmem:[#allocation3 + $0x1f] sm:$0x1] %vm767, %v749
    %772 = vst.msk [vmem:[#allocation3 + $0x27] sm:$0x1] %vm767, %v751
    %773 = vst.msk [vmem:[#allocation3 + $0x2f] sm:$0x1] %vm767, %v753
    %v774 = vld [vmem:[#allocation2 + $0x1] sm:$0x1]
    %v775 = vld [vmem:[#allocation2 + $0x9] sm:$0x1]
    %v776 = vld [vmem:[#allocation2 + $0x11] sm:$0x1]
    %v777 = vld [vmem:[#allocation2 + $0x19] sm:$0x1]
    %v778 = vld [vmem:[#allocation2 + $0x21] sm:$0x1]
    %v779 = vld [vmem:[#allocation2 + $0x29] sm:$0x1]
    %v780 = vld [vmem:[#allocation2 + $0x6] sm:$0x1]
    %v781 = vld [vmem:[#allocation2 + $0xe] sm:$0x1]
    %v782 = vld [vmem:[#allocation2 + $0x16] sm:$0x1]
    %v783 = vld [vmem:[#allocation2 + $0x1e] sm:$0x1]
    %v784 = vld [vmem:[#allocation2 + $0x26] sm:$0x1]
    %v785 = vld [vmem:[#allocation2 + $0x2e] sm:$0x1]
    %v792 = vrot.slane %v775, 7
    %v793 = vsel %vm538, %v792, %v774
    %v794 = vrot.slane %v776, 6
    %v795 = vsel %vm541, %v794, %v793
    %v796 = vrot.slane %v777, 5
    %v797 = vsel %vm544, %v796, %v795
    %v798 = vrot.slane %v778, 4
    %v799 = vsel %vm547, %v798, %v797
    %v800 = vrot.slane %v779, 3
    %v801 = vsel %vm550, %v800, %v799
    %v809 = vrot.slane %v781, 7
    %v810 = vsel %vm538, %v809, %v780
    %v811 = vrot.slane %v782, 6
    %v812 = vsel %vm541, %v811, %v810
    %v813 = vrot.slane %v783, 5
    %v814 = vsel %vm544, %v813, %v812
    %v815 = vrot.slane %v784, 4
    %v816 = vsel %vm547, %v815, %v814
    %v817 = vrot.slane %v785, 3
    %v818 = vsel %vm550, %v817, %v816
    %v820 = vsel %vm530, %v801, %v818
    %821 = vrot.lane.b32.xlu0 %v669, 32
    %v822 = vpop.permute.xlu0 %821
    %v823 = vsel %vm571, %v822, 0
    %825 = vmatprep.subr.mxu0 0.0
    %826 = vmatpush1.msra.mxu0 %v513
    %827 = vmatprep.subr.mxu0 0.0
    %828 = vmatpush1.msra.mxu0 %v514
    %829 = vmatprep.subr.mxu0 0.0
    %830 = vmatpush1.msra.mxu0 %v515
    %831 = vmatprep.subr.mxu0 0.0
    %832 = vmatpush1.msra.mxu0 %v516
    %833 = vmatprep.subr.mxu0 0.0
    %834 = vmatpush1.msra.mxu0 0.0
    %835 = vmatprep.subr.mxu0 0.0
    %836 = vmatpush1.msra.mxu0 0.0
    %837 = vmatprep.subr.mxu0 0.0
    %838 = vmatpush1.msra.mxu0 0.0
    %839 = vmatprep.subr.mxu0 0.0
    %840 = vmatpush1.msra.mxu0 0.0
    %841 = vmatprep.subr.mxu0 0.0
    %842 = vmatpush1.msra.mxu0 0.0
    %843 = vmatprep.subr.mxu0 0.0
    %844 = vmatpush1.msra.mxu0 0.0
    %845 = vmatprep.subr.mxu0 0.0
    %846 = vmatpush1.msra.mxu0 0.0
    %847 = vmatprep.subr.mxu0 0.0
    %848 = vmatpush1.msra.mxu0 0.0
    %849 = vmatprep.subr.mxu0 0.0
    %850 = vmatpush1.msra.mxu0 0.0
    %851 = vmatprep.subr.mxu0 0.0
    %852 = vmatpush1.msra.mxu0 0.0
    %853 = vmatprep.subr.mxu0 0.0
    %854 = vmatpush1.msra.mxu0 0.0
    %855 = vmatprep.subr.mxu0 0.0
    %856 = vmatpush1.msra.mxu0 0.0
    %857 = vmatprep.subr.mxu0 0.0
    %858 = vmatpush1.msra.mxu0 0.0
    %859 = vmatprep.subr.mxu0 0.0
    %860 = vmatpush1.msra.mxu0 0.0
    %861 = vmatprep.subr.mxu0 0.0
    %862 = vmatpush1.msra.mxu0 0.0
    %863 = vmatprep.subr.mxu0 0.0
    %864 = vmatpush1.msra.mxu0 0.0
    %865 = vmatprep.subr.mxu0 0.0
    %866 = vmatpush1.msra.mxu0 0.0
    %867 = vmatprep.subr.mxu0 0.0
    %868 = vmatpush1.msra.mxu0 0.0
    %869 = vmatprep.subr.mxu0 0.0
    %870 = vmatpush1.msra.mxu0 0.0
    %871 = vmatprep.subr.mxu0 0.0
    %872 = vmatpush1.msra.mxu0 0.0
    %873 = vmatprep.subr.mxu0 0.0
    %874 = vmatpush1.msra.mxu0 0.0
    %875 = vmatprep.subr.mxu0 0.0
    %876 = vmatpush1.msra.mxu0 0.0
    %877 = vmatprep.subr.mxu0 0.0
    %878 = vmatpush1.msra.mxu0 0.0
    %879 = vmatprep.subr.mxu0 0.0
    %880 = vmatpush1.msra.mxu0 0.0
    %881 = vmatprep.subr.mxu0 0.0
    %882 = vmatpush1.msra.mxu0 0.0
    %883 = vmatprep.subr.mxu0 0.0
    %884 = vmatpush1.msra.mxu0 0.0
    %885 = vmatprep.subr.mxu0 0.0
    %886 = vmatpush1.msra.mxu0 0.0
    %887 = vmatprep.subr.mxu0 0.0
    %888 = vmatpush1.msra.mxu0 0.0
    %889 = vmatprep.mubr.f32.mxu0 0.0
    %890 = vmatmul.mubr.f32.gmra.mrb[0].mxu0 %v823
    %v891 = vpop.f32.mrb[0].mxu0
    %v892 = vadd.f32 0.0, %v891
    %v893 = vpop.f32.mrb[0].mxu0
    %894 = vdwg.mxu0
    %v895 = vadd.f32 %v820, %v892
    %v896 = vxor.u32 %v895, 2147483648
    %v897 = vmul.f32 %v896, 1.442695
    %v898 = vpow.pop %v897
    %v899 = vadd.f32 %v898, 1.0
    %v900 = vrcp.pop %v899
    %v901 = vmul.f32 1.0, %v900
    %v902 = vtanh.pop %v895
    %v903 = vmul.f32 %v901, %v663
    %905 = vrot.lane.b32.xlu0 %v902, 64
    %v906 = vpop.permute.xlu0 %905
    %v908 = vmul.f32 %v901, %v906
    %910 = vrot.lane.b32.xlu0 %v908, 32
    %v911 = vpop.permute.xlu0 %910
    %v913 = vadd.f32 %v903, %v911
    %v914 = vtanh.pop %v913
    %916 = vrot.lane.b32.xlu0 %v914, 64
    %v917 = vpop.permute.xlu0 %916
    %v919 = vmul.f32 %v901, %v917
    %v921 = vcombine.high %v919, %v919
    %v923 = vunpack.c.l.s4 1966171168
    %v924 = vunpack.c.0.s8 %v923
    %v925 = vlaneseq
    %v926 = vshrl.u32 %v925, 7
    %v927 = vsub.s32 %v924, %v926
    %v928 = vrot.slane %v919, %v927
    %v930 = vunpack.c.l.s4 1966171168
    %v931 = vunpack.c.0.s8 %v930
    %v932 = vlaneseq
    %v933 = vshrl.u32 %v932, 7
    %v934 = vsub.s32 %v931, %v933
    %v935 = vrot.slane %v921, %v934
    %v936 = vcombine.high %v928, %v928
    %v937 = vcombine.high %v935, %v935
    %v939 = vunpack.c.l.s4 1966171168
    %v940 = vunpack.c.0.s8 %v939
    %v941 = vlaneseq
    %v942 = vshrl.u32 %v941, 7
    %v943 = vsub.s32 %v940, %v942
    %v944 = vrot.slane %v928, %v943
    %v946 = vunpack.c.l.s4 1966171168
    %v947 = vunpack.c.0.s8 %v946
    %v948 = vlaneseq
    %v949 = vshrl.u32 %v948, 7
    %v950 = vsub.s32 %v947, %v949
    %v951 = vrot.slane %v935, %v950
    %v953 = vunpack.c.l.s4 1966171168
    %v954 = vunpack.c.0.s8 %v953
    %v955 = vlaneseq
    %v956 = vshrl.u32 %v955, 7
    %v957 = vsub.s32 %v954, %v956
    %v958 = vrot.slane %v936, %v957
    %v960 = vunpack.c.l.s4 1966171168
    %v961 = vunpack.c.0.s8 %v960
    %v962 = vlaneseq
    %v963 = vshrl.u32 %v962, 7
    %v964 = vsub.s32 %v961, %v963
    %v965 = vrot.slane %v937, %v964
    %v966 = vcombine.high %v944, %v944
    %v967 = vcombine.high %v958, %v958
    %v968 = vlaneseq
    %v969 = vshrl.u32 %v968, 7
    %v970 = vsub.s32 0, %v969
    %v971 = vrot.slane %v944, %v970
    %v972 = vlaneseq
    %v973 = vshrl.u32 %v972, 7
    %v974 = vsub.s32 0, %v973
    %v975 = vrot.slane %v958, %v974
    %v976 = vlaneseq
    %v977 = vshrl.u32 %v976, 7
    %v978 = vsub.s32 0, %v977
    %v979 = vrot.slane %v966, %v978
    %v980 = vlaneseq
    %v981 = vshrl.u32 %v980, 7
    %v982 = vsub.s32 0, %v981
    %v983 = vrot.slane %v967, %v982
    %v984 = vlaneseq
    %v985 = vshrl.u32 %v984, 7
    %v986 = vsub.s32 0, %v985
    %v987 = vrot.slane %v951, %v986
    %v988 = vlaneseq
    %v989 = vshrl.u32 %v988, 7
    %v990 = vsub.s32 0, %v989
    %v991 = vrot.slane %v965, %v990
    %992 = vrot.lane.b32.xlu0 %v971, 32
    %v993 = vpop.permute.xlu0 %992
    %994 = vrot.lane.b32.xlu0 %v975, 32
    %v995 = vpop.permute.xlu0 %994
    %996 = vrot.lane.b32.xlu0 %v979, 32
    %v997 = vpop.permute.xlu0 %996
    %998 = vrot.lane.b32.xlu0 %v983, 32
    %v999 = vpop.permute.xlu0 %998
    %1000 = vrot.lane.b32.xlu0 %v987, 32
    %v1001 = vpop.permute.xlu0 %1000
    %1002 = vrot.lane.b32.xlu0 %v991, 32
    %v1003 = vpop.permute.xlu0 %1002
    %1010 = vst.msk [vmem:[#allocation3 + $0x1] sm:$0x1] %vm760, %v993
    %1011 = vst.msk [vmem:[#allocation3 + $0x9] sm:$0x1] %vm760, %v995
    %1012 = vst.msk [vmem:[#allocation3 + $0x11] sm:$0x1] %vm760, %v997
    %1013 = vst.msk [vmem:[#allocation3 + $0x19] sm:$0x1] %vm760, %v999
    %1014 = vst.msk [vmem:[#allocation3 + $0x21] sm:$0x1] %vm760, %v1001
    %1015 = vst.msk [vmem:[#allocation3 + $0x29] sm:$0x1] %vm760, %v1003
    %1016 = vst.msk [vmem:[#allocation3 + $0x6] sm:$0x1] %vm767, %v993
    %1017 = vst.msk [vmem:[#allocation3 + $0xe] sm:$0x1] %vm767, %v995
    %1018 = vst.msk [vmem:[#allocation3 + $0x16] sm:$0x1] %vm767, %v997
    %1019 = vst.msk [vmem:[#allocation3 + $0x1e] sm:$0x1] %vm767, %v999
    %1020 = vst.msk [vmem:[#allocation3 + $0x26] sm:$0x1] %vm767, %v1001
    %1021 = vst.msk [vmem:[#allocation3 + $0x2e] sm:$0x1] %vm767, %v1003
    %v1022 = vld [vmem:[#allocation2 + $0x2] sm:$0x1]
    %v1023 = vld [vmem:[#allocation2 + $0xa] sm:$0x1]
    %v1024 = vld [vmem:[#allocation2 + $0x12] sm:$0x1]
    %v1025 = vld [vmem:[#allocation2 + $0x1a] sm:$0x1]
    %v1026 = vld [vmem:[#allocation2 + $0x22] sm:$0x1]
    %v1027 = vld [vmem:[#allocation2 + $0x2a] sm:$0x1]
    %v1028 = vld [vmem:[#allocation2 + $0x5] sm:$0x1]
    %v1029 = vld [vmem:[#allocation2 + $0xd] sm:$0x1]
    %v1030 = vld [vmem:[#allocation2 + $0x15] sm:$0x1]
    %v1031 = vld [vmem:[#allocation2 + $0x1d] sm:$0x1]
    %v1032 = vld [vmem:[#allocation2 + $0x25] sm:$0x1]
    %v1033 = vld [vmem:[#allocation2 + $0x2d] sm:$0x1]
    %v1040 = vrot.slane %v1023, 7
    %v1041 = vsel %vm538, %v1040, %v1022
    %v1042 = vrot.slane %v1024, 6
    %v1043 = vsel %vm541, %v1042, %v1041
    %v1044 = vrot.slane %v1025, 5
    %v1045 = vsel %vm544, %v1044, %v1043
    %v1046 = vrot.slane %v1026, 4
    %v1047 = vsel %vm547, %v1046, %v1045
    %v1048 = vrot.slane %v1027, 3
    %v1049 = vsel %vm550, %v1048, %v1047
    %v1057 = vrot.slane %v1029, 7
    %v1058 = vsel %vm538, %v1057, %v1028
    %v1059 = vrot.slane %v1030, 6
    %v1060 = vsel %vm541, %v1059, %v1058
    %v1061 = vrot.slane %v1031, 5
    %v1062 = vsel %vm544, %v1061, %v1060
    %v1063 = vrot.slane %v1032, 4
    %v1064 = vsel %vm547, %v1063, %v1062
    %v1065 = vrot.slane %v1033, 3
    %v1066 = vsel %vm550, %v1065, %v1064
    %v1068 = vsel %vm530, %v1049, %v1066
    %1069 = vrot.lane.b32.xlu0 %v919, 32
    %v1070 = vpop.permute.xlu0 %1069
    %v1071 = vsel %vm571, %v1070, 0
    %1073 = vmatprep.subr.mxu0 0.0
    %1074 = vmatpush1.msra.mxu0 %v513
    %1075 = vmatprep.subr.mxu0 0.0
    %1076 = vmatpush1.msra.mxu0 %v514
    %1077 = vmatprep.subr.mxu0 0.0
    %1078 = vmatpush1.msra.mxu0 %v515
    %1079 = vmatprep.subr.mxu0 0.0
    %1080 = vmatpush1.msra.mxu0 %v516
    %1081 = vmatprep.subr.mxu0 0.0
    %1082 = vmatpush1.msra.mxu0 0.0
    %1083 = vmatprep.subr.mxu0 0.0
    %1084 = vmatpush1.msra.mxu0 0.0
    %1085 = vmatprep.subr.mxu0 0.0
    %1086 = vmatpush1.msra.mxu0 0.0
    %1087 = vmatprep.subr.mxu0 0.0
    %1088 = vmatpush1.msra.mxu0 0.0
    %1089 = vmatprep.subr.mxu0 0.0
    %1090 = vmatpush1.msra.mxu0 0.0
    %1091 = vmatprep.subr.mxu0 0.0
    %1092 = vmatpush1.msra.mxu0 0.0
    %1093 = vmatprep.subr.mxu0 0.0
    %1094 = vmatpush1.msra.mxu0 0.0
    %1095 = vmatprep.subr.mxu0 0.0
    %1096 = vmatpush1.msra.mxu0 0.0
    %1097 = vmatprep.subr.mxu0 0.0
    %1098 = vmatpush1.msra.mxu0 0.0
    %1099 = vmatprep.subr.mxu0 0.0
    %1100 = vmatpush1.msra.mxu0 0.0
    %1101 = vmatprep.subr.mxu0 0.0
    %1102 = vmatpush1.msra.mxu0 0.0
    %1103 = vmatprep.subr.mxu0 0.0
    %1104 = vmatpush1.msra.mxu0 0.0
    %1105 = vmatprep.subr.mxu0 0.0
    %1106 = vmatpush1.msra.mxu0 0.0
    %1107 = vmatprep.subr.mxu0 0.0
    %1108 = vmatpush1.msra.mxu0 0.0
    %1109 = vmatprep.subr.mxu0 0.0
    %1110 = vmatpush1.msra.mxu0 0.0
    %1111 = vmatprep.subr.mxu0 0.0
    %1112 = vmatpush1.msra.mxu0 0.0
    %1113 = vmatprep.subr.mxu0 0.0
    %1114 = vmatpush1.msra.mxu0 0.0
    %1115 = vmatprep.subr.mxu0 0.0
    %1116 = vmatpush1.msra.mxu0 0.0
    %1117 = vmatprep.subr.mxu0 0.0
    %1118 = vmatpush1.msra.mxu0 0.0
    %1119 = vmatprep.subr.mxu0 0.0
    %1120 = vmatpush1.msra.mxu0 0.0
    %1121 = vmatprep.subr.mxu0 0.0
    %1122 = vmatpush1.msra.mxu0 0.0
    %1123 = vmatprep.subr.mxu0 0.0
    %1124 = vmatpush1.msra.mxu0 0.0
    %1125 = vmatprep.subr.mxu0 0.0
    %1126 = vmatpush1.msra.mxu0 0.0
    %1127 = vmatprep.subr.mxu0 0.0
    %1128 = vmatpush1.msra.mxu0 0.0
    %1129 = vmatprep.subr.mxu0 0.0
    %1130 = vmatpush1.msra.mxu0 0.0
    %1131 = vmatprep.subr.mxu0 0.0
    %1132 = vmatpush1.msra.mxu0 0.0
    %1133 = vmatprep.subr.mxu0 0.0
    %1134 = vmatpush1.msra.mxu0 0.0
    %1135 = vmatprep.subr.mxu0 0.0
    %1136 = vmatpush1.msra.mxu0 0.0
    %1137 = vmatprep.mubr.f32.mxu0 0.0
    %1138 = vmatmul.mubr.f32.gmra.mrb[0].mxu0 %v1071
    %v1139 = vpop.f32.mrb[0].mxu0
    %v1140 = vadd.f32 0.0, %v1139
    %v1141 = vpop.f32.mrb[0].mxu0
    %1142 = vdwg.mxu0
    %v1143 = vadd.f32 %v1068, %v1140
    %v1144 = vxor.u32 %v1143, 2147483648
    %v1145 = vmul.f32 %v1144, 1.442695
    %v1146 = vpow.pop %v1145
    %v1147 = vadd.f32 %v1146, 1.0
    %v1148 = vrcp.pop %v1147
    %v1149 = vmul.f32 1.0, %v1148
    %v1150 = vtanh.pop %v1143
    %v1151 = vmul.f32 %v1149, %v913
    %1153 = vrot.lane.b32.xlu0 %v1150, 64
    %v1154 = vpop.permute.xlu0 %1153
    %v1156 = vmul.f32 %v1149, %v1154
    %1158 = vrot.lane.b32.xlu0 %v1156, 32
    %v1159 = vpop.permute.xlu0 %1158
    %v1161 = vadd.f32 %v1151, %v1159
    %v1162 = vtanh.pop %v1161
    %1164 = vrot.lane.b32.xlu0 %v1162, 64
    %v1165 = vpop.permute.xlu0 %1164
    %v1167 = vmul.f32 %v1149, %v1165
    %v1169 = vcombine.high %v1167, %v1167
    %v1171 = vunpack.c.l.s4 1966171168
    %v1172 = vunpack.c.0.s8 %v1171
    %v1173 = vlaneseq
    %v1174 = vshrl.u32 %v1173, 7
    %v1175 = vsub.s32 %v1172, %v1174
    %v1176 = vrot.slane %v1167, %v1175
    %v1178 = vunpack.c.l.s4 1966171168
    %v1179 = vunpack.c.0.s8 %v1178
    %v1180 = vlaneseq
    %v1181 = vshrl.u32 %v1180, 7
    %v1182 = vsub.s32 %v1179, %v1181
    %v1183 = vrot.slane %v1169, %v1182
    %v1184 = vcombine.high %v1176, %v1176
    %v1185 = vcombine.high %v1183, %v1183
    %v1187 = vunpack.c.l.s4 1966171168
    %v1188 = vunpack.c.0.s8 %v1187
    %v1189 = vlaneseq
    %v1190 = vshrl.u32 %v1189, 7
    %v1191 = vsub.s32 %v1188, %v1190
    %v1192 = vrot.slane %v1176, %v1191
    %v1194 = vunpack.c.l.s4 1966171168
    %v1195 = vunpack.c.0.s8 %v1194
    %v1196 = vlaneseq
    %v1197 = vshrl.u32 %v1196, 7
    %v1198 = vsub.s32 %v1195, %v1197
    %v1199 = vrot.slane %v1183, %v1198
    %v1201 = vunpack.c.l.s4 1966171168
    %v1202 = vunpack.c.0.s8 %v1201
    %v1203 = vlaneseq
    %v1204 = vshrl.u32 %v1203, 7
    %v1205 = vsub.s32 %v1202, %v1204
    %v1206 = vrot.slane %v1184, %v1205
    %v1208 = vunpack.c.l.s4 1966171168
    %v1209 = vunpack.c.0.s8 %v1208
    %v1210 = vlaneseq
    %v1211 = vshrl.u32 %v1210, 7
    %v1212 = vsub.s32 %v1209, %v1211
    %v1213 = vrot.slane %v1185, %v1212
    %v1214 = vcombine.high %v1192, %v1192
    %v1215 = vcombine.high %v1206, %v1206
    %v1216 = vlaneseq
    %v1217 = vshrl.u32 %v1216, 7
    %v1218 = vsub.s32 0, %v1217
    %v1219 = vrot.slane %v1192, %v1218
    %v1220 = vlaneseq
    %v1221 = vshrl.u32 %v1220, 7
    %v1222 = vsub.s32 0, %v1221
    %v1223 = vrot.slane %v1206, %v1222
    %v1224 = vlaneseq
    %v1225 = vshrl.u32 %v1224, 7
    %v1226 = vsub.s32 0, %v1225
    %v1227 = vrot.slane %v1214, %v1226
    %v1228 = vlaneseq
    %v1229 = vshrl.u32 %v1228, 7
    %v1230 = vsub.s32 0, %v1229
    %v1231 = vrot.slane %v1215, %v1230
    %v1232 = vlaneseq
    %v1233 = vshrl.u32 %v1232, 7
    %v1234 = vsub.s32 0, %v1233
    %v1235 = vrot.slane %v1199, %v1234
    %v1236 = vlaneseq
    %v1237 = vshrl.u32 %v1236, 7
    %v1238 = vsub.s32 0, %v1237
    %v1239 = vrot.slane %v1213, %v1238
    %1240 = vrot.lane.b32.xlu0 %v1219, 32
    %v1241 = vpop.permute.xlu0 %1240
    %1242 = vrot.lane.b32.xlu0 %v1223, 32
    %v1243 = vpop.permute.xlu0 %1242
    %1244 = vrot.lane.b32.xlu0 %v1227, 32
    %v1245 = vpop.permute.xlu0 %1244
    %1246 = vrot.lane.b32.xlu0 %v1231, 32
    %v1247 = vpop.permute.xlu0 %1246
    %1248 = vrot.lane.b32.xlu0 %v1235, 32
    %v1249 = vpop.permute.xlu0 %1248
    %1250 = vrot.lane.b32.xlu0 %v1239, 32
    %v1251 = vpop.permute.xlu0 %1250
    %1258 = vst.msk [vmem:[#allocation3 + $0x2] sm:$0x1] %vm760, %v1241
    %1259 = vst.msk [vmem:[#allocation3 + $0xa] sm:$0x1] %vm760, %v1243
    %1260 = vst.msk [vmem:[#allocation3 + $0x12] sm:$0x1] %vm760, %v1245
    %1261 = vst.msk [vmem:[#allocation3 + $0x1a] sm:$0x1] %vm760, %v1247
    %1262 = vst.msk [vmem:[#allocation3 + $0x22] sm:$0x1] %vm760, %v1249
    %1263 = vst.msk [vmem:[#allocation3 + $0x2a] sm:$0x1] %vm760, %v1251
    %1264 = vst.msk [vmem:[#allocation3 + $0x5] sm:$0x1] %vm767, %v1241
    %1265 = vst.msk [vmem:[#allocation3 + $0xd] sm:$0x1] %vm767, %v1243
    %1266 = vst.msk [vmem:[#allocation3 + $0x15] sm:$0x1] %vm767, %v1245
    %1267 = vst.msk [vmem:[#allocation3 + $0x1d] sm:$0x1] %vm767, %v1247
    %1268 = vst.msk [vmem:[#allocation3 + $0x25] sm:$0x1] %vm767, %v1249
    %1269 = vst.msk [vmem:[#allocation3 + $0x2d] sm:$0x1] %vm767, %v1251
    %v1270 = vld [vmem:[#allocation2 + $0x3] sm:$0x1]
    %v1271 = vld [vmem:[#allocation2 + $0xb] sm:$0x1]
    %v1272 = vld [vmem:[#allocation2 + $0x13] sm:$0x1]
    %v1273 = vld [vmem:[#allocation2 + $0x1b] sm:$0x1]
    %v1274 = vld [vmem:[#allocation2 + $0x23] sm:$0x1]
    %v1275 = vld [vmem:[#allocation2 + $0x2b] sm:$0x1]
    %v1276 = vld [vmem:[#allocation2 + $0x4] sm:$0x1]
    %v1277 = vld [vmem:[#allocation2 + $0xc] sm:$0x1]
    %v1278 = vld [vmem:[#allocation2 + $0x14] sm:$0x1]
    %v1279 = vld [vmem:[#allocation2 + $0x1c] sm:$0x1]
    %v1280 = vld [vmem:[#allocation2 + $0x24] sm:$0x1]
    %v1281 = vld [vmem:[#allocation2 + $0x2c] sm:$0x1]
    %v1288 = vrot.slane %v1271, 7
    %v1289 = vsel %vm538, %v1288, %v1270
    %v1290 = vrot.slane %v1272, 6
    %v1291 = vsel %vm541, %v1290, %v1289
    %v1292 = vrot.slane %v1273, 5
    %v1293 = vsel %vm544, %v1292, %v1291
    %v1294 = vrot.slane %v1274, 4
    %v1295 = vsel %vm547, %v1294, %v1293
    %v1296 = vrot.slane %v1275, 3
    %v1297 = vsel %vm550, %v1296, %v1295
    %v1305 = vrot.slane %v1277, 7
    %v1306 = vsel %vm538, %v1305, %v1276
    %v1307 = vrot.slane %v1278, 6
    %v1308 = vsel %vm541, %v1307, %v1306
    %v1309 = vrot.slane %v1279, 5
    %v1310 = vsel %vm544, %v1309, %v1308
    %v1311 = vrot.slane %v1280, 4
    %v1312 = vsel %vm547, %v1311, %v1310
    %v1313 = vrot.slane %v1281, 3
    %v1314 = vsel %vm550, %v1313, %v1312
    %v1316 = vsel %vm530, %v1297, %v1314
    %1317 = vrot.lane.b32.xlu0 %v1167, 32
    %v1318 = vpop.permute.xlu0 %1317
    %v1319 = vsel %vm571, %v1318, 0
    %1321 = vmatprep.subr.mxu0 0.0
    %1322 = vmatpush1.msra.mxu0 %v513
    %1323 = vmatprep.subr.mxu0 0.0
    %1324 = vmatpush1.msra.mxu0 %v514
    %1325 = vmatprep.subr.mxu0 0.0
    %1326 = vmatpush1.msra.mxu0 %v515
    %1327 = vmatprep.subr.mxu0 0.0
    %1328 = vmatpush1.msra.mxu0 %v516
    %1329 = vmatprep.subr.mxu0 0.0
    %1330 = vmatpush1.msra.mxu0 0.0
    %1331 = vmatprep.subr.mxu0 0.0
    %1332 = vmatpush1.msra.mxu0 0.0
    %1333 = vmatprep.subr.mxu0 0.0
    %1334 = vmatpush1.msra.mxu0 0.0
    %1335 = vmatprep.subr.mxu0 0.0
    %1336 = vmatpush1.msra.mxu0 0.0
    %1337 = vmatprep.subr.mxu0 0.0
    %1338 = vmatpush1.msra.mxu0 0.0
    %1339 = vmatprep.subr.mxu0 0.0
    %1340 = vmatpush1.msra.mxu0 0.0
    %1341 = vmatprep.subr.mxu0 0.0
    %1342 = vmatpush1.msra.mxu0 0.0
    %1343 = vmatprep.subr.mxu0 0.0
    %1344 = vmatpush1.msra.mxu0 0.0
    %1345 = vmatprep.subr.mxu0 0.0
    %1346 = vmatpush1.msra.mxu0 0.0
    %1347 = vmatprep.subr.mxu0 0.0
    %1348 = vmatpush1.msra.mxu0 0.0
    %1349 = vmatprep.subr.mxu0 0.0
    %1350 = vmatpush1.msra.mxu0 0.0
    %1351 = vmatprep.subr.mxu0 0.0
    %1352 = vmatpush1.msra.mxu0 0.0
    %1353 = vmatprep.subr.mxu0 0.0
    %1354 = vmatpush1.msra.mxu0 0.0
    %1355 = vmatprep.subr.mxu0 0.0
    %1356 = vmatpush1.msra.mxu0 0.0
    %1357 = vmatprep.subr.mxu0 0.0
    %1358 = vmatpush1.msra.mxu0 0.0
    %1359 = vmatprep.subr.mxu0 0.0
    %1360 = vmatpush1.msra.mxu0 0.0
    %1361 = vmatprep.subr.mxu0 0.0
    %1362 = vmatpush1.msra.mxu0 0.0
    %1363 = vmatprep.subr.mxu0 0.0
    %1364 = vmatpush1.msra.mxu0 0.0
    %1365 = vmatprep.subr.mxu0 0.0
    %1366 = vmatpush1.msra.mxu0 0.0
    %1367 = vmatprep.subr.mxu0 0.0
    %1368 = vmatpush1.msra.mxu0 0.0
    %1369 = vmatprep.subr.mxu0 0.0
    %1370 = vmatpush1.msra.mxu0 0.0
    %1371 = vmatprep.subr.mxu0 0.0
    %1372 = vmatpush1.msra.mxu0 0.0
    %1373 = vmatprep.subr.mxu0 0.0
    %1374 = vmatpush1.msra.mxu0 0.0
    %1375 = vmatprep.subr.mxu0 0.0
    %1376 = vmatpush1.msra.mxu0 0.0
    %1377 = vmatprep.subr.mxu0 0.0
    %1378 = vmatpush1.msra.mxu0 0.0
    %1379 = vmatprep.subr.mxu0 0.0
    %1380 = vmatpush1.msra.mxu0 0.0
    %1381 = vmatprep.subr.mxu0 0.0
    %1382 = vmatpush1.msra.mxu0 0.0
    %1383 = vmatprep.subr.mxu0 0.0
    %1384 = vmatpush1.msra.mxu0 0.0
    %1385 = vmatprep.mubr.f32.mxu0 0.0
    %1386 = vmatmul.mubr.f32.gmra.mrb[0].mxu0 %v1319
    %v1387 = vpop.f32.mrb[0].mxu0
    %v1388 = vadd.f32 0.0, %v1387
    %v1389 = vpop.f32.mrb[0].mxu0
    %1390 = vdwg.mxu0
    %v1391 = vadd.f32 %v1316, %v1388
    %v1392 = vxor.u32 %v1391, 2147483648
    %v1393 = vmul.f32 %v1392, 1.442695
    %v1394 = vpow.pop %v1393
    %v1395 = vadd.f32 %v1394, 1.0
    %v1396 = vrcp.pop %v1395
    %v1397 = vmul.f32 1.0, %v1396
    %v1398 = vtanh.pop %v1391
    %v1399 = vmul.f32 %v1397, %v1161
    %1401 = vrot.lane.b32.xlu0 %v1398, 64
    %v1402 = vpop.permute.xlu0 %1401
    %v1404 = vmul.f32 %v1397, %v1402
    %1406 = vrot.lane.b32.xlu0 %v1404, 32
    %v1407 = vpop.permute.xlu0 %1406
    %v1409 = vadd.f32 %v1399, %v1407
    %v1410 = vtanh.pop %v1409
    %1412 = vrot.lane.b32.xlu0 %v1410, 64
    %v1413 = vpop.permute.xlu0 %1412
    %v1415 = vmul.f32 %v1397, %v1413
    %v1417 = vcombine.high %v1415, %v1415
    %v1419 = vunpack.c.l.s4 1966171168
    %v1420 = vunpack.c.0.s8 %v1419
    %v1421 = vlaneseq
    %v1422 = vshrl.u32 %v1421, 7
    %v1423 = vsub.s32 %v1420, %v1422
    %v1424 = vrot.slane %v1415, %v1423
    %v1426 = vunpack.c.l.s4 1966171168
    %v1427 = vunpack.c.0.s8 %v1426
    %v1428 = vlaneseq
    %v1429 = vshrl.u32 %v1428, 7
    %v1430 = vsub.s32 %v1427, %v1429
    %v1431 = vrot.slane %v1417, %v1430
    %v1432 = vcombine.high %v1424, %v1424
    %v1433 = vcombine.high %v1431, %v1431
    %v1435 = vunpack.c.l.s4 1966171168
    %v1436 = vunpack.c.0.s8 %v1435
    %v1437 = vlaneseq
    %v1438 = vshrl.u32 %v1437, 7
    %v1439 = vsub.s32 %v1436, %v1438
    %v1440 = vrot.slane %v1424, %v1439
    %v1442 = vunpack.c.l.s4 1966171168
    %v1443 = vunpack.c.0.s8 %v1442
    %v1444 = vlaneseq
    %v1445 = vshrl.u32 %v1444, 7
    %v1446 = vsub.s32 %v1443, %v1445
    %v1447 = vrot.slane %v1431, %v1446
    %v1449 = vunpack.c.l.s4 1966171168
    %v1450 = vunpack.c.0.s8 %v1449
    %v1451 = vlaneseq
    %v1452 = vshrl.u32 %v1451, 7
    %v1453 = vsub.s32 %v1450, %v1452
    %v1454 = vrot.slane %v1432, %v1453
    %v1456 = vunpack.c.l.s4 1966171168
    %v1457 = vunpack.c.0.s8 %v1456
    %v1458 = vlaneseq
    %v1459 = vshrl.u32 %v1458, 7
    %v1460 = vsub.s32 %v1457, %v1459
    %v1461 = vrot.slane %v1433, %v1460
    %v1462 = vcombine.high %v1440, %v1440
    %v1463 = vcombine.high %v1454, %v1454
    %v1464 = vlaneseq
    %v1465 = vshrl.u32 %v1464, 7
    %v1466 = vsub.s32 0, %v1465
    %v1467 = vrot.slane %v1440, %v1466
    %v1468 = vlaneseq
    %v1469 = vshrl.u32 %v1468, 7
    %v1470 = vsub.s32 0, %v1469
    %v1471 = vrot.slane %v1454, %v1470
    %v1472 = vlaneseq
    %v1473 = vshrl.u32 %v1472, 7
    %v1474 = vsub.s32 0, %v1473
    %v1475 = vrot.slane %v1462, %v1474
    %v1476 = vlaneseq
    %v1477 = vshrl.u32 %v1476, 7
    %v1478 = vsub.s32 0, %v1477
    %v1479 = vrot.slane %v1463, %v1478
    %v1480 = vlaneseq
    %v1481 = vshrl.u32 %v1480, 7
    %v1482 = vsub.s32 0, %v1481
    %v1483 = vrot.slane %v1447, %v1482
    %v1484 = vlaneseq
    %v1485 = vshrl.u32 %v1484, 7
    %v1486 = vsub.s32 0, %v1485
    %v1487 = vrot.slane %v1461, %v1486
    %1488 = vrot.lane.b32.xlu0 %v1467, 32
    %v1489 = vpop.permute.xlu0 %1488
    %1490 = vrot.lane.b32.xlu0 %v1471, 32
    %v1491 = vpop.permute.xlu0 %1490
    %1492 = vrot.lane.b32.xlu0 %v1475, 32
    %v1493 = vpop.permute.xlu0 %1492
    %1494 = vrot.lane.b32.xlu0 %v1479, 32
    %v1495 = vpop.permute.xlu0 %1494
    %1496 = vrot.lane.b32.xlu0 %v1483, 32
    %v1497 = vpop.permute.xlu0 %1496
    %1498 = vrot.lane.b32.xlu0 %v1487, 32
    %v1499 = vpop.permute.xlu0 %1498
    %1506 = vst.msk [vmem:[#allocation3 + $0x3] sm:$0x1] %vm760, %v1489
    %1507 = vst.msk [vmem:[#allocation3 + $0xb] sm:$0x1] %vm760, %v1491
    %1508 = vst.msk [vmem:[#allocation3 + $0x13] sm:$0x1] %vm760, %v1493
    %1509 = vst.msk [vmem:[#allocation3 + $0x1b] sm:$0x1] %vm760, %v1495
    %1510 = vst.msk [vmem:[#allocation3 + $0x23] sm:$0x1] %vm760, %v1497
    %1511 = vst.msk [vmem:[#allocation3 + $0x2b] sm:$0x1] %vm760, %v1499
    %1512 = vst.msk [vmem:[#allocation3 + $0x4] sm:$0x1] %vm767, %v1489
    %1513 = vst.msk [vmem:[#allocation3 + $0xc] sm:$0x1] %vm767, %v1491
    %1514 = vst.msk [vmem:[#allocation3 + $0x14] sm:$0x1] %vm767, %v1493
    %1515 = vst.msk [vmem:[#allocation3 + $0x1c] sm:$0x1] %vm767, %v1495
    %1516 = vst.msk [vmem:[#allocation3 + $0x24] sm:$0x1] %vm767, %v1497
    %1517 = vst.msk [vmem:[#allocation3 + $0x2c] sm:$0x1] %vm767, %v1499
    %v1518 = vld [vmem:[#allocation2 + $0x4] sm:$0x1]
    %v1519 = vld [vmem:[#allocation2 + $0xc] sm:$0x1]
    %v1520 = vld [vmem:[#allocation2 + $0x14] sm:$0x1]
    %v1521 = vld [vmem:[#allocation2 + $0x1c] sm:$0x1]
    %v1522 = vld [vmem:[#allocation2 + $0x24] sm:$0x1]
    %v1523 = vld [vmem:[#allocation2 + $0x2c] sm:$0x1]
    %v1524 = vld [vmem:[#allocation2 + $0x3] sm:$0x1]
    %v1525 = vld [vmem:[#allocation2 + $0xb] sm:$0x1]
    %v1526 = vld [vmem:[#allocation2 + $0x13] sm:$0x1]
    %v1527 = vld [vmem:[#allocation2 + $0x1b] sm:$0x1]
    %v1528 = vld [vmem:[#allocation2 + $0x23] sm:$0x1]
    %v1529 = vld [vmem:[#allocation2 + $0x2b] sm:$0x1]
    %v1536 = vrot.slane %v1519, 7
    %v1537 = vsel %vm538, %v1536, %v1518
    %v1538 = vrot.slane %v1520, 6
    %v1539 = vsel %vm541, %v1538, %v1537
    %v1540 = vrot.slane %v1521, 5
    %v1541 = vsel %vm544, %v1540, %v1539
    %v1542 = vrot.slane %v1522, 4
    %v1543 = vsel %vm547, %v1542, %v1541
    %v1544 = vrot.slane %v1523, 3
    %v1545 = vsel %vm550, %v1544, %v1543
    %v1553 = vrot.slane %v1525, 7
    %v1554 = vsel %vm538, %v1553, %v1524
    %v1555 = vrot.slane %v1526, 6
    %v1556 = vsel %vm541, %v1555, %v1554
    %v1557 = vrot.slane %v1527, 5
    %v1558 = vsel %vm544, %v1557, %v1556
    %v1559 = vrot.slane %v1528, 4
    %v1560 = vsel %vm547, %v1559, %v1558
    %v1561 = vrot.slane %v1529, 3
    %v1562 = vsel %vm550, %v1561, %v1560
    %v1564 = vsel %vm530, %v1545, %v1562
    %1565 = vrot.lane.b32.xlu0 %v1415, 32
    %v1566 = vpop.permute.xlu0 %1565
    %v1567 = vsel %vm571, %v1566, 0
    %1569 = vmatprep.subr.mxu0 0.0
    %1570 = vmatpush1.msra.mxu0 %v513
    %1571 = vmatprep.subr.mxu0 0.0
    %1572 = vmatpush1.msra.mxu0 %v514
    %1573 = vmatprep.subr.mxu0 0.0
    %1574 = vmatpush1.msra.mxu0 %v515
    %1575 = vmatprep.subr.mxu0 0.0
    %1576 = vmatpush1.msra.mxu0 %v516
    %1577 = vmatprep.subr.mxu0 0.0
    %1578 = vmatpush1.msra.mxu0 0.0
    %1579 = vmatprep.subr.mxu0 0.0
    %1580 = vmatpush1.msra.mxu0 0.0
    %1581 = vmatprep.subr.mxu0 0.0
    %1582 = vmatpush1.msra.mxu0 0.0
    %1583 = vmatprep.subr.mxu0 0.0
    %1584 = vmatpush1.msra.mxu0 0.0
    %1585 = vmatprep.subr.mxu0 0.0
    %1586 = vmatpush1.msra.mxu0 0.0
    %1587 = vmatprep.subr.mxu0 0.0
    %1588 = vmatpush1.msra.mxu0 0.0
    %1589 = vmatprep.subr.mxu0 0.0
    %1590 = vmatpush1.msra.mxu0 0.0
    %1591 = vmatprep.subr.mxu0 0.0
    %1592 = vmatpush1.msra.mxu0 0.0
    %1593 = vmatprep.subr.mxu0 0.0
    %1594 = vmatpush1.msra.mxu0 0.0
    %1595 = vmatprep.subr.mxu0 0.0
    %1596 = vmatpush1.msra.mxu0 0.0
    %1597 = vmatprep.subr.mxu0 0.0
    %1598 = vmatpush1.msra.mxu0 0.0
    %1599 = vmatprep.subr.mxu0 0.0
    %1600 = vmatpush1.msra.mxu0 0.0
    %1601 = vmatprep.subr.mxu0 0.0
    %1602 = vmatpush1.msra.mxu0 0.0
    %1603 = vmatprep.subr.mxu0 0.0
    %1604 = vmatpush1.msra.mxu0 0.0
    %1605 = vmatprep.subr.mxu0 0.0
    %1606 = vmatpush1.msra.mxu0 0.0
    %1607 = vmatprep.subr.mxu0 0.0
    %1608 = vmatpush1.msra.mxu0 0.0
    %1609 = vmatprep.subr.mxu0 0.0
    %1610 = vmatpush1.msra.mxu0 0.0
    %1611 = vmatprep.subr.mxu0 0.0
    %1612 = vmatpush1.msra.mxu0 0.0
    %1613 = vmatprep.subr.mxu0 0.0
    %1614 = vmatpush1.msra.mxu0 0.0
    %1615 = vmatprep.subr.mxu0 0.0
    %1616 = vmatpush1.msra.mxu0 0.0
    %1617 = vmatprep.subr.mxu0 0.0
    %1618 = vmatpush1.msra.mxu0 0.0
    %1619 = vmatprep.subr.mxu0 0.0
    %1620 = vmatpush1.msra.mxu0 0.0
    %1621 = vmatprep.subr.mxu0 0.0
    %1622 = vmatpush1.msra.mxu0 0.0
    %1623 = vmatprep.subr.mxu0 0.0
    %1624 = vmatpush1.msra.mxu0 0.0
    %1625 = vmatprep.subr.mxu0 0.0
    %1626 = vmatpush1.msra.mxu0 0.0
    %1627 = vmatprep.subr.mxu0 0.0
    %1628 = vmatpush1.msra.mxu0 0.0
    %1629 = vmatprep.subr.mxu0 0.0
    %1630 = vmatpush1.msra.mxu0 0.0
    %1631 = vmatprep.subr.mxu0 0.0
    %1632 = vmatpush1.msra.mxu0 0.0
    %1633 = vmatprep.mubr.f32.mxu0 0.0
    %1634 = vmatmul.mubr.f32.gmra.mrb[0].mxu0 %v1567
    %v1635 = vpop.f32.mrb[0].mxu0
    %v1636 = vadd.f32 0.0, %v1635
    %v1637 = vpop.f32.mrb[0].mxu0
    %1638 = vdwg.mxu0
    %v1639 = vadd.f32 %v1564, %v1636
    %v1640 = vxor.u32 %v1639, 2147483648
    %v1641 = vmul.f32 %v1640, 1.442695
    %v1642 = vpow.pop %v1641
    %v1643 = vadd.f32 %v1642, 1.0
    %v1644 = vrcp.pop %v1643
    %v1645 = vmul.f32 1.0, %v1644
    %v1646 = vtanh.pop %v1639
    %v1647 = vmul.f32 %v1645, %v1409
    %1649 = vrot.lane.b32.xlu0 %v1646, 64
    %v1650 = vpop.permute.xlu0 %1649
    %v1652 = vmul.f32 %v1645, %v1650
    %1654 = vrot.lane.b32.xlu0 %v1652, 32
    %v1655 = vpop.permute.xlu0 %1654
    %v1657 = vadd.f32 %v1647, %v1655
    %v1658 = vtanh.pop %v1657
    %1660 = vrot.lane.b32.xlu0 %v1658, 64
    %v1661 = vpop.permute.xlu0 %1660
    %v1663 = vmul.f32 %v1645, %v1661
    %v1665 = vcombine.high %v1663, %v1663
    %v1667 = vunpack.c.l.s4 1966171168
    %v1668 = vunpack.c.0.s8 %v1667
    %v1669 = vlaneseq
    %v1670 = vshrl.u32 %v1669, 7
    %v1671 = vsub.s32 %v1668, %v1670
    %v1672 = vrot.slane %v1663, %v1671
    %v1674 = vunpack.c.l.s4 1966171168
    %v1675 = vunpack.c.0.s8 %v1674
    %v1676 = vlaneseq
    %v1677 = vshrl.u32 %v1676, 7
    %v1678 = vsub.s32 %v1675, %v1677
    %v1679 = vrot.slane %v1665, %v1678
    %v1680 = vcombine.high %v1672, %v1672
    %v1681 = vcombine.high %v1679, %v1679
    %v1683 = vunpack.c.l.s4 1966171168
    %v1684 = vunpack.c.0.s8 %v1683
    %v1685 = vlaneseq
    %v1686 = vshrl.u32 %v1685, 7
    %v1687 = vsub.s32 %v1684, %v1686
    %v1688 = vrot.slane %v1672, %v1687
    %v1690 = vunpack.c.l.s4 1966171168
    %v1691 = vunpack.c.0.s8 %v1690
    %v1692 = vlaneseq
    %v1693 = vshrl.u32 %v1692, 7
    %v1694 = vsub.s32 %v1691, %v1693
    %v1695 = vrot.slane %v1679, %v1694
    %v1697 = vunpack.c.l.s4 1966171168
    %v1698 = vunpack.c.0.s8 %v1697
    %v1699 = vlaneseq
    %v1700 = vshrl.u32 %v1699, 7
    %v1701 = vsub.s32 %v1698, %v1700
    %v1702 = vrot.slane %v1680, %v1701
    %v1704 = vunpack.c.l.s4 1966171168
    %v1705 = vunpack.c.0.s8 %v1704
    %v1706 = vlaneseq
    %v1707 = vshrl.u32 %v1706, 7
    %v1708 = vsub.s32 %v1705, %v1707
    %v1709 = vrot.slane %v1681, %v1708
    %v1710 = vcombine.high %v1688, %v1688
    %v1711 = vcombine.high %v1702, %v1702
    %v1712 = vlaneseq
    %v1713 = vshrl.u32 %v1712, 7
    %v1714 = vsub.s32 0, %v1713
    %v1715 = vrot.slane %v1688, %v1714
    %v1716 = vlaneseq
    %v1717 = vshrl.u32 %v1716, 7
    %v1718 = vsub.s32 0, %v1717
    %v1719 = vrot.slane %v1702, %v1718
    %v1720 = vlaneseq
    %v1721 = vshrl.u32 %v1720, 7
    %v1722 = vsub.s32 0, %v1721
    %v1723 = vrot.slane %v1710, %v1722
    %v1724 = vlaneseq
    %v1725 = vshrl.u32 %v1724, 7
    %v1726 = vsub.s32 0, %v1725
    %v1727 = vrot.slane %v1711, %v1726
    %v1728 = vlaneseq
    %v1729 = vshrl.u32 %v1728, 7
    %v1730 = vsub.s32 0, %v1729
    %v1731 = vrot.slane %v1695, %v1730
    %v1732 = vlaneseq
    %v1733 = vshrl.u32 %v1732, 7
    %v1734 = vsub.s32 0, %v1733
    %v1735 = vrot.slane %v1709, %v1734
    %1736 = vrot.lane.b32.xlu0 %v1715, 32
    %v1737 = vpop.permute.xlu0 %1736
    %1738 = vrot.lane.b32.xlu0 %v1719, 32
    %v1739 = vpop.permute.xlu0 %1738
    %1740 = vrot.lane.b32.xlu0 %v1723, 32
    %v1741 = vpop.permute.xlu0 %1740
    %1742 = vrot.lane.b32.xlu0 %v1727, 32
    %v1743 = vpop.permute.xlu0 %1742
    %1744 = vrot.lane.b32.xlu0 %v1731, 32
    %v1745 = vpop.permute.xlu0 %1744
    %1746 = vrot.lane.b32.xlu0 %v1735, 32
    %v1747 = vpop.permute.xlu0 %1746
    %1754 = vst.msk [vmem:[#allocation3 + $0x4] sm:$0x1] %vm760, %v1737
    %1755 = vst.msk [vmem:[#allocation3 + $0xc] sm:$0x1] %vm760, %v1739
    %1756 = vst.msk [vmem:[#allocation3 + $0x14] sm:$0x1] %vm760, %v1741
    %1757 = vst.msk [vmem:[#allocation3 + $0x1c] sm:$0x1] %vm760, %v1743
    %1758 = vst.msk [vmem:[#allocation3 + $0x24] sm:$0x1] %vm760, %v1745
    %1759 = vst.msk [vmem:[#allocation3 + $0x2c] sm:$0x1] %vm760, %v1747
    %1760 = vst.msk [vmem:[#allocation3 + $0x3] sm:$0x1] %vm767, %v1737
    %1761 = vst.msk [vmem:[#allocation3 + $0xb] sm:$0x1] %vm767, %v1739
    %1762 = vst.msk [vmem:[#allocation3 + $0x13] sm:$0x1] %vm767, %v1741
    %1763 = vst.msk [vmem:[#allocation3 + $0x1b] sm:$0x1] %vm767, %v1743
    %1764 = vst.msk [vmem:[#allocation3 + $0x23] sm:$0x1] %vm767, %v1745
    %1765 = vst.msk [vmem:[#allocation3 + $0x2b] sm:$0x1] %vm767, %v1747
    %v1766 = vld [vmem:[#allocation2 + $0x5] sm:$0x1]
    %v1767 = vld [vmem:[#allocation2 + $0xd] sm:$0x1]
    %v1768 = vld [vmem:[#allocation2 + $0x15] sm:$0x1]
    %v1769 = vld [vmem:[#allocation2 + $0x1d] sm:$0x1]
    %v1770 = vld [vmem:[#allocation2 + $0x25] sm:$0x1]
    %v1771 = vld [vmem:[#allocation2 + $0x2d] sm:$0x1]
    %v1772 = vld [vmem:[#allocation2 + $0x2] sm:$0x1]
    %v1773 = vld [vmem:[#allocation2 + $0xa] sm:$0x1]
    %v1774 = vld [vmem:[#allocation2 + $0x12] sm:$0x1]
    %v1775 = vld [vmem:[#allocation2 + $0x1a] sm:$0x1]
    %v1776 = vld [vmem:[#allocation2 + $0x22] sm:$0x1]
    %v1777 = vld [vmem:[#allocation2 + $0x2a] sm:$0x1]
    %v1784 = vrot.slane %v1767, 7
    %v1785 = vsel %vm538, %v1784, %v1766
    %v1786 = vrot.slane %v1768, 6
    %v1787 = vsel %vm541, %v1786, %v1785
    %v1788 = vrot.slane %v1769, 5
    %v1789 = vsel %vm544, %v1788, %v1787
    %v1790 = vrot.slane %v1770, 4
    %v1791 = vsel %vm547, %v1790, %v1789
    %v1792 = vrot.slane %v1771, 3
    %v1793 = vsel %vm550, %v1792, %v1791
    %v1801 = vrot.slane %v1773, 7
    %v1802 = vsel %vm538, %v1801, %v1772
    %v1803 = vrot.slane %v1774, 6
    %v1804 = vsel %vm541, %v1803, %v1802
    %v1805 = vrot.slane %v1775, 5
    %v1806 = vsel %vm544, %v1805, %v1804
    %v1807 = vrot.slane %v1776, 4
    %v1808 = vsel %vm547, %v1807, %v1806
    %v1809 = vrot.slane %v1777, 3
    %v1810 = vsel %vm550, %v1809, %v1808
    %v1812 = vsel %vm530, %v1793, %v1810
    %1813 = vrot.lane.b32.xlu0 %v1663, 32
    %v1814 = vpop.permute.xlu0 %1813
    %v1815 = vsel %vm571, %v1814, 0
    %1817 = vmatprep.subr.mxu0 0.0
    %1818 = vmatpush1.msra.mxu0 %v513
    %1819 = vmatprep.subr.mxu0 0.0
    %1820 = vmatpush1.msra.mxu0 %v514
    %1821 = vmatprep.subr.mxu0 0.0
    %1822 = vmatpush1.msra.mxu0 %v515
    %1823 = vmatprep.subr.mxu0 0.0
    %1824 = vmatpush1.msra.mxu0 %v516
    %1825 = vmatprep.subr.mxu0 0.0
    %1826 = vmatpush1.msra.mxu0 0.0
    %1827 = vmatprep.subr.mxu0 0.0
    %1828 = vmatpush1.msra.mxu0 0.0
    %1829 = vmatprep.subr.mxu0 0.0
    %1830 = vmatpush1.msra.mxu0 0.0
    %1831 = vmatprep.subr.mxu0 0.0
    %1832 = vmatpush1.msra.mxu0 0.0
    %1833 = vmatprep.subr.mxu0 0.0
    %1834 = vmatpush1.msra.mxu0 0.0
    %1835 = vmatprep.subr.mxu0 0.0
    %1836 = vmatpush1.msra.mxu0 0.0
    %1837 = vmatprep.subr.mxu0 0.0
    %1838 = vmatpush1.msra.mxu0 0.0
    %1839 = vmatprep.subr.mxu0 0.0
    %1840 = vmatpush1.msra.mxu0 0.0
    %1841 = vmatprep.subr.mxu0 0.0
    %1842 = vmatpush1.msra.mxu0 0.0
    %1843 = vmatprep.subr.mxu0 0.0
    %1844 = vmatpush1.msra.mxu0 0.0
    %1845 = vmatprep.subr.mxu0 0.0
    %1846 = vmatpush1.msra.mxu0 0.0
    %1847 = vmatprep.subr.mxu0 0.0
    %1848 = vmatpush1.msra.mxu0 0.0
    %1849 = vmatprep.subr.mxu0 0.0
    %1850 = vmatpush1.msra.mxu0 0.0
    %1851 = vmatprep.subr.mxu0 0.0
    %1852 = vmatpush1.msra.mxu0 0.0
    %1853 = vmatprep.subr.mxu0 0.0
    %1854 = vmatpush1.msra.mxu0 0.0
    %1855 = vmatprep.subr.mxu0 0.0
    %1856 = vmatpush1.msra.mxu0 0.0
    %1857 = vmatprep.subr.mxu0 0.0
    %1858 = vmatpush1.msra.mxu0 0.0
    %1859 = vmatprep.subr.mxu0 0.0
    %1860 = vmatpush1.msra.mxu0 0.0
    %1861 = vmatprep.subr.mxu0 0.0
    %1862 = vmatpush1.msra.mxu0 0.0
    %1863 = vmatprep.subr.mxu0 0.0
    %1864 = vmatpush1.msra.mxu0 0.0
    %1865 = vmatprep.subr.mxu0 0.0
    %1866 = vmatpush1.msra.mxu0 0.0
    %1867 = vmatprep.subr.mxu0 0.0
    %1868 = vmatpush1.msra.mxu0 0.0
    %1869 = vmatprep.subr.mxu0 0.0
    %1870 = vmatpush1.msra.mxu0 0.0
    %1871 = vmatprep.subr.mxu0 0.0
    %1872 = vmatpush1.msra.mxu0 0.0
    %1873 = vmatprep.subr.mxu0 0.0
    %1874 = vmatpush1.msra.mxu0 0.0
    %1875 = vmatprep.subr.mxu0 0.0
    %1876 = vmatpush1.msra.mxu0 0.0
    %1877 = vmatprep.subr.mxu0 0.0
    %1878 = vmatpush1.msra.mxu0 0.0
    %1879 = vmatprep.subr.mxu0 0.0
    %1880 = vmatpush1.msra.mxu0 0.0
    %1881 = vmatprep.mubr.f32.mxu0 0.0
    %1882 = vmatmul.mubr.f32.gmra.mrb[0].mxu0 %v1815
    %v1883 = vpop.f32.mrb[0].mxu0
    %v1884 = vadd.f32 0.0, %v1883
    %v1885 = vpop.f32.mrb[0].mxu0
    %1886 = vdwg.mxu0
    %v1887 = vadd.f32 %v1812, %v1884
    %v1888 = vxor.u32 %v1887, 2147483648
    %v1889 = vmul.f32 %v1888, 1.442695
    %v1890 = vpow.pop %v1889
    %v1891 = vadd.f32 %v1890, 1.0
    %v1892 = vrcp.pop %v1891
    %v1893 = vmul.f32 1.0, %v1892
    %v1894 = vtanh.pop %v1887
    %v1895 = vmul.f32 %v1893, %v1657
    %1897 = vrot.lane.b32.xlu0 %v1894, 64
    %v1898 = vpop.permute.xlu0 %1897
    %v1900 = vmul.f32 %v1893, %v1898
    %1902 = vrot.lane.b32.xlu0 %v1900, 32
    %v1903 = vpop.permute.xlu0 %1902
    %v1905 = vadd.f32 %v1895, %v1903
    %v1906 = vtanh.pop %v1905
    %1908 = vrot.lane.b32.xlu0 %v1906, 64
    %v1909 = vpop.permute.xlu0 %1908
    %v1911 = vmul.f32 %v1893, %v1909
    %v1913 = vcombine.high %v1911, %v1911
    %v1915 = vunpack.c.l.s4 1966171168
    %v1916 = vunpack.c.0.s8 %v1915
    %v1917 = vlaneseq
    %v1918 = vshrl.u32 %v1917, 7
    %v1919 = vsub.s32 %v1916, %v1918
    %v1920 = vrot.slane %v1911, %v1919
    %v1922 = vunpack.c.l.s4 1966171168
    %v1923 = vunpack.c.0.s8 %v1922
    %v1924 = vlaneseq
    %v1925 = vshrl.u32 %v1924, 7
    %v1926 = vsub.s32 %v1923, %v1925
    %v1927 = vrot.slane %v1913, %v1926
    %v1928 = vcombine.high %v1920, %v1920
    %v1929 = vcombine.high %v1927, %v1927
    %v1931 = vunpack.c.l.s4 1966171168
    %v1932 = vunpack.c.0.s8 %v1931
    %v1933 = vlaneseq
    %v1934 = vshrl.u32 %v1933, 7
    %v1935 = vsub.s32 %v1932, %v1934
    %v1936 = vrot.slane %v1920, %v1935
    %v1938 = vunpack.c.l.s4 1966171168
    %v1939 = vunpack.c.0.s8 %v1938
    %v1940 = vlaneseq
    %v1941 = vshrl.u32 %v1940, 7
    %v1942 = vsub.s32 %v1939, %v1941
    %v1943 = vrot.slane %v1927, %v1942
    %v1945 = vunpack.c.l.s4 1966171168
    %v1946 = vunpack.c.0.s8 %v1945
    %v1947 = vlaneseq
    %v1948 = vshrl.u32 %v1947, 7
    %v1949 = vsub.s32 %v1946, %v1948
    %v1950 = vrot.slane %v1928, %v1949
    %v1952 = vunpack.c.l.s4 1966171168
    %v1953 = vunpack.c.0.s8 %v1952
    %v1954 = vlaneseq
    %v1955 = vshrl.u32 %v1954, 7
    %v1956 = vsub.s32 %v1953, %v1955
    %v1957 = vrot.slane %v1929, %v1956
    %v1958 = vcombine.high %v1936, %v1936
    %v1959 = vcombine.high %v1950, %v1950
    %v1960 = vlaneseq
    %v1961 = vshrl.u32 %v1960, 7
    %v1962 = vsub.s32 0, %v1961
    %v1963 = vrot.slane %v1936, %v1962
    %v1964 = vlaneseq
    %v1965 = vshrl.u32 %v1964, 7
    %v1966 = vsub.s32 0, %v1965
    %v1967 = vrot.slane %v1950, %v1966
    %v1968 = vlaneseq
    %v1969 = vshrl.u32 %v1968, 7
    %v1970 = vsub.s32 0, %v1969
    %v1971 = vrot.slane %v1958, %v1970
    %v1972 = vlaneseq
    %v1973 = vshrl.u32 %v1972, 7
    %v1974 = vsub.s32 0, %v1973
    %v1975 = vrot.slane %v1959, %v1974
    %v1976 = vlaneseq
    %v1977 = vshrl.u32 %v1976, 7
    %v1978 = vsub.s32 0, %v1977
    %v1979 = vrot.slane %v1943, %v1978
    %v1980 = vlaneseq
    %v1981 = vshrl.u32 %v1980, 7
    %v1982 = vsub.s32 0, %v1981
    %v1983 = vrot.slane %v1957, %v1982
    %1984 = vrot.lane.b32.xlu0 %v1963, 32
    %v1985 = vpop.permute.xlu0 %1984
    %1986 = vrot.lane.b32.xlu0 %v1967, 32
    %v1987 = vpop.permute.xlu0 %1986
    %1988 = vrot.lane.b32.xlu0 %v1971, 32
    %v1989 = vpop.permute.xlu0 %1988
    %1990 = vrot.lane.b32.xlu0 %v1975, 32
    %v1991 = vpop.permute.xlu0 %1990
    %1992 = vrot.lane.b32.xlu0 %v1979, 32
    %v1993 = vpop.permute.xlu0 %1992
    %1994 = vrot.lane.b32.xlu0 %v1983, 32
    %v1995 = vpop.permute.xlu0 %1994
    %2002 = vst.msk [vmem:[#allocation3 + $0x5] sm:$0x1] %vm760, %v1985
    %2003 = vst.msk [vmem:[#allocation3 + $0xd] sm:$0x1] %vm760, %v1987
    %2004 = vst.msk [vmem:[#allocation3 + $0x15] sm:$0x1] %vm760, %v1989
    %2005 = vst.msk [vmem:[#allocation3 + $0x1d] sm:$0x1] %vm760, %v1991
    %2006 = vst.msk [vmem:[#allocation3 + $0x25] sm:$0x1] %vm760, %v1993
    %2007 = vst.msk [vmem:[#allocation3 + $0x2d] sm:$0x1] %vm760, %v1995
    %2008 = vst.msk [vmem:[#allocation3 + $0x2] sm:$0x1] %vm767, %v1985
    %2009 = vst.msk [vmem:[#allocation3 + $0xa] sm:$0x1] %vm767, %v1987
    %2010 = vst.msk [vmem:[#allocation3 + $0x12] sm:$0x1] %vm767, %v1989
    %2011 = vst.msk [vmem:[#allocation3 + $0x1a] sm:$0x1] %vm767, %v1991
    %2012 = vst.msk [vmem:[#allocation3 + $0x22] sm:$0x1] %vm767, %v1993
    %2013 = vst.msk [vmem:[#allocation3 + $0x2a] sm:$0x1] %vm767, %v1995
    %v2014 = vld [vmem:[#allocation2 + $0x6] sm:$0x1]
    %v2015 = vld [vmem:[#allocation2 + $0xe] sm:$0x1]
    %v2016 = vld [vmem:[#allocation2 + $0x16] sm:$0x1]
    %v2017 = vld [vmem:[#allocation2 + $0x1e] sm:$0x1]
    %v2018 = vld [vmem:[#allocation2 + $0x26] sm:$0x1]
    %v2019 = vld [vmem:[#allocation2 + $0x2e] sm:$0x1]
    %v2020 = vld [vmem:[#allocation2 + $0x1] sm:$0x1]
    %v2021 = vld [vmem:[#allocation2 + $0x9] sm:$0x1]
    %v2022 = vld [vmem:[#allocation2 + $0x11] sm:$0x1]
    %v2023 = vld [vmem:[#allocation2 + $0x19] sm:$0x1]
    %v2024 = vld [vmem:[#allocation2 + $0x21] sm:$0x1]
    %v2025 = vld [vmem:[#allocation2 + $0x29] sm:$0x1]
    %v2032 = vrot.slane %v2015, 7
    %v2033 = vsel %vm538, %v2032, %v2014
    %v2034 = vrot.slane %v2016, 6
    %v2035 = vsel %vm541, %v2034, %v2033
    %v2036 = vrot.slane %v2017, 5
    %v2037 = vsel %vm544, %v2036, %v2035
    %v2038 = vrot.slane %v2018, 4
    %v2039 = vsel %vm547, %v2038, %v2037
    %v2040 = vrot.slane %v2019, 3
    %v2041 = vsel %vm550, %v2040, %v2039
    %v2049 = vrot.slane %v2021, 7
    %v2050 = vsel %vm538, %v2049, %v2020
    %v2051 = vrot.slane %v2022, 6
    %v2052 = vsel %vm541, %v2051, %v2050
    %v2053 = vrot.slane %v2023, 5
    %v2054 = vsel %vm544, %v2053, %v2052
    %v2055 = vrot.slane %v2024, 4
    %v2056 = vsel %vm547, %v2055, %v2054
    %v2057 = vrot.slane %v2025, 3
    %v2058 = vsel %vm550, %v2057, %v2056
    %v2060 = vsel %vm530, %v2041, %v2058
    %2061 = vrot.lane.b32.xlu0 %v1911, 32
    %v2062 = vpop.permute.xlu0 %2061
    %v2063 = vsel %vm571, %v2062, 0
    %2065 = vmatprep.subr.mxu0 0.0
    %2066 = vmatpush1.msra.mxu0 %v513
    %2067 = vmatprep.subr.mxu0 0.0
    %2068 = vmatpush1.msra.mxu0 %v514
    %2069 = vmatprep.subr.mxu0 0.0
    %2070 = vmatpush1.msra.mxu0 %v515
    %2071 = vmatprep.subr.mxu0 0.0
    %2072 = vmatpush1.msra.mxu0 %v516
    %2073 = vmatprep.subr.mxu0 0.0
    %2074 = vmatpush1.msra.mxu0 0.0
    %2075 = vmatprep.subr.mxu0 0.0
    %2076 = vmatpush1.msra.mxu0 0.0
    %2077 = vmatprep.subr.mxu0 0.0
    %2078 = vmatpush1.msra.mxu0 0.0
    %2079 = vmatprep.subr.mxu0 0.0
    %2080 = vmatpush1.msra.mxu0 0.0
    %2081 = vmatprep.subr.mxu0 0.0
    %2082 = vmatpush1.msra.mxu0 0.0
    %2083 = vmatprep.subr.mxu0 0.0
    %2084 = vmatpush1.msra.mxu0 0.0
    %2085 = vmatprep.subr.mxu0 0.0
    %2086 = vmatpush1.msra.mxu0 0.0
    %2087 = vmatprep.subr.mxu0 0.0
    %2088 = vmatpush1.msra.mxu0 0.0
    %2089 = vmatprep.subr.mxu0 0.0
    %2090 = vmatpush1.msra.mxu0 0.0
    %2091 = vmatprep.subr.mxu0 0.0
    %2092 = vmatpush1.msra.mxu0 0.0
    %2093 = vmatprep.subr.mxu0 0.0
    %2094 = vmatpush1.msra.mxu0 0.0
    %2095 = vmatprep.subr.mxu0 0.0
    %2096 = vmatpush1.msra.mxu0 0.0
    %2097 = vmatprep.subr.mxu0 0.0
    %2098 = vmatpush1.msra.mxu0 0.0
    %2099 = vmatprep.subr.mxu0 0.0
    %2100 = vmatpush1.msra.mxu0 0.0
    %2101 = vmatprep.subr.mxu0 0.0
    %2102 = vmatpush1.msra.mxu0 0.0
    %2103 = vmatprep.subr.mxu0 0.0
    %2104 = vmatpush1.msra.mxu0 0.0
    %2105 = vmatprep.subr.mxu0 0.0
    %2106 = vmatpush1.msra.mxu0 0.0
    %2107 = vmatprep.subr.mxu0 0.0
    %2108 = vmatpush1.msra.mxu0 0.0
    %2109 = vmatprep.subr.mxu0 0.0
    %2110 = vmatpush1.msra.mxu0 0.0
    %2111 = vmatprep.subr.mxu0 0.0
    %2112 = vmatpush1.msra.mxu0 0.0
    %2113 = vmatprep.subr.mxu0 0.0
    %2114 = vmatpush1.msra.mxu0 0.0
    %2115 = vmatprep.subr.mxu0 0.0
    %2116 = vmatpush1.msra.mxu0 0.0
    %2117 = vmatprep.subr.mxu0 0.0
    %2118 = vmatpush1.msra.mxu0 0.0
    %2119 = vmatprep.subr.mxu0 0.0
    %2120 = vmatpush1.msra.mxu0 0.0
    %2121 = vmatprep.subr.mxu0 0.0
    %2122 = vmatpush1.msra.mxu0 0.0
    %2123 = vmatprep.subr.mxu0 0.0
    %2124 = vmatpush1.msra.mxu0 0.0
    %2125 = vmatprep.subr.mxu0 0.0
    %2126 = vmatpush1.msra.mxu0 0.0
    %2127 = vmatprep.subr.mxu0 0.0
    %2128 = vmatpush1.msra.mxu0 0.0
    %2129 = vmatprep.mubr.f32.mxu0 0.0
    %2130 = vmatmul.mubr.f32.gmra.mrb[0].mxu0 %v2063
    %v2131 = vpop.f32.mrb[0].mxu0
    %v2132 = vadd.f32 0.0, %v2131
    %v2133 = vpop.f32.mrb[0].mxu0
    %2134 = vdwg.mxu0
    %v2135 = vadd.f32 %v2060, %v2132
    %v2136 = vxor.u32 %v2135, 2147483648
    %v2137 = vmul.f32 %v2136, 1.442695
    %v2138 = vpow.pop %v2137
    %v2139 = vadd.f32 %v2138, 1.0
    %v2140 = vrcp.pop %v2139
    %v2141 = vmul.f32 1.0, %v2140
    %v2142 = vtanh.pop %v2135
    %v2143 = vmul.f32 %v2141, %v1905
    %2145 = vrot.lane.b32.xlu0 %v2142, 64
    %v2146 = vpop.permute.xlu0 %2145
    %v2148 = vmul.f32 %v2141, %v2146
    %2150 = vrot.lane.b32.xlu0 %v2148, 32
    %v2151 = vpop.permute.xlu0 %2150
    %v2153 = vadd.f32 %v2143, %v2151
    %v2154 = vtanh.pop %v2153
    %2156 = vrot.lane.b32.xlu0 %v2154, 64
    %v2157 = vpop.permute.xlu0 %2156
    %v2159 = vmul.f32 %v2141, %v2157
    %v2161 = vcombine.high %v2159, %v2159
    %v2163 = vunpack.c.l.s4 1966171168
    %v2164 = vunpack.c.0.s8 %v2163
    %v2165 = vlaneseq
    %v2166 = vshrl.u32 %v2165, 7
    %v2167 = vsub.s32 %v2164, %v2166
    %v2168 = vrot.slane %v2159, %v2167
    %v2170 = vunpack.c.l.s4 1966171168
    %v2171 = vunpack.c.0.s8 %v2170
    %v2172 = vlaneseq
    %v2173 = vshrl.u32 %v2172, 7
    %v2174 = vsub.s32 %v2171, %v2173
    %v2175 = vrot.slane %v2161, %v2174
    %v2176 = vcombine.high %v2168, %v2168
    %v2177 = vcombine.high %v2175, %v2175
    %v2179 = vunpack.c.l.s4 1966171168
    %v2180 = vunpack.c.0.s8 %v2179
    %v2181 = vlaneseq
    %v2182 = vshrl.u32 %v2181, 7
    %v2183 = vsub.s32 %v2180, %v2182
    %v2184 = vrot.slane %v2168, %v2183
    %v2186 = vunpack.c.l.s4 1966171168
    %v2187 = vunpack.c.0.s8 %v2186
    %v2188 = vlaneseq
    %v2189 = vshrl.u32 %v2188, 7
    %v2190 = vsub.s32 %v2187, %v2189
    %v2191 = vrot.slane %v2175, %v2190
    %v2193 = vunpack.c.l.s4 1966171168
    %v2194 = vunpack.c.0.s8 %v2193
    %v2195 = vlaneseq
    %v2196 = vshrl.u32 %v2195, 7
    %v2197 = vsub.s32 %v2194, %v2196
    %v2198 = vrot.slane %v2176, %v2197
    %v2200 = vunpack.c.l.s4 1966171168
    %v2201 = vunpack.c.0.s8 %v2200
    %v2202 = vlaneseq
    %v2203 = vshrl.u32 %v2202, 7
    %v2204 = vsub.s32 %v2201, %v2203
    %v2205 = vrot.slane %v2177, %v2204
    %v2206 = vcombine.high %v2184, %v2184
    %v2207 = vcombine.high %v2198, %v2198
    %v2208 = vlaneseq
    %v2209 = vshrl.u32 %v2208, 7
    %v2210 = vsub.s32 0, %v2209
    %v2211 = vrot.slane %v2184, %v2210
    %v2212 = vlaneseq
    %v2213 = vshrl.u32 %v2212, 7
    %v2214 = vsub.s32 0, %v2213
    %v2215 = vrot.slane %v2198, %v2214
    %v2216 = vlaneseq
    %v2217 = vshrl.u32 %v2216, 7
    %v2218 = vsub.s32 0, %v2217
    %v2219 = vrot.slane %v2206, %v2218
    %v2220 = vlaneseq
    %v2221 = vshrl.u32 %v2220, 7
    %v2222 = vsub.s32 0, %v2221
    %v2223 = vrot.slane %v2207, %v2222
    %v2224 = vlaneseq
    %v2225 = vshrl.u32 %v2224, 7
    %v2226 = vsub.s32 0, %v2225
    %v2227 = vrot.slane %v2191, %v2226
    %v2228 = vlaneseq
    %v2229 = vshrl.u32 %v2228, 7
    %v2230 = vsub.s32 0, %v2229
    %v2231 = vrot.slane %v2205, %v2230
    %2232 = vrot.lane.b32.xlu0 %v2211, 32
    %v2233 = vpop.permute.xlu0 %2232
    %2234 = vrot.lane.b32.xlu0 %v2215, 32
    %v2235 = vpop.permute.xlu0 %2234
    %2236 = vrot.lane.b32.xlu0 %v2219, 32
    %v2237 = vpop.permute.xlu0 %2236
    %2238 = vrot.lane.b32.xlu0 %v2223, 32
    %v2239 = vpop.permute.xlu0 %2238
    %2240 = vrot.lane.b32.xlu0 %v2227, 32
    %v2241 = vpop.permute.xlu0 %2240
    %2242 = vrot.lane.b32.xlu0 %v2231, 32
    %v2243 = vpop.permute.xlu0 %2242
    %2250 = vst.msk [vmem:[#allocation3 + $0x6] sm:$0x1] %vm760, %v2233
    %2251 = vst.msk [vmem:[#allocation3 + $0xe] sm:$0x1] %vm760, %v2235
    %2252 = vst.msk [vmem:[#allocation3 + $0x16] sm:$0x1] %vm760, %v2237
    %2253 = vst.msk [vmem:[#allocation3 + $0x1e] sm:$0x1] %vm760, %v2239
    %2254 = vst.msk [vmem:[#allocation3 + $0x26] sm:$0x1] %vm760, %v2241
    %2255 = vst.msk [vmem:[#allocation3 + $0x2e] sm:$0x1] %vm760, %v2243
    %2256 = vst.msk [vmem:[#allocation3 + $0x1] sm:$0x1] %vm767, %v2233
    %2257 = vst.msk [vmem:[#allocation3 + $0x9] sm:$0x1] %vm767, %v2235
    %2258 = vst.msk [vmem:[#allocation3 + $0x11] sm:$0x1] %vm767, %v2237
    %2259 = vst.msk [vmem:[#allocation3 + $0x19] sm:$0x1] %vm767, %v2239
    %2260 = vst.msk [vmem:[#allocation3 + $0x21] sm:$0x1] %vm767, %v2241
    %2261 = vst.msk [vmem:[#allocation3 + $0x29] sm:$0x1] %vm767, %v2243
    %v2262 = vld [vmem:[#allocation2 + $0x7] sm:$0x1]
    %v2263 = vld [vmem:[#allocation2 + $0xf] sm:$0x1]
    %v2264 = vld [vmem:[#allocation2 + $0x17] sm:$0x1]
    %v2265 = vld [vmem:[#allocation2 + $0x1f] sm:$0x1]
    %v2266 = vld [vmem:[#allocation2 + $0x27] sm:$0x1]
    %v2267 = vld [vmem:[#allocation2 + $0x2f] sm:$0x1]
    %v2268 = vld [vmem:[#allocation2] sm:$0x1]
    %v2269 = vld [vmem:[#allocation2 + $0x8] sm:$0x1]
    %v2270 = vld [vmem:[#allocation2 + $0x10] sm:$0x1]
    %v2271 = vld [vmem:[#allocation2 + $0x18] sm:$0x1]
    %v2272 = vld [vmem:[#allocation2 + $0x20] sm:$0x1]
    %v2273 = vld [vmem:[#allocation2 + $0x28] sm:$0x1]
    %v2280 = vrot.slane %v2263, 7
    %v2281 = vsel %vm538, %v2280, %v2262
    %v2282 = vrot.slane %v2264, 6
    %v2283 = vsel %vm541, %v2282, %v2281
    %v2284 = vrot.slane %v2265, 5
    %v2285 = vsel %vm544, %v2284, %v2283
    %v2286 = vrot.slane %v2266, 4
    %v2287 = vsel %vm547, %v2286, %v2285
    %v2288 = vrot.slane %v2267, 3
    %v2289 = vsel %vm550, %v2288, %v2287
    %v2297 = vrot.slane %v2269, 7
    %v2298 = vsel %vm538, %v2297, %v2268
    %v2299 = vrot.slane %v2270, 6
    %v2300 = vsel %vm541, %v2299, %v2298
    %v2301 = vrot.slane %v2271, 5
    %v2302 = vsel %vm544, %v2301, %v2300
    %v2303 = vrot.slane %v2272, 4
    %v2304 = vsel %vm547, %v2303, %v2302
    %v2305 = vrot.slane %v2273, 3
    %v2306 = vsel %vm550, %v2305, %v2304
    %v2308 = vsel %vm530, %v2289, %v2306
    %2309 = vrot.lane.b32.xlu0 %v2159, 32
    %v2310 = vpop.permute.xlu0 %2309
    %v2311 = vsel %vm571, %v2310, 0
    %2313 = vmatprep.subr.mxu0 0.0
    %2314 = vmatpush1.msra.mxu0 %v513
    %2315 = vmatprep.subr.mxu0 0.0
    %2316 = vmatpush1.msra.mxu0 %v514
    %2317 = vmatprep.subr.mxu0 0.0
    %2318 = vmatpush1.msra.mxu0 %v515
    %2319 = vmatprep.subr.mxu0 0.0
    %2320 = vmatpush1.msra.mxu0 %v516
    %2321 = vmatprep.subr.mxu0 0.0
    %2322 = vmatpush1.msra.mxu0 0.0
    %2323 = vmatprep.subr.mxu0 0.0
    %2324 = vmatpush1.msra.mxu0 0.0
    %2325 = vmatprep.subr.mxu0 0.0
    %2326 = vmatpush1.msra.mxu0 0.0
    %2327 = vmatprep.subr.mxu0 0.0
    %2328 = vmatpush1.msra.mxu0 0.0
    %2329 = vmatprep.subr.mxu0 0.0
    %2330 = vmatpush1.msra.mxu0 0.0
    %2331 = vmatprep.subr.mxu0 0.0
    %2332 = vmatpush1.msra.mxu0 0.0
    %2333 = vmatprep.subr.mxu0 0.0
    %2334 = vmatpush1.msra.mxu0 0.0
    %2335 = vmatprep.subr.mxu0 0.0
    %2336 = vmatpush1.msra.mxu0 0.0
    %2337 = vmatprep.subr.mxu0 0.0
    %2338 = vmatpush1.msra.mxu0 0.0
    %2339 = vmatprep.subr.mxu0 0.0
    %2340 = vmatpush1.msra.mxu0 0.0
    %2341 = vmatprep.subr.mxu0 0.0
    %2342 = vmatpush1.msra.mxu0 0.0
    %2343 = vmatprep.subr.mxu0 0.0
    %2344 = vmatpush1.msra.mxu0 0.0
    %2345 = vmatprep.subr.mxu0 0.0
    %2346 = vmatpush1.msra.mxu0 0.0
    %2347 = vmatprep.subr.mxu0 0.0
    %2348 = vmatpush1.msra.mxu0 0.0
    %2349 = vmatprep.subr.mxu0 0.0
    %2350 = vmatpush1.msra.mxu0 0.0
    %2351 = vmatprep.subr.mxu0 0.0
    %2352 = vmatpush1.msra.mxu0 0.0
    %2353 = vmatprep.subr.mxu0 0.0
    %2354 = vmatpush1.msra.mxu0 0.0
    %2355 = vmatprep.subr.mxu0 0.0
    %2356 = vmatpush1.msra.mxu0 0.0
    %2357 = vmatprep.subr.mxu0 0.0
    %2358 = vmatpush1.msra.mxu0 0.0
    %2359 = vmatprep.subr.mxu0 0.0
    %2360 = vmatpush1.msra.mxu0 0.0
    %2361 = vmatprep.subr.mxu0 0.0
    %2362 = vmatpush1.msra.mxu0 0.0
    %2363 = vmatprep.subr.mxu0 0.0
    %2364 = vmatpush1.msra.mxu0 0.0
    %2365 = vmatprep.subr.mxu0 0.0
    %2366 = vmatpush1.msra.mxu0 0.0
    %2367 = vmatprep.subr.mxu0 0.0
    %2368 = vmatpush1.msra.mxu0 0.0
    %2369 = vmatprep.subr.mxu0 0.0
    %2370 = vmatpush1.msra.mxu0 0.0
    %2371 = vmatprep.subr.mxu0 0.0
    %2372 = vmatpush1.msra.mxu0 0.0
    %2373 = vmatprep.subr.mxu0 0.0
    %2374 = vmatpush1.msra.mxu0 0.0
    %2375 = vmatprep.subr.mxu0 0.0
    %2376 = vmatpush1.msra.mxu0 0.0
    %2377 = vmatprep.mubr.f32.mxu0 0.0
    %2378 = vmatmul.mubr.f32.gmra.mrb[0].mxu0 %v2311
    %v2379 = vpop.f32.mrb[0].mxu0
    %v2380 = vadd.f32 0.0, %v2379
    %v2381 = vpop.f32.mrb[0].mxu0
    %2382 = vdwg.mxu0
    %v2383 = vadd.f32 %v2308, %v2380
    %v2384 = vxor.u32 %v2383, 2147483648
    %v2385 = vmul.f32 %v2384, 1.442695
    %v2386 = vpow.pop %v2385
    %v2387 = vadd.f32 %v2386, 1.0
    %v2388 = vrcp.pop %v2387
    %v2389 = vmul.f32 1.0, %v2388
    %v2390 = vtanh.pop %v2383
    %v2391 = vmul.f32 %v2389, %v2153
    %2393 = vrot.lane.b32.xlu0 %v2390, 64
    %v2394 = vpop.permute.xlu0 %2393
    %v2396 = vmul.f32 %v2389, %v2394
    %2398 = vrot.lane.b32.xlu0 %v2396, 32
    %v2399 = vpop.permute.xlu0 %2398
    %v2401 = vadd.f32 %v2391, %v2399
    %v2402 = vtanh.pop %v2401
    %2404 = vrot.lane.b32.xlu0 %v2402, 64
    %v2405 = vpop.permute.xlu0 %2404
    %v2407 = vmul.f32 %v2389, %v2405
    %v2409 = vcombine.high %v2407, %v2407
    %v2411 = vunpack.c.l.s4 1966171168
    %v2412 = vunpack.c.0.s8 %v2411
    %v2413 = vlaneseq
    %v2414 = vshrl.u32 %v2413, 7
    %v2415 = vsub.s32 %v2412, %v2414
    %v2416 = vrot.slane %v2407, %v2415
    %v2418 = vunpack.c.l.s4 1966171168
    %v2419 = vunpack.c.0.s8 %v2418
    %v2420 = vlaneseq
    %v2421 = vshrl.u32 %v2420, 7
    %v2422 = vsub.s32 %v2419, %v2421
    %v2423 = vrot.slane %v2409, %v2422
    %v2424 = vcombine.high %v2416, %v2416
    %v2425 = vcombine.high %v2423, %v2423
    %v2427 = vunpack.c.l.s4 1966171168
    %v2428 = vunpack.c.0.s8 %v2427
    %v2429 = vlaneseq
    %v2430 = vshrl.u32 %v2429, 7
    %v2431 = vsub.s32 %v2428, %v2430
    %v2432 = vrot.slane %v2416, %v2431
    %v2434 = vunpack.c.l.s4 1966171168
    %v2435 = vunpack.c.0.s8 %v2434
    %v2436 = vlaneseq
    %v2437 = vshrl.u32 %v2436, 7
    %v2438 = vsub.s32 %v2435, %v2437
    %v2439 = vrot.slane %v2423, %v2438
    %v2441 = vunpack.c.l.s4 1966171168
    %v2442 = vunpack.c.0.s8 %v2441
    %v2443 = vlaneseq
    %v2444 = vshrl.u32 %v2443, 7
    %v2445 = vsub.s32 %v2442, %v2444
    %v2446 = vrot.slane %v2424, %v2445
    %v2448 = vunpack.c.l.s4 1966171168
    %v2449 = vunpack.c.0.s8 %v2448
    %v2450 = vlaneseq
    %v2451 = vshrl.u32 %v2450, 7
    %v2452 = vsub.s32 %v2449, %v2451
    %v2453 = vrot.slane %v2425, %v2452
    %v2454 = vcombine.high %v2432, %v2432
    %v2455 = vcombine.high %v2446, %v2446
    %v2456 = vlaneseq
    %v2457 = vshrl.u32 %v2456, 7
    %v2458 = vsub.s32 0, %v2457
    %v2459 = vrot.slane %v2432, %v2458
    %v2460 = vlaneseq
    %v2461 = vshrl.u32 %v2460, 7
    %v2462 = vsub.s32 0, %v2461
    %v2463 = vrot.slane %v2446, %v2462
    %v2464 = vlaneseq
    %v2465 = vshrl.u32 %v2464, 7
    %v2466 = vsub.s32 0, %v2465
    %v2467 = vrot.slane %v2454, %v2466
    %v2468 = vlaneseq
    %v2469 = vshrl.u32 %v2468, 7
    %v2470 = vsub.s32 0, %v2469
    %v2471 = vrot.slane %v2455, %v2470
    %v2472 = vlaneseq
    %v2473 = vshrl.u32 %v2472, 7
    %v2474 = vsub.s32 0, %v2473
    %v2475 = vrot.slane %v2439, %v2474
    %v2476 = vlaneseq
    %v2477 = vshrl.u32 %v2476, 7
    %v2478 = vsub.s32 0, %v2477
    %v2479 = vrot.slane %v2453, %v2478
    %2480 = vrot.lane.b32.xlu0 %v2459, 32
    %v2481 = vpop.permute.xlu0 %2480
    %2482 = vrot.lane.b32.xlu0 %v2463, 32
    %v2483 = vpop.permute.xlu0 %2482
    %2484 = vrot.lane.b32.xlu0 %v2467, 32
    %v2485 = vpop.permute.xlu0 %2484
    %2486 = vrot.lane.b32.xlu0 %v2471, 32
    %v2487 = vpop.permute.xlu0 %2486
    %2488 = vrot.lane.b32.xlu0 %v2475, 32
    %v2489 = vpop.permute.xlu0 %2488
    %2490 = vrot.lane.b32.xlu0 %v2479, 32
    %v2491 = vpop.permute.xlu0 %2490
    %2498 = vst.msk [vmem:[#allocation3 + $0x7] sm:$0x1] %vm760, %v2481
    %2499 = vst.msk [vmem:[#allocation3 + $0xf] sm:$0x1] %vm760, %v2483
    %2500 = vst.msk [vmem:[#allocation3 + $0x17] sm:$0x1] %vm760, %v2485
    %2501 = vst.msk [vmem:[#allocation3 + $0x1f] sm:$0x1] %vm760, %v2487
    %2502 = vst.msk [vmem:[#allocation3 + $0x27] sm:$0x1] %vm760, %v2489
    %2503 = vst.msk [vmem:[#allocation3 + $0x2f] sm:$0x1] %vm760, %v2491
    %2504 = vst.msk [vmem:[#allocation3] sm:$0x1] %vm767, %v2481
    %2505 = vst.msk [vmem:[#allocation3 + $0x8] sm:$0x1] %vm767, %v2483
    %2506 = vst.msk [vmem:[#allocation3 + $0x10] sm:$0x1] %vm767, %v2485
    %2507 = vst.msk [vmem:[#allocation3 + $0x18] sm:$0x1] %vm767, %v2487
    %2508 = vst.msk [vmem:[#allocation3 + $0x20] sm:$0x1] %vm767, %v2489
    %2509 = vst.msk [vmem:[#allocation3 + $0x28] sm:$0x1] %vm767, %v2491
    %v2510 = vld [vmem:[#allocation3] sm:$0xff]
    %v2511 = vld [vmem:[#allocation3 + $0x8] sm:$0xff]
    %v2512 = vld [vmem:[#allocation3 + $0x10] sm:$0xff]
    %v2513 = vld [vmem:[#allocation3 + $0x18] sm:$0xff]
    %v2514 = vld [vmem:[#allocation3 + $0x20] sm:$0xff]
    %v2515 = vld [vmem:[#allocation3 + $0x28] sm:$0xff]
    %v2516 = vld [vmem:[%s6] sm:$0xff]
    %v2517 = vld [vmem:[%s6 + $0x8] sm:$0xff]
    %v2518 = vld [vmem:[%s6 + $0x10] sm:$0xff]
    %v2519 = vld [vmem:[%s6 + $0x18] sm:$0xff]
    %v2520 = vld [vmem:[%s7] sm:$0x1]
    %v2522 = vlaneseq
    %v2523 = vshrl.u32 %v2522, 7
    %v2524 = vsub.s32 0, %v2523
    %v2525 = vrot.slane %v2520, %v2524
    %v2528 = vsel %vm571, %v2510, 0
    %v2531 = vsel %vm571, %v2511, 0
    %v2534 = vsel %vm571, %v2512, 0
    %v2537 = vsel %vm571, %v2513, 0
    %v2540 = vsel %vm571, %v2514, 0
    %v2543 = vsel %vm571, %v2515, 0
    %2545 = vmatprep.subr.mxu0 0.0
    %2546 = vmatpush1.msra.mxu0 %v2516
    %2547 = vmatprep.subr.mxu0 0.0
    %2548 = vmatpush1.msra.mxu0 %v2517
    %2549 = vmatprep.subr.mxu0 0.0
    %2550 = vmatpush1.msra.mxu0 %v2518
    %2551 = vmatprep.subr.mxu0 0.0
    %2552 = vmatpush1.msra.mxu0 %v2519
    %2553 = vmatprep.subr.mxu0 0.0
    %2554 = vmatpush1.msra.mxu0 0.0
    %2555 = vmatprep.subr.mxu0 0.0
    %2556 = vmatpush1.msra.mxu0 0.0
    %2557 = vmatprep.subr.mxu0 0.0
    %2558 = vmatpush1.msra.mxu0 0.0
    %2559 = vmatprep.subr.mxu0 0.0
    %2560 = vmatpush1.msra.mxu0 0.0
    %2561 = vmatprep.subr.mxu0 0.0
    %2562 = vmatpush1.msra.mxu0 0.0
    %2563 = vmatprep.subr.mxu0 0.0
    %2564 = vmatpush1.msra.mxu0 0.0
    %2565 = vmatprep.subr.mxu0 0.0
    %2566 = vmatpush1.msra.mxu0 0.0
    %2567 = vmatprep.subr.mxu0 0.0
    %2568 = vmatpush1.msra.mxu0 0.0
    %2569 = vmatprep.subr.mxu0 0.0
    %2570 = vmatpush1.msra.mxu0 0.0
    %2571 = vmatprep.subr.mxu0 0.0
    %2572 = vmatpush1.msra.mxu0 0.0
    %2573 = vmatprep.subr.mxu0 0.0
    %2574 = vmatpush1.msra.mxu0 0.0
    %2575 = vmatprep.subr.mxu0 0.0
    %2576 = vmatpush1.msra.mxu0 0.0
    %2577 = vmatprep.subr.mxu0 0.0
    %2578 = vmatpush1.msra.mxu0 0.0
    %2579 = vmatprep.subr.mxu0 0.0
    %2580 = vmatpush1.msra.mxu0 0.0
    %2581 = vmatprep.subr.mxu0 0.0
    %2582 = vmatpush1.msra.mxu0 0.0
    %2583 = vmatprep.subr.mxu0 0.0
    %2584 = vmatpush1.msra.mxu0 0.0
    %2585 = vmatprep.subr.mxu0 0.0
    %2586 = vmatpush1.msra.mxu0 0.0
    %2587 = vmatprep.subr.mxu0 0.0
    %2588 = vmatpush1.msra.mxu0 0.0
    %2589 = vmatprep.subr.mxu0 0.0
    %2590 = vmatpush1.msra.mxu0 0.0
    %2591 = vmatprep.subr.mxu0 0.0
    %2592 = vmatpush1.msra.mxu0 0.0
    %2593 = vmatprep.subr.mxu0 0.0
    %2594 = vmatpush1.msra.mxu0 0.0
    %2595 = vmatprep.subr.mxu0 0.0
    %2596 = vmatpush1.msra.mxu0 0.0
    %2597 = vmatprep.subr.mxu0 0.0
    %2598 = vmatpush1.msra.mxu0 0.0
    %2599 = vmatprep.subr.mxu0 0.0
    %2600 = vmatpush1.msra.mxu0 0.0
    %2601 = vmatprep.subr.mxu0 0.0
    %2602 = vmatpush1.msra.mxu0 0.0
    %2603 = vmatprep.subr.mxu0 0.0
    %2604 = vmatpush1.msra.mxu0 0.0
    %2605 = vmatprep.subr.mxu0 0.0
    %2606 = vmatpush1.msra.mxu0 0.0
    %2607 = vmatprep.subr.mxu0 0.0
    %2608 = vmatpush1.msra.mxu0 0.0
    %2609 = vmatprep.mubr.f32.mxu0 0.0
    %2610 = vmatmul.mubr.f32.gmra.mrb[0].mxu0 %v2528
    %v2611 = vpop.f32.mrb[0].mxu0
    %v2612 = vadd.f32 %v2525, %v2611
    %v2613 = vpop.f32.mrb[0].mxu0
    %2614 = vmatprep.mubr.f32.mxu0 0.0
    %2615 = vmatmul.mubr.f32.gmra.mrb[0].mxu0 %v2531
    %v2616 = vpop.f32.mrb[0].mxu0
    %v2617 = vadd.f32 %v2525, %v2616
    %v2618 = vpop.f32.mrb[0].mxu0
    %2619 = vmatprep.mubr.f32.mxu0 0.0
    %2620 = vmatmul.mubr.f32.gmra.mrb[0].mxu0 %v2534
    %v2621 = vpop.f32.mrb[0].mxu0
    %v2622 = vadd.f32 %v2525, %v2621
    %v2623 = vpop.f32.mrb[0].mxu0
    %2624 = vmatprep.mubr.f32.mxu0 0.0
    %2625 = vmatmul.mubr.f32.gmra.mrb[0].mxu0 %v2537
    %v2626 = vpop.f32.mrb[0].mxu0
    %v2627 = vadd.f32 %v2525, %v2626
    %v2628 = vpop.f32.mrb[0].mxu0
    %2629 = vmatprep.mubr.f32.mxu0 0.0
    %2630 = vmatmul.mubr.f32.gmra.mrb[0].mxu0 %v2540
    %v2631 = vpop.f32.mrb[0].mxu0
    %v2632 = vadd.f32 %v2525, %v2631
    %v2633 = vpop.f32.mrb[0].mxu0
    %2634 = vmatprep.mubr.f32.mxu0 0.0
    %2635 = vmatmul.mubr.f32.gmra.mrb[0].mxu0 %v2543
    %v2636 = vpop.f32.mrb[0].mxu0
    %v2637 = vadd.f32 %v2525, %v2636
    %v2638 = vpop.f32.mrb[0].mxu0
    %2639 = vdwg.mxu0
    %v2640 = vtanh.pop %v2612
    %v2641 = vtanh.pop %v2617
    %v2642 = vtanh.pop %v2622
    %v2643 = vtanh.pop %v2627
    %v2644 = vtanh.pop %v2632
    %v2645 = vtanh.pop %v2637
    %v2646 = vld [vmem:[%s8] sm:$0x1]
    %v2648 = vlaneseq
    %v2649 = vshrl.u32 %v2648, 7
    %v2650 = vsub.s32 0, %v2649
    %v2651 = vrot.slane %v2646, %v2650
    %v2653 = vmul.f32 %v2640, %v2651
    %v2654 = vmul.f32 %v2641, %v2651
    %v2655 = vmul.f32 %v2642, %v2651
    %v2656 = vmul.f32 %v2643, %v2651
    %v2657 = vmul.f32 %v2644, %v2651
    %v2658 = vmul.f32 %v2645, %v2651
    %v2659 = vsel %vm62, %v2653, 0.0
    %2660 = vadd.xlane.f32.xlu0 %v2659
    %v2661 = vpop.xlane.xlu0 %2660
    %v2662 = vsel %vm62, %v2654, 0.0
    %2663 = vadd.xlane.f32.xlu0 %v2662
    %v2664 = vpop.xlane.xlu0 %2663
    %v2665 = vsel %vm62, %v2655, 0.0
    %2666 = vadd.xlane.f32.xlu0 %v2665
    %v2667 = vpop.xlane.xlu0 %2666
    %v2668 = vsel %vm62, %v2656, 0.0
    %2669 = vadd.xlane.f32.xlu0 %v2668
    %v2670 = vpop.xlane.xlu0 %2669
    %v2671 = vsel %vm62, %v2657, 0.0
    %2672 = vadd.xlane.f32.xlu0 %v2671
    %v2673 = vpop.xlane.xlu0 %2672
    %v2674 = vsel %vm62, %v2658, 0.0
    %2675 = vadd.xlane.f32.xlu0 %v2674
    %v2676 = vpop.xlane.xlu0 %2675
    %v2677 = vrot.slane %v2661, 4
    %v2678 = vmax.f32 %v2661, %v2677
    %v2679 = vrot.slane %v2678, 2
    %v2680 = vmax.f32 %v2678, %v2679
    %v2681 = vrot.slane %v2680, 1
    %v2682 = vmax.f32 %v2680, %v2681
    %v2683 = vrot.slane %v2664, 4
    %v2684 = vmax.f32 %v2664, %v2683
    %v2685 = vrot.slane %v2684, 2
    %v2686 = vmax.f32 %v2684, %v2685
    %v2687 = vrot.slane %v2686, 1
    %v2688 = vmax.f32 %v2686, %v2687
    %v2689 = vrot.slane %v2667, 4
    %v2690 = vmax.f32 %v2667, %v2689
    %v2691 = vrot.slane %v2690, 2
    %v2692 = vmax.f32 %v2690, %v2691
    %v2693 = vrot.slane %v2692, 1
    %v2694 = vmax.f32 %v2692, %v2693
    %v2695 = vrot.slane %v2670, 4
    %v2696 = vmax.f32 %v2670, %v2695
    %v2697 = vrot.slane %v2696, 2
    %v2698 = vmax.f32 %v2696, %v2697
    %v2699 = vrot.slane %v2698, 1
    %v2700 = vmax.f32 %v2698, %v2699
    %v2701 = vrot.slane %v2673, 4
    %v2702 = vmax.f32 %v2673, %v2701
    %v2703 = vrot.slane %v2702, 2
    %v2704 = vmax.f32 %v2702, %v2703
    %v2705 = vrot.slane %v2704, 1
    %v2706 = vmax.f32 %v2704, %v2705
    %v2707 = vrot.slane %v2676, 4
    %v2708 = vmax.f32 %v2676, %v2707
    %v2709 = vrot.slane %v2708, 2
    %v2710 = vmax.f32 %v2708, %v2709
    %v2711 = vrot.slane %v2710, 1
    %v2712 = vmax.f32 %v2710, %v2711
    %v2713 = vsub.f32 %v2661, %v2682
    %v2714 = vsub.f32 %v2664, %v2688
    %v2715 = vsub.f32 %v2667, %v2694
    %v2716 = vsub.f32 %v2670, %v2700
    %v2717 = vsub.f32 %v2673, %v2706
    %v2718 = vsub.f32 %v2676, %v2712
    %v2719 = vmul.f32 %v2713, 1.442695
    %v2720 = vpow.pop %v2719
    %v2721 = vmul.f32 %v2714, 1.442695
    %v2722 = vpow.pop %v2721
    %v2723 = vmul.f32 %v2715, 1.442695
    %v2724 = vpow.pop %v2723
    %v2725 = vmul.f32 %v2716, 1.442695
    %v2726 = vpow.pop %v2725
    %v2727 = vmul.f32 %v2717, 1.442695
    %v2728 = vpow.pop %v2727
    %v2729 = vmul.f32 %v2718, 1.442695
    %v2730 = vpow.pop %v2729
    %v2731 = vrot.slane %v2720, 4
    %v2732 = vadd.f32 %v2720, %v2731
    %v2733 = vrot.slane %v2732, 2
    %v2734 = vadd.f32 %v2732, %v2733
    %v2735 = vrot.slane %v2734, 1
    %v2736 = vadd.f32 %v2734, %v2735
    %v2737 = vrot.slane %v2722, 4
    %v2738 = vadd.f32 %v2722, %v2737
    %v2739 = vrot.slane %v2738, 2
    %v2740 = vadd.f32 %v2738, %v2739
    %v2741 = vrot.slane %v2740, 1
    %v2742 = vadd.f32 %v2740, %v2741
    %v2743 = vrot.slane %v2724, 4
    %v2744 = vadd.f32 %v2724, %v2743
    %v2745 = vrot.slane %v2744, 2
    %v2746 = vadd.f32 %v2744, %v2745
    %v2747 = vrot.slane %v2746, 1
    %v2748 = vadd.f32 %v2746, %v2747
    %v2749 = vrot.slane %v2726, 4
    %v2750 = vadd.f32 %v2726, %v2749
    %v2751 = vrot.slane %v2750, 2
    %v2752 = vadd.f32 %v2750, %v2751
    %v2753 = vrot.slane %v2752, 1
    %v2754 = vadd.f32 %v2752, %v2753
    %v2755 = vrot.slane %v2728, 4
    %v2756 = vadd.f32 %v2728, %v2755
    %v2757 = vrot.slane %v2756, 2
    %v2758 = vadd.f32 %v2756, %v2757
    %v2759 = vrot.slane %v2758, 1
    %v2760 = vadd.f32 %v2758, %v2759
    %v2761 = vrot.slane %v2730, 4
    %v2762 = vadd.f32 %v2730, %v2761
    %v2763 = vrot.slane %v2762, 2
    %v2764 = vadd.f32 %v2762, %v2763
    %v2765 = vrot.slane %v2764, 1
    %v2766 = vadd.f32 %v2764, %v2765
    %v2767 = vrcp.pop %v2736
    %v2768 = vrcp.pop %v2742
    %v2769 = vrcp.pop %v2748
    %v2770 = vrcp.pop %v2754
    %v2771 = vrcp.pop %v2760
    %v2772 = vrcp.pop %v2766
    %v2773 = vmul.f32 %v2720, %v2767
    %v2774 = vmul.f32 %v2722, %v2768
    %v2775 = vmul.f32 %v2724, %v2769
    %v2776 = vmul.f32 %v2726, %v2770
    %v2777 = vmul.f32 %v2728, %v2771
    %v2778 = vmul.f32 %v2730, %v2772
    %v2779 = vmul.f32 %v2510, %v2773
    %v2780 = vmul.f32 %v2511, %v2774
    %v2781 = vmul.f32 %v2512, %v2775
    %v2782 = vmul.f32 %v2513, %v2776
    %v2783 = vmul.f32 %v2514, %v2777
    %v2784 = vmul.f32 %v2515, %v2778
    %v2785 = vsel %vm571, %v2779, 0.0
    %v2786 = vrot.slane %v2785, 4
    %v2787 = vadd.f32 %v2785, %v2786
    %v2788 = vrot.slane %v2787, 2
    %v2789 = vadd.f32 %v2787, %v2788
    %v2790 = vrot.slane %v2789, 1
    %v2791 = vadd.f32 %v2789, %v2790
    %v2792 = vsel %vm571, %v2780, 0.0
    %v2793 = vrot.slane %v2792, 4
    %v2794 = vadd.f32 %v2792, %v2793
    %v2795 = vrot.slane %v2794, 2
    %v2796 = vadd.f32 %v2794, %v2795
    %v2797 = vrot.slane %v2796, 1
    %v2798 = vadd.f32 %v2796, %v2797
    %v2799 = vsel %vm571, %v2781, 0.0
    %v2800 = vrot.slane %v2799, 4
    %v2801 = vadd.f32 %v2799, %v2800
    %v2802 = vrot.slane %v2801, 2
    %v2803 = vadd.f32 %v2801, %v2802
    %v2804 = vrot.slane %v2803, 1
    %v2805 = vadd.f32 %v2803, %v2804
    %v2806 = vsel %vm571, %v2782, 0.0
    %v2807 = vrot.slane %v2806, 4
    %v2808 = vadd.f32 %v2806, %v2807
    %v2809 = vrot.slane %v2808, 2
    %v2810 = vadd.f32 %v2808, %v2809
    %v2811 = vrot.slane %v2810, 1
    %v2812 = vadd.f32 %v2810, %v2811
    %v2813 = vsel %vm571, %v2783, 0.0
    %v2814 = vrot.slane %v2813, 4
    %v2815 = vadd.f32 %v2813, %v2814
    %v2816 = vrot.slane %v2815, 2
    %v2817 = vadd.f32 %v2815, %v2816
    %v2818 = vrot.slane %v2817, 1
    %v2819 = vadd.f32 %v2817, %v2818
    %v2820 = vsel %vm571, %v2784, 0.0
    %v2821 = vrot.slane %v2820, 4
    %v2822 = vadd.f32 %v2820, %v2821
    %v2823 = vrot.slane %v2822, 2
    %v2824 = vadd.f32 %v2822, %v2823
    %v2825 = vrot.slane %v2824, 1
    %v2826 = vadd.f32 %v2824, %v2825
    %v2833 = vsel %vm538, %v2798, %v2791
    %v2834 = vsel %vm541, %v2805, %v2833
    %v2835 = vsel %vm544, %v2812, %v2834
    %v2836 = vsel %vm547, %v2819, %v2835
    %v2837 = vsel %vm550, %v2826, %v2836
    %vm2839 = vcmask 259072
    %2840 = vst.msk [vmem:[%s9] sm:$0x3f] %vm2839, %v2837
    // Predicated region
    $region42: #{epoch_encoder_forward.1} parent=1 // pred_check
      _
    $region43: #{epoch_encoder_forward.1} parent=1 // pred_check_branch
      %2842 = sbr.rel (0) target = $region45
    $region44: #{epoch_encoder_forward.1} parent=1 // pred_region
      _
    $region45: #{epoch_encoder_forward.1} parent=1 // pred_fallthru
      _
    // Predicated region
    $region46: #{epoch_encoder_forward.1} parent=1 // pred_check
      _
    $region47: #{epoch_encoder_forward.1} parent=1 // pred_check_branch
      %2844 = sbr.rel (0) target = $region49
    $region48: #{epoch_encoder_forward.1} parent=1 // pred_region
      _
    $region49: #{epoch_encoder_forward.1} parent=1 // pred_fallthru
      _
    %2845 = vsyncpa [#allocation5], 1

</llo_original>
